<compile_context>
chip_gen: v6e
topology: v6e:2x2x1
jax: 0.10.0
libtpu: 0.0.40
codegen_flags: <defaults>
</compile_context>

<pallas_src>
import functools

import jax
import jax.numpy as jnp
from jax.experimental import pallas as pl
from jax.experimental.pallas import tpu as pltpu

EPS_LN = 1e-5
EPS_BN = 1e-5
LANE = 128
ROW_TILE = 128


def _round_up(x, m):
    return ((x + m - 1) // m) * m


def _pick_k_tile(k):
    if k <= 512:
        return k
    for t in (512, 256, 128):
        if k % t == 0:
            return t
    return k


# ---------------------------------------------------------------------------
# Kernel 1: fused  y = relu?( x @ W + b )   (BatchNorm already folded into W,b)
# grid = (row_tiles, k_tiles); K-reduction axis last ('arbitrary') with a
# float32 VMEM accumulator; bf16 MXU inputs.
# ---------------------------------------------------------------------------
def _linear_kernel(x_ref, w_ref, b_ref, o_ref, acc_ref, *, use_relu):
    @pl.when(pl.program_id(1) == 0)
    def _():
        acc_ref[...] = jnp.zeros_like(acc_ref)

    acc_ref[...] += jnp.dot(x_ref[...], w_ref[...],
                            preferred_element_type=jnp.float32)

    @pl.when(pl.program_id(1) == pl.num_programs(1) - 1)
    def _():
        y = acc_ref[...] + b_ref[...]
        if use_relu:
            y = jnp.maximum(y, 0.0)
        o_ref[...] = y


def linear_act(x, w, b, *, use_relu=False):
    """x: (N, K), w: (K, M) (bf16 preferred), b: (M,).  Returns (N, M) f32."""
    n, k = x.shape
    m = w.shape[1]
    n_pad = _round_up(n, ROW_TILE)
    m_pad = _round_up(m, LANE)          # lane-dense output stores
    tk = _pick_k_tile(k)

    xb = x.astype(jnp.bfloat16)
    if n_pad != n:
        xb = jnp.pad(xb, ((0, n_pad - n), (0, 0)))
    wb = w.astype(jnp.bfloat16)
    bb = b.astype(jnp.float32).reshape(1, m)
    if m_pad != m:
        wb = jnp.pad(wb, ((0, 0), (0, m_pad - m)))
        bb = jnp.pad(bb, ((0, 0), (0, m_pad - m)))

    out = pl.pallas_call(
        functools.partial(_linear_kernel, use_relu=use_relu),
        out_shape=jax.ShapeDtypeStruct((n_pad, m_pad), jnp.float32),
        grid=(n_pad // ROW_TILE, k // tk),
        in_specs=[
            pl.BlockSpec((ROW_TILE, tk), lambda i, kk: (i, kk)),
            pl.BlockSpec((tk, m_pad), lambda i, kk: (kk, 0)),
            pl.BlockSpec((1, m_pad), lambda i, kk: (0, 0)),
        ],
        out_specs=pl.BlockSpec((ROW_TILE, m_pad), lambda i, kk: (i, 0)),
        scratch_shapes=[pltpu.VMEM((ROW_TILE, m_pad), jnp.float32)],
        compiler_params=pltpu.CompilerParams(
            dimension_semantics=("parallel", "arbitrary")),
    )(xb, wb, bb)
    return out[:n, :m]


# ---------------------------------------------------------------------------
# Kernel 2: batched Conv1d(kernel=3, stride=1, pad=1) + optional channel
#           LayerNorm + optional ReLU + optional length mask.
# grid = (B,), 'parallel'.  Weight (3, Cin, Cout) stays resident across grid.
# ---------------------------------------------------------------------------
def _conv3_kernel(*refs, t_len, eps, use_ln, use_relu, use_mask):
    it = iter(refs)
    xp_ref = next(it)                    # (T+2, Cin), bf16 (batch dim squeezed)
    w_ref = next(it)                     # (3, Cin, Cout), bf16
    b_ref = next(it)                     # (1, Cout), f32
    g_ref = next(it) if use_ln else None
    bt_ref = next(it) if use_ln else None
    m_ref = next(it) if use_mask else None
    o_ref = next(it)                     # (T, Cout), f32

    # Three taps; slices start at rows 0/1/2 of the padded block.
    # (pltpu.roll on aligned views is a possible XLU micro-opt here.)
    acc = jnp.dot(xp_ref[pl.ds(0, t_len), :], w_ref[0],
                  preferred_element_type=jnp.float32)
    acc += jnp.dot(xp_ref[pl.ds(1, t_len), :], w_ref[1],
                   preferred_element_type=jnp.float32)
    acc += jnp.dot(xp_ref[pl.ds(2, t_len), :], w_ref[2],
                   preferred_element_type=jnp.float32)
    acc += b_ref[...]
    if use_ln:
        mu = jnp.mean(acc, axis=-1, keepdims=True)
        r = acc - mu
        var = jnp.mean(r * r, axis=-1, keepdims=True)
        acc = r * jax.lax.rsqrt(var + eps) * g_ref[...] + bt_ref[...]
    if use_relu:
        acc = jnp.maximum(acc, 0.0)
    if use_mask:
        acc = acc * m_ref[...]
    o_ref[...] = acc


def conv3_ln_relu(x, w_stack, b, gamma=None, beta=None, mask=None,
                  *, use_ln=False, use_relu=False, eps=EPS_LN):
    """Batched Conv1d(k=3,s=1,p=1).  x: (B, T, Cin); w_stack: (3, Cin, Cout)."""
    bsz, t_len, cin = x.shape
    cout = w_stack.shape[-1]
    xp = jnp.pad(x.astype(jnp.bfloat16), ((0, 0), (1, 1), (0, 0)))

    operands = [xp, w_stack.astype(jnp.bfloat16),
                b.astype(jnp.float32).reshape(1, cout)]
    in_specs = [
        pl.BlockSpec((None, t_len + 2, cin), lambda bi: (bi, 0, 0)),
        pl.BlockSpec((3, cin, cout), lambda bi: (0, 0, 0)),
        pl.BlockSpec((1, cout), lambda bi: (0, 0)),
    ]
    if use_ln:
        operands += [gamma.astype(jnp.float32).reshape(1, cout),
                     beta.astype(jnp.float32).reshape(1, cout)]
        in_specs += [pl.BlockSpec((1, cout), lambda bi: (0, 0)),
                     pl.BlockSpec((1, cout), lambda bi: (0, 0))]
    use_mask = mask is not None
    if use_mask:
        operands.append(mask.astype(jnp.float32))          # (B, T, 1)
        in_specs.append(pl.BlockSpec((None, t_len, 1), lambda bi: (bi, 0, 0)))

    kern = functools.partial(_conv3_kernel, t_len=t_len, eps=eps,
                             use_ln=use_ln, use_relu=use_relu,
                             use_mask=use_mask)
    return pl.pallas_call(
        kern,
        out_shape=jax.ShapeDtypeStruct((bsz, t_len, cout), jnp.float32),
        grid=(bsz,),
        in_specs=in_specs,
        out_specs=pl.BlockSpec((None, t_len, cout), lambda bi: (bi, 0, 0)),
        compiler_params=pltpu.CompilerParams(dimension_semantics=("parallel",)),
    )(*operands)


# ---------------------------------------------------------------------------
# Kernel 3: LSTM recurrence over time.  Gates from the (precomputed) input
# projection are streamed per timestep; w_hh/b_hh stay resident; h/c live in
# VMEM scratch across the (sequential) time grid.
# ---------------------------------------------------------------------------
def _sigmoid(x):
    return 1.0 / (1.0 + jnp.exp(-x))


def _lstm_step_kernel(g_ref, whh_ref, bhh_ref, o_ref, h_sc, c_sc, *, hidden):
    @pl.when(pl.program_id(0) == 0)
    def _():
        h_sc[...] = jnp.zeros_like(h_sc)
        c_sc[...] = jnp.zeros_like(c_sc)

    g = g_ref[...] + jnp.dot(h_sc[...].astype(whh_ref.dtype), whh_ref[...],
                             preferred_element_type=jnp.float32) + bhh_ref[...]
    i = _sigmoid(g[:, 0 * hidden:1 * hidden])     # PyTorch gate order i,f,g,o
    f = _sigmoid(g[:, 1 * hidden:2 * hidden])
    gg = jnp.tanh(g[:, 2 * hidden:3 * hidden])
    o = _sigmoid(g[:, 3 * hidden:4 * hidden])
    c = f * c_sc[...] + i * gg
    h = o * jnp.tanh(c)
    h_sc[...] = h
    c_sc[...] = c
    o_ref[...] = h


def lstm_scan(gates, w_hh, b_hh, hidden):
    """gates: (B, T, 4H) f32 -> hidden states (B, T, H) f32."""
    bsz, t_len, g_dim = gates.shape
    g_t = jnp.swapaxes(gates, 0, 1)                          # (T, B, 4H)
    out = pl.pallas_call(
        functools.partial(_lstm_step_kernel, hidden=hidden),
        out_shape=jax.ShapeDtypeStruct((t_len, bsz, hidden), jnp.float32),
        grid=(t_len,),
        in_specs=[
            pl.BlockSpec((None, bsz, g_dim), lambda t: (t, 0, 0)),
            pl.BlockSpec((hidden, g_dim), lambda t: (0, 0)),
            pl.BlockSpec((1, g_dim), lambda t: (0, 0)),
        ],
        out_specs=pl.BlockSpec((None, bsz, hidden), lambda t: (t, 0, 0)),
        scratch_shapes=[pltpu.VMEM((bsz, hidden), jnp.float32),
                        pltpu.VMEM((bsz, hidden), jnp.float32)],
        compiler_params=pltpu.CompilerParams(
            dimension_semantics=("arbitrary",)),
    )(g_t.astype(jnp.float32), w_hh, b_hh.astype(jnp.float32).reshape(1, g_dim))
    return jnp.swapaxes(out, 0, 1)                           # (B, T, H)


# ---------------------------------------------------------------------------
# BiLSTM (TemporalModule.bilstm)
# TODO(synk): the `RNN` (and unused `transformer_model`) classes were not
# provided; the BiLSTM is reconstructed as a standard 2-layer bidirectional
# LSTM with hidden_dim//2 units per direction and pack_padded-style length
# masking.
# ---------------------------------------------------------------------------
def _reverse_padded(x, lens):
    bsz, t_len, _ = x.shape
    t_idx = jnp.arange(t_len)
    idx = lens[:, None] - 1 - t_idx[None, :]
    idx = jnp.where(idx >= 0, idx, 0)
    rev = jnp.take_along_axis(x, idx[:, :, None], axis=1)
    mask = (t_idx[None, :] < lens[:, None])[:, :, None]
    return jnp.where(mask, rev, 0.0)


def bilstm(x, lens, layer_params, hidden):
    bsz, t_len, _ = x.shape
    out = x
    for lp in layer_params:
        cin = out.shape[-1]
        # One fused projection for both directions: (Cin) @ (Cin, 8H)
        gates = linear_act(out.reshape(bsz * t_len, cin), lp["w_ih"], lp["b_ih"])
        gates = gates.reshape(bsz, t_len, 8 * hidden)
        gf = gates[..., :4 * hidden]
        gb = _reverse_padded(gates[..., 4 * hidden:], lens)
        hf = lstm_scan(gf, lp["w_hh_f"], lp["b_hh_f"], hidden)
        hb = lstm_scan(gb, lp["w_hh_b"], lp["b_hh_b"], hidden)
        mask = (jnp.arange(t_len)[None, :] < lens[:, None])[:, :, None]
        hf = jnp.where(mask, hf, 0.0)
        hb = _reverse_padded(hb, lens)
        out = jnp.concatenate([hf, hb], axis=-1)
    return out


# ---------------------------------------------------------------------------
# Detector forward (jit-able; cfg is closed over, all shapes static)
# ---------------------------------------------------------------------------
def detector_forward(prep, vid, mod_idx, lens, gather_idx, *, cfg):
    bsz, max_len, dim = vid.shape
    d_hid = cfg["hidden_dim"]

    # dim_decrease: (Linear+BN+ReLU) x 2, BN folded into W/b
    x = vid.reshape(bsz * max_len, dim)[:, mod_idx]
    h = linear_act(x, prep["dd1_w"], prep["dd1_b"], use_relu=True)
    h = linear_act(h, prep["dd2_w"], prep["dd2_b"], use_relu=True)
    feats = h.reshape(bsz, max_len, d_hid)

    # temporal module: BiLSTM branch + CNN branch, then fusion MLP
    bf1 = bilstm(feats, lens, prep["lstm"], d_hid // 2)
    y = conv3_ln_relu(feats, prep["cnn1_w"], prep["cnn1_b"],
                      prep["cnn1_g"], prep["cnn1_beta"],
                      use_ln=True, use_relu=True)
    bf2 = conv3_ln_relu(y, prep["cnn2_w"], prep["cnn2_b"],
                        prep["cnn2_g"], prep["cnn2_beta"],
                        use_ln=True, use_relu=True)

    cat = jnp.concatenate([bf1, bf2], axis=-1).reshape(bsz * max_len, 2 * d_hid)
    fused = linear_act(cat, prep["fus_w"], prep["fus_b"], use_relu=True)
    fused = fused.reshape(bsz, max_len, d_hid)
    # self.dp (Dropout) is identity in eval mode.

    # Heads: masked full-length processing + static gather of valid rows.
    # Zeroing rows >= len reproduces the Conv1d zero-padding seen by the
    # truncated per-sample sequences of the original module.
    mask = (jnp.arange(max_len)[None, :] < lens[:, None]
            ).astype(jnp.float32)[:, :, None]
    f0 = fused * mask

    def run_head(hp, relu_flag, out_dim):
        y = f0
        for blk in hp["blocks"]:
            y = conv3_ln_relu(y, blk["w"], blk["b"], blk["g"], blk["beta"],
                              mask=mask, use_ln=True, use_relu=True)
        # classifier conv: no LayerNorm; output channels padded to 128 lanes
        y = conv3_ln_relu(y, hp["cls_w"], hp["cls_b"],
                          use_ln=False, use_relu=relu_flag)
        y = y.reshape(bsz * max_len, -1)[gather_idx]
        return y[:, :out_dim]

    cls_logits = run_head(prep["cls_head"], False, cfg["num_classes"])
    reg_results = run_head(prep["reg_head"], True, 3)
    return cls_logits, reg_results


# ---------------------------------------------------------------------------
# Parameter initialization (torch-like layout) and inference-time preparation
# (BN folding, bf16 casts, fwd/bwd LSTM projection fusion, head-out padding).
# ---------------------------------------------------------------------------
def init_detector_params(key, cfg):
    keys = iter(jax.random.split(key, 256))

    def nrm(shape, scale=0.05):
        return scale * jax.random.normal(next(keys), shape, jnp.float32)

    def bn(dim):
        return dict(gamma=1.0 + nrm((dim,), 0.1), beta=nrm((dim,), 0.1),
                    mean=nrm((dim,), 0.1), var=1.0 + jnp.abs(nrm((dim,), 0.1)))

    def ln(dim):
        return 1.0 + nrm((dim,), 0.1), nrm((dim,), 0.1)

    d_in = len(cfg["modality_index"])
    d_mid, d_hid, d_head = cfg["dd_mid"], cfg["hidden_dim"], cfg["head_dim"]
    h = d_hid // 2

    p = {}
    p["dd1_w"], p["dd1_b"], p["dd1_bn"] = nrm((d_in, d_mid)), nrm((d_mid,), 0.02), bn(d_mid)
    p["dd2_w"], p["dd2_b"], p["dd2_bn"] = nrm((d_mid, d_hid)), nrm((d_hid,), 0.02), bn(d_hid)

    def lstm_dir(in_dim):
        return dict(w_ih=nrm((in_dim, 4 * h)), b_ih=nrm((4 * h,), 0.02),
                    w_hh=nrm((h, 4 * h)), b_hh=nrm((4 * h,), 0.02))

    p["lstm"] = [dict(fwd=lstm_dir(d_hid), bwd=lstm_dir(d_hid)),
                 dict(fwd=lstm_dir(2 * h), bwd=lstm_dir(2 * h))]

    for name in ("cnn1", "cnn2"):
        g, b = ln(d_hid)
        p[f"{name}_w"] = nrm((3, d_hid, d_hid))
        p[f"{name}_b"] = nrm((d_hid,), 0.02)
        p[f"{name}_g"], p[f"{name}_beta"] = g, b

    p["fus_w"], p["fus_b"], p["fus_bn"] = nrm((2 * d_hid, d_hid)), nrm((d_hid,), 0.02), bn(d_hid)

    def head(out_dim):
        blocks = []
        cin = d_hid
        for _ in range(3):
            g, b = ln(d_head)
            blocks.append(dict(w=nrm((3, cin, d_head)), b=nrm((d_head,), 0.02),
                               g=g, beta=b))
            cin = d_head
        return dict(blocks=blocks, cls_w=nrm((3, d_head, out_dim)),
                    cls_b=nrm((out_dim,), 0.02))

    p["cls_head"] = head(cfg["num_classes"])
    p["reg_head"] = head(3)
    return p


def prepare_inference_params(params, cfg):
    """Fold eval-mode BatchNorm into Linear W/b, cast matmul weights to bf16,
    fuse fwd/bwd LSTM input projections, pad classifier outputs to 128 lanes."""
    def fold(w, b, bn):
        scale = bn["gamma"] / jnp.sqrt(bn["var"] + EPS_BN)
        w_f = (w * scale[None, :]).astype(jnp.bfloat16)
        b_f = ((b - bn["mean"]) * scale + bn["beta"]).astype(jnp.float32)
        return w_f, b_f

    prep = {}
    prep["dd1_w"], prep["dd1_b"] = fold(params["dd1_w"], params["dd1_b"], params["dd1_bn"])
    prep["dd2_w"], prep["dd2_b"] = fold(params["dd2_w"], params["dd2_b"], params["dd2_bn"])
    prep["fus_w"], prep["fus_b"] = fold(params["fus_w"], params["fus_b"], params["fus_bn"])

    prep["lstm"] = []
    for lp in params["lstm"]:
        prep["lstm"].append(dict(
            w_ih=jnp.concatenate([lp["fwd"]["w_ih"], lp["bwd"]["w_ih"]],
                                 axis=1).astype(jnp.bfloat16),
            b_ih=jnp.concatenate([lp["fwd"]["b_ih"], lp["bwd"]["b_ih"]],
                                 axis=0).astype(jnp.float32),
            w_hh_f=lp["fwd"]["w_hh"].astype(jnp.bfloat16),
            b_hh_f=lp["fwd"]["b_hh"].astype(jnp.float32),
            w_hh_b=lp["bwd"]["w_hh"].astype(jnp.bfloat16),
            b_hh_b=lp["bwd"]["b_hh"].astype(jnp.float32),
        ))

    for name in ("cnn1", "cnn2"):
        prep[f"{name}_w"] = params[f"{name}_w"].astype(jnp.bfloat16)
        prep[f"{name}_b"] = params[f"{name}_b"].astype(jnp.float32)
        prep[f"{name}_g"] = params[f"{name}_g"].astype(jnp.float32)
        prep[f"{name}_beta"] = params[f"{name}_beta"].astype(jnp.float32)

    def head(hp):
        blocks = [dict(w=b["w"].astype(jnp.bfloat16), b=b["b"].astype(jnp.float32),
                       g=b["g"].astype(jnp.float32), beta=b["beta"].astype(jnp.float32))
                  for b in hp["blocks"]]
        out_dim = hp["cls_w"].shape[-1]
        pad = _round_up(out_dim, LANE) - out_dim   # lane-dense classifier store
        cls_w = jnp.pad(hp["cls_w"], ((0, 0), (0, 0), (0, pad))).astype(jnp.bfloat16)
        cls_b = jnp.pad(hp["cls_b"], (0, pad)).astype(jnp.float32)
        return dict(blocks=blocks, cls_w=cls_w, cls_b=cls_b)

    prep["cls_head"] = head(params["cls_head"])
    prep["reg_head"] = head(params["reg_head"])
    return prep


if __name__ == "__main__":
    # Scaled-down configuration (real module: feat_dims=[2048,2048,2048,256],
    # dim_decrease 6400->2048->512, hidden=512, head width 256, 61 classes).
    cfg = dict(
        feat_dims=[64, 64, 64, 32],   # analog of [2048, 2048, 2048, 256]
        dd_mid=128,                   # analog of 2048
        hidden_dim=64,                # analog of 512
        head_dim=32,                  # analog of 256
        num_classes=61,
        modality=(0, 1, 2, 3),
    )
    cfg["modality_index"] = [
        i + sum(cfg["feat_dims"][:m])
        for m in cfg["modality"] for i in range(cfg["feat_dims"][m])
    ]

    key = jax.random.PRNGKey(0)
    k_param, k_vid = jax.random.split(key)
    params = init_detector_params(k_param, cfg)
    prep = prepare_inference_params(params, cfg)

    batch, max_len = 2, 16
    vid = jax.random.normal(k_vid, (batch, max_len, sum(cfg["feat_dims"])),
                            jnp.float32)
    len_x = [16, 12]

    mod_idx = jnp.asarray(cfg["modality_index"], jnp.int32)
    lens = jnp.asarray(len_x, jnp.int32)
    gather_idx = jnp.asarray(
        [i * max_len + t for i, l in enumerate(len_x) for t in range(l)],
        jnp.int32)

    forward = jax.jit(functools.partial(detector_forward, cfg=cfg))
    cls_logits, reg_results = forward(prep, vid, mod_idx, lens, gather_idx)
    cls_logits, reg_results = jax.block_until_ready((cls_logits, reg_results))

    assert cls_logits.shape == (sum(len_x), cfg["num_classes"]), cls_logits.shape
    assert reg_results.shape == (sum(len_x), 3), reg_results.shape
    assert bool(jnp.all(jnp.isfinite(cls_logits)))
    assert bool(jnp.all(jnp.isfinite(reg_results)))
    assert bool(jnp.all(reg_results >= 0.0))   # reg head has trailing ReLU
    print("KERNEL_OK")
</pallas_src>

<mosaic_0001>
module attributes {stable_mosaic.version = 11 : i64} {
  func.func @_linear_kernel(%arg0: i32, %arg1: i32, %arg2: memref<128x224xbf16, #tpu.memory_space<vmem>>, %arg3: memref<224x128xbf16, #tpu.memory_space<vmem>>, %arg4: memref<1x128xf32, #tpu.memory_space<vmem>>, %arg5: memref<128x128xf32, #tpu.memory_space<vmem>>, %arg6: memref<128x128xf32, #tpu.memory_space<vmem>>) attributes {dimension_semantics = [#tpu.dimension_semantics<parallel>, #tpu.dimension_semantics<arbitrary>], iteration_bounds = array<i64: 1, 1>, scalar_prefetch = 0 : i64, scratch_operands = 1 : i64, tpu.core_type = #tpu.core_type<tc>, window_params = [{transform_indices = @transform_0, window_bounds = array<i64: 128, 224>}, {transform_indices = @transform_1, window_bounds = array<i64: 224, 128>}, {pipeline_mode = #tpu.pipeline_mode<synchronous>, transform_indices = @transform_2, window_bounds = array<i64: 1, 128>}, {transform_indices = @transform_3, window_bounds = array<i64: 128, 128>}]} {
    %c0_i32 = arith.constant 0 : i32
    %0 = arith.cmpi eq, %arg1, %c0_i32 : i32
    %1 = arith.extui %0 : i1 to i32
    %c0_i32_0 = arith.constant 0 : i32
    %2 = arith.cmpi ne, %1, %c0_i32_0 : i32
    scf.if %2 {
      %cst_10 = arith.constant 0.000000e+00 : f32
      %12 = vector.broadcast %cst_10 : f32 to vector<128x128xf32>
      %c0_11 = arith.constant 0 : index
      %c0_12 = arith.constant 0 : index
      %13 = vector.load %arg6[%c0_11, %c0_12] : memref<128x128xf32, #tpu.memory_space<vmem>>, vector<128x128xf32>
      tpu.vector_store %arg6[%c0_11, %c0_12], %12 {strides = array<i32>} : memref<128x128xf32, #tpu.memory_space<vmem>>, vector<128x128xf32>,
    } else {
    }
    %c0 = arith.constant 0 : index
    %c0_1 = arith.constant 0 : index
    %3 = vector.load %arg6[%c0, %c0_1] : memref<128x128xf32, #tpu.memory_space<vmem>>, vector<128x128xf32>
    %c0_2 = arith.constant 0 : index
    %c0_3 = arith.constant 0 : index
    %4 = vector.load %arg2[%c0_2, %c0_3] : memref<128x224xbf16, #tpu.memory_space<vmem>>, vector<128x224xbf16>
    %c0_4 = arith.constant 0 : index
    %c0_5 = arith.constant 0 : index
    %5 = vector.load %arg3[%c0_4, %c0_5] : memref<224x128xbf16, #tpu.memory_space<vmem>>, vector<224x128xbf16>
    %cst = arith.constant dense<0.000000e+00> : vector<128x128xf32>
    %6 = tpu.matmul %4, %5, %cst {dimension_numbers = #tpu.dot_dimension_numbers<[1], [0], [0], [1], [0, 0, 1, 1], [], []>} : vector<128x224xbf16>, vector<224x128xbf16>, vector<128x128xf32> -> vector<128x128xf32>
    %7 = arith.addf %3, %6 : vector<128x128xf32>
    %c0_6 = arith.constant 0 : index
    %c0_7 = arith.constant 0 : index
    %8 = vector.load %arg6[%c0_6, %c0_7] : memref<128x128xf32, #tpu.memory_space<vmem>>, vector<128x128xf32>
    tpu.vector_store %arg6[%c0_6, %c0_7], %7 {strides = array<i32>} : memref<128x128xf32, #tpu.memory_space<vmem>>, vector<128x128xf32>,
    %c0_i32_8 = arith.constant 0 : i32
    %9 = arith.cmpi eq, %arg1, %c0_i32_8 : i32
    %10 = arith.extui %9 : i1 to i32
    %c0_i32_9 = arith.constant 0 : i32
    %11 = arith.cmpi ne, %10, %c0_i32_9 : i32
    scf.if %11 {
      %c0_10 = arith.constant 0 : index
      %c0_11 = arith.constant 0 : index
      %12 = vector.load %arg6[%c0_10, %c0_11] : memref<128x128xf32, #tpu.memory_space<vmem>>, vector<128x128xf32>
      %c0_12 = arith.constant 0 : index
      %c0_13 = arith.constant 0 : index
      %13 = vector.load %arg4[%c0_12, %c0_13] : memref<1x128xf32, #tpu.memory_space<vmem>>, vector<1x128xf32>
      %14 = vector.broadcast %13 : vector<1x128xf32> to vector<128x128xf32>
      %15 = arith.addf %12, %14 : vector<128x128xf32>
      %cst_14 = arith.constant 0.000000e+00 : f32
      %16 = vector.broadcast %cst_14 : f32 to vector<128x128xf32>
      %17 = arith.maximumf %15, %16 : vector<128x128xf32>
      %c0_15 = arith.constant 0 : index
      %c0_16 = arith.constant 0 : index
      %18 = vector.load %arg5[%c0_15, %c0_16] : memref<128x128xf32, #tpu.memory_space<vmem>>, vector<128x128xf32>
      tpu.vector_store %arg5[%c0_15, %c0_16], %17 {strides = array<i32>} : memref<128x128xf32, #tpu.memory_space<vmem>>, vector<128x128xf32>,
    } else {
    }
    return
  }
  func.func @transform_0(%arg0: i32, %arg1: i32) -> (i32, i32) {
    %c0_i32 = arith.constant 0 : i32
    return %arg0, %arg1 : i32, i32
  }
  func.func @transform_1(%arg0: i32, %arg1: i32) -> (i32, i32) {
    %c0_i32 = arith.constant 0 : i32
    %c0_i32_0 = arith.constant 0 : i32
    return %arg1, %c0_i32 : i32, i32
  }
  func.func @transform_2(%arg0: i32, %arg1: i32) -> (i32, i32) {
    %c0_i32 = arith.constant 0 : i32
    %c0_i32_0 = arith.constant 0 : i32
    %c0_i32_1 = arith.constant 0 : i32
    return %c0_i32, %c0_i32_0 : i32, i32
  }
  func.func @transform_3(%arg0: i32, %arg1: i32) -> (i32, i32) {
    %c0_i32 = arith.constant 0 : i32
    %c0_i32_0 = arith.constant 0 : i32
    return %arg0, %c0_i32 : i32, i32
  }
}

module attributes {stable_mosaic.version = 11 : i64} {
  func.func @_linear_kernel(%arg0: i32, %arg1: i32, %arg2: memref<128x64xbf16, #tpu.memory_space<vmem>>, %arg3: memref<64x256xbf16, #tpu.memory_space<vmem>>, %arg4: memref<1x256xf32, #tpu.memory_space<vmem>>, %arg5: memref<128x256xf32, #tpu.memory_space<vmem>>, %arg6: memref<128x256xf32, #tpu.memory_space<vmem>>) attributes {dimension_semantics = [#tpu.dimension_semantics<parallel>, #tpu.dimension_semantics<arbitrary>], iteration_bounds = array<i64: 1, 1>, scalar_prefetch = 0 : i64, scratch_operands = 1 : i64, tpu.core_type = #tpu.core_type<tc>, window_params = [{transform_indices = @transform_0, window_bounds = array<i64: 128, 64>}, {transform_indices = @transform_1, window_bounds = array<i64: 64, 256>}, {pipeline_mode = #tpu.pipeline_mode<synchronous>, transform_indices = @transform_2, window_bounds = array<i64: 1, 256>}, {transform_indices = @transform_3, window_bounds = array<i64: 128, 256>}]} {
    %c0_i32 = arith.constant 0 : i32
    %0 = arith.cmpi eq, %arg1, %c0_i32 : i32
    %1 = arith.extui %0 : i1 to i32
    %c0_i32_0 = arith.constant 0 : i32
    %2 = arith.cmpi ne, %1, %c0_i32_0 : i32
    scf.if %2 {
      %cst_10 = arith.constant 0.000000e+00 : f32
      %12 = vector.broadcast %cst_10 : f32 to vector<128x256xf32>
      %c0_11 = arith.constant 0 : index
      %c0_12 = arith.constant 0 : index
      %13 = vector.load %arg6[%c0_11, %c0_12] : memref<128x256xf32, #tpu.memory_space<vmem>>, vector<128x256xf32>
      tpu.vector_store %arg6[%c0_11, %c0_12], %12 {strides = array<i32>} : memref<128x256xf32, #tpu.memory_space<vmem>>, vector<128x256xf32>,
    } else {
    }
    %c0 = arith.constant 0 : index
    %c0_1 = arith.constant 0 : index
    %3 = vector.load %arg6[%c0, %c0_1] : memref<128x256xf32, #tpu.memory_space<vmem>>, vector<128x256xf32>
    %c0_2 = arith.constant 0 : index
    %c0_3 = arith.constant 0 : index
    %4 = vector.load %arg2[%c0_2, %c0_3] : memref<128x64xbf16, #tpu.memory_space<vmem>>, vector<128x64xbf16>
    %c0_4 = arith.constant 0 : index
    %c0_5 = arith.constant 0 : index
    %5 = vector.load %arg3[%c0_4, %c0_5] : memref<64x256xbf16, #tpu.memory_space<vmem>>, vector<64x256xbf16>
    %cst = arith.constant dense<0.000000e+00> : vector<128x256xf32>
    %6 = tpu.matmul %4, %5, %cst {dimension_numbers = #tpu.dot_dimension_numbers<[1], [0], [0], [1], [0, 0, 1, 1], [], []>} : vector<128x64xbf16>, vector<64x256xbf16>, vector<128x256xf32> -> vector<128x256xf32>
    %7 = arith.addf %3, %6 : vector<128x256xf32>
    %c0_6 = arith.constant 0 : index
    %c0_7 = arith.constant 0 : index
    %8 = vector.load %arg6[%c0_6, %c0_7] : memref<128x256xf32, #tpu.memory_space<vmem>>, vector<128x256xf32>
    tpu.vector_store %arg6[%c0_6, %c0_7], %7 {strides = array<i32>} : memref<128x256xf32, #tpu.memory_space<vmem>>, vector<128x256xf32>,
    %c0_i32_8 = arith.constant 0 : i32
    %9 = arith.cmpi eq, %arg1, %c0_i32_8 : i32
    %10 = arith.extui %9 : i1 to i32
    %c0_i32_9 = arith.constant 0 : i32
    %11 = arith.cmpi ne, %10, %c0_i32_9 : i32
    scf.if %11 {
      %c0_10 = arith.constant 0 : index
      %c0_11 = arith.constant 0 : index
      %12 = vector.load %arg6[%c0_10, %c0_11] : memref<128x256xf32, #tpu.memory_space<vmem>>, vector<128x256xf32>
      %c0_12 = arith.constant 0 : index
      %c0_13 = arith.constant 0 : index
      %13 = vector.load %arg4[%c0_12, %c0_13] : memref<1x256xf32, #tpu.memory_space<vmem>>, vector<1x256xf32>
      %14 = vector.broadcast %13 : vector<1x256xf32> to vector<128x256xf32>
      %15 = arith.addf %12, %14 : vector<128x256xf32>
      %c0_14 = arith.constant 0 : index
      %c0_15 = arith.constant 0 : index
      %16 = vector.load %arg5[%c0_14, %c0_15] : memref<128x256xf32, #tpu.memory_space<vmem>>, vector<128x256xf32>
      tpu.vector_store %arg5[%c0_14, %c0_15], %15 {strides = array<i32>} : memref<128x256xf32, #tpu.memory_space<vmem>>, vector<128x256xf32>,
    } else {
    }
    return
  }
  func.func @transform_0(%arg0: i32, %arg1: i32) -> (i32, i32) {
    %c0_i32 = arith.constant 0 : i32
    return %arg0, %arg1 : i32, i32
  }
  func.func @transform_1(%arg0: i32, %arg1: i32) -> (i32, i32) {
    %c0_i32 = arith.constant 0 : i32
    %c0_i32_0 = arith.constant 0 : i32
    return %arg1, %c0_i32 : i32, i32
  }
  func.func @transform_2(%arg0: i32, %arg1: i32) -> (i32, i32) {
    %c0_i32 = arith.constant 0 : i32
    %c0_i32_0 = arith.constant 0 : i32
    %c0_i32_1 = arith.constant 0 : i32
    return %c0_i32, %c0_i32_0 : i32, i32
  }
  func.func @transform_3(%arg0: i32, %arg1: i32) -> (i32, i32) {
    %c0_i32 = arith.constant 0 : i32
    %c0_i32_0 = arith.constant 0 : i32
    return %arg0, %c0_i32 : i32, i32
  }
}

module attributes {stable_mosaic.version = 11 : i64} {
  func.func @_linear_kernel(%arg0: i32, %arg1: i32, %arg2: memref<128x128xbf16, #tpu.memory_space<vmem>>, %arg3: memref<128x128xbf16, #tpu.memory_space<vmem>>, %arg4: memref<1x128xf32, #tpu.memory_space<vmem>>, %arg5: memref<128x128xf32, #tpu.memory_space<vmem>>, %arg6: memref<128x128xf32, #tpu.memory_space<vmem>>) attributes {dimension_semantics = [#tpu.dimension_semantics<parallel>, #tpu.dimension_semantics<arbitrary>], iteration_bounds = array<i64: 1, 1>, scalar_prefetch = 0 : i64, scratch_operands = 1 : i64, tpu.core_type = #tpu.core_type<tc>, window_params = [{transform_indices = @transform_0, window_bounds = array<i64: 128, 128>}, {transform_indices = @transform_1, window_bounds = array<i64: 128, 128>}, {pipeline_mode = #tpu.pipeline_mode<synchronous>, transform_indices = @transform_2, window_bounds = array<i64: 1, 128>}, {transform_indices = @transform_3, window_bounds = array<i64: 128, 128>}]} {
    %c0_i32 = arith.constant 0 : i32
    %0 = arith.cmpi eq, %arg1, %c0_i32 : i32
    %1 = arith.extui %0 : i1 to i32
    %c0_i32_0 = arith.constant 0 : i32
    %2 = arith.cmpi ne, %1, %c0_i32_0 : i32
    scf.if %2 {
      %cst_10 = arith.constant 0.000000e+00 : f32
      %12 = vector.broadcast %cst_10 : f32 to vector<128x128xf32>
      %c0_11 = arith.constant 0 : index
      %c0_12 = arith.constant 0 : index
      %13 = vector.load %arg6[%c0_11, %c0_12] : memref<128x128xf32, #tpu.memory_space<vmem>>, vector<128x128xf32>
      tpu.vector_store %arg6[%c0_11, %c0_12], %12 {strides = array<i32>} : memref<128x128xf32, #tpu.memory_space<vmem>>, vector<128x128xf32>,
    } else {
    }
    %c0 = arith.constant 0 : index
    %c0_1 = arith.constant 0 : index
    %3 = vector.load %arg6[%c0, %c0_1] : memref<128x128xf32, #tpu.memory_space<vmem>>, vector<128x128xf32>
    %c0_2 = arith.constant 0 : index
    %c0_3 = arith.constant 0 : index
    %4 = vector.load %arg2[%c0_2, %c0_3] : memref<128x128xbf16, #tpu.memory_space<vmem>>, vector<128x128xbf16>
    %c0_4 = arith.constant 0 : index
    %c0_5 = arith.constant 0 : index
    %5 = vector.load %arg3[%c0_4, %c0_5] : memref<128x128xbf16, #tpu.memory_space<vmem>>, vector<128x128xbf16>
    %cst = arith.constant dense<0.000000e+00> : vector<128x128xf32>
    %6 = tpu.matmul %4, %5, %cst {dimension_numbers = #tpu.dot_dimension_numbers<[1], [0], [0], [1], [0, 0, 1, 1], [], []>} : vector<128x128xbf16>, vector<128x128xbf16>, vector<128x128xf32> -> vector<128x128xf32>
    %7 = arith.addf %3, %6 : vector<128x128xf32>
    %c0_6 = arith.constant 0 : index
    %c0_7 = arith.constant 0 : index
    %8 = vector.load %arg6[%c0_6, %c0_7] : memref<128x128xf32, #tpu.memory_space<vmem>>, vector<128x128xf32>
    tpu.vector_store %arg6[%c0_6, %c0_7], %7 {strides = array<i32>} : memref<128x128xf32, #tpu.memory_space<vmem>>, vector<128x128xf32>,
    %c0_i32_8 = arith.constant 0 : i32
    %9 = arith.cmpi eq, %arg1, %c0_i32_8 : i32
    %10 = arith.extui %9 : i1 to i32
    %c0_i32_9 = arith.constant 0 : i32
    %11 = arith.cmpi ne, %10, %c0_i32_9 : i32
    scf.if %11 {
      %c0_10 = arith.constant 0 : index
      %c0_11 = arith.constant 0 : index
      %12 = vector.load %arg6[%c0_10, %c0_11] : memref<128x128xf32, #tpu.memory_space<vmem>>, vector<128x128xf32>
      %c0_12 = arith.constant 0 : index
      %c0_13 = arith.constant 0 : index
      %13 = vector.load %arg4[%c0_12, %c0_13] : memref<1x128xf32, #tpu.memory_space<vmem>>, vector<1x128xf32>
      %14 = vector.broadcast %13 : vector<1x128xf32> to vector<128x128xf32>
      %15 = arith.addf %12, %14 : vector<128x128xf32>
      %cst_14 = arith.constant 0.000000e+00 : f32
      %16 = vector.broadcast %cst_14 : f32 to vector<128x128xf32>
      %17 = arith.maximumf %15, %16 : vector<128x128xf32>
      %c0_15 = arith.constant 0 : index
      %c0_16 = arith.constant 0 : index
      %18 = vector.load %arg5[%c0_15, %c0_16] : memref<128x128xf32, #tpu.memory_space<vmem>>, vector<128x128xf32>
      tpu.vector_store %arg5[%c0_15, %c0_16], %17 {strides = array<i32>} : memref<128x128xf32, #tpu.memory_space<vmem>>, vector<128x128xf32>,
    } else {
    }
    return
  }
  func.func @transform_0(%arg0: i32, %arg1: i32) -> (i32, i32) {
    %c0_i32 = arith.constant 0 : i32
    return %arg0, %arg1 : i32, i32
  }
  func.func @transform_1(%arg0: i32, %arg1: i32) -> (i32, i32) {
    %c0_i32 = arith.constant 0 : i32
    %c0_i32_0 = arith.constant 0 : i32
    return %arg1, %c0_i32 : i32, i32
  }
  func.func @transform_2(%arg0: i32, %arg1: i32) -> (i32, i32) {
    %c0_i32 = arith.constant 0 : i32
    %c0_i32_0 = arith.constant 0 : i32
    %c0_i32_1 = arith.constant 0 : i32
    return %c0_i32, %c0_i32_0 : i32, i32
  }
  func.func @transform_3(%arg0: i32, %arg1: i32) -> (i32, i32) {
    %c0_i32 = arith.constant 0 : i32
    %c0_i32_0 = arith.constant 0 : i32
    return %arg0, %c0_i32 : i32, i32
  }
}

module attributes {stable_mosaic.version = 11 : i64} {
  func.func @_lstm_step_kernel(%arg0: i32, %arg1: memref<1x2x128xf32, #tpu.memory_space<vmem>>, %arg2: memref<32x128xbf16, #tpu.memory_space<vmem>>, %arg3: memref<1x128xf32, #tpu.memory_space<vmem>>, %arg4: memref<1x2x32xf32, #tpu.memory_space<vmem>>, %arg5: memref<2x32xf32, #tpu.memory_space<vmem>>, %arg6: memref<2x32xf32, #tpu.memory_space<vmem>>) attributes {dimension_semantics = [#tpu.dimension_semantics<arbitrary>], iteration_bounds = array<i64: 16>, scalar_prefetch = 0 : i64, scratch_operands = 2 : i64, tpu.core_type = #tpu.core_type<tc>, window_params = [{transform_indices = @transform_0, window_bounds = array<i64: 1, 2, 128>}, {pipeline_mode = #tpu.pipeline_mode<synchronous>, transform_indices = @transform_1, window_bounds = array<i64: 32, 128>}, {pipeline_mode = #tpu.pipeline_mode<synchronous>, transform_indices = @transform_2, window_bounds = array<i64: 1, 128>}, {transform_indices = @transform_3, window_bounds = array<i64: 1, 2, 32>}]} {
    %c0_i32 = arith.constant 0 : i32
    %0 = arith.cmpi eq, %arg0, %c0_i32 : i32
    %1 = arith.extui %0 : i1 to i32
    %c0_i32_0 = arith.constant 0 : i32
    %2 = arith.cmpi ne, %1, %c0_i32_0 : i32
    scf.if %2 {
      %cst_27 = arith.constant 0.000000e+00 : f32
      %50 = vector.broadcast %cst_27 : f32 to vector<2x32xf32>
      %c0_28 = arith.constant 0 : index
      %c0_29 = arith.constant 0 : index
      %51 = vector.load %arg5[%c0_28, %c0_29] : memref<2x32xf32, #tpu.memory_space<vmem>>, vector<2x32xf32>
      tpu.vector_store %arg5[%c0_28, %c0_29], %50 {strides = array<i32>} : memref<2x32xf32, #tpu.memory_space<vmem>>, vector<2x32xf32>,
      %cst_30 = arith.constant 0.000000e+00 : f32
      %52 = vector.broadcast %cst_30 : f32 to vector<2x32xf32>
      %c0_31 = arith.constant 0 : index
      %c0_32 = arith.constant 0 : index
      %53 = vector.load %arg6[%c0_31, %c0_32] : memref<2x32xf32, #tpu.memory_space<vmem>>, vector<2x32xf32>
      tpu.vector_store %arg6[%c0_31, %c0_32], %52 {strides = array<i32>} : memref<2x32xf32, #tpu.memory_space<vmem>>, vector<2x32xf32>,
    } else {
    }
    %c0 = arith.constant 0 : index
    %c0_1 = arith.constant 0 : index
    %c0_2 = arith.constant 0 : index
    %3 = vector.load %arg1[%c0, %c0_1, %c0_2] : memref<1x2x128xf32, #tpu.memory_space<vmem>>, vector<1x2x128xf32>
    %4 = vector.shape_cast %3 : vector<1x2x128xf32> to vector<2x128xf32>
    %c0_3 = arith.constant 0 : index
    %c0_4 = arith.constant 0 : index
    %5 = vector.load %arg5[%c0_3, %c0_4] : memref<2x32xf32, #tpu.memory_space<vmem>>, vector<2x32xf32>
    %6 = arith.truncf %5 : vector<2x32xf32> to vector<2x32xbf16>
    %c0_5 = arith.constant 0 : index
    %c0_6 = arith.constant 0 : index
    %7 = vector.load %arg2[%c0_5, %c0_6] : memref<32x128xbf16, #tpu.memory_space<vmem>>, vector<32x128xbf16>
    %cst = arith.constant dense<0.000000e+00> : vector<2x128xf32>
    %8 = tpu.matmul %6, %7, %cst {dimension_numbers = #tpu.dot_dimension_numbers<[1], [0], [0], [1], [0, 0, 1, 1], [], []>} : vector<2x32xbf16>, vector<32x128xbf16>, vector<2x128xf32> -> vector<2x128xf32>
    %9 = arith.addf %4, %8 : vector<2x128xf32>
    %c0_7 = arith.constant 0 : index
    %c0_8 = arith.constant 0 : index
    %10 = vector.load %arg3[%c0_7, %c0_8] : memref<1x128xf32, #tpu.memory_space<vmem>>, vector<1x128xf32>
    %11 = vector.broadcast %10 : vector<1x128xf32> to vector<2x128xf32>
    %12 = arith.addf %9, %11 : vector<2x128xf32>
    %13 = vector.extract_strided_slice %12 {offsets = [0, 0], sizes = [2, 32], strides = [1, 1]} : vector<2x128xf32> to vector<2x32xf32>
    %cst_9 = arith.constant 0.000000e+00 : f32
    %14 = vector.broadcast %cst_9 : f32 to vector<2x32xf32>
    %15 = arith.subf %14, %13 : vector<2x32xf32>
    %16 = math.exp %15 : vector<2x32xf32>
    %cst_10 = arith.constant 1.000000e+00 : f32
    %17 = vector.broadcast %cst_10 : f32 to vector<2x32xf32>
    %18 = arith.addf %17, %16 : vector<2x32xf32>
    %cst_11 = arith.constant 1.000000e+00 : f32
    %19 = vector.broadcast %cst_11 : f32 to vector<2x32xf32>
    %20 = arith.divf %19, %18 : vector<2x32xf32>
    %21 = vector.extract_strided_slice %12 {offsets = [0, 32], sizes = [2, 32], strides = [1, 1]} : vector<2x128xf32> to vector<2x32xf32>
    %cst_12 = arith.constant 0.000000e+00 : f32
    %22 = vector.broadcast %cst_12 : f32 to vector<2x32xf32>
    %23 = arith.subf %22, %21 : vector<2x32xf32>
    %24 = math.exp %23 : vector<2x32xf32>
    %cst_13 = arith.constant 1.000000e+00 : f32
    %25 = vector.broadcast %cst_13 : f32 to vector<2x32xf32>
    %26 = arith.addf %25, %24 : vector<2x32xf32>
    %cst_14 = arith.constant 1.000000e+00 : f32
    %27 = vector.broadcast %cst_14 : f32 to vector<2x32xf32>
    %28 = arith.divf %27, %26 : vector<2x32xf32>
    %29 = vector.extract_strided_slice %12 {offsets = [0, 64], sizes = [2, 32], strides = [1, 1]} : vector<2x128xf32> to vector<2x32xf32>
    %30 = math.tanh %29 : vector<2x32xf32>
    %31 = vector.extract_strided_slice %12 {offsets = [0, 96], sizes = [2, 32], strides = [1, 1]} : vector<2x128xf32> to vector<2x32xf32>
    %cst_15 = arith.constant 0.000000e+00 : f32
    %32 = vector.broadcast %cst_15 : f32 to vector<2x32xf32>
    %33 = arith.subf %32, %31 : vector<2x32xf32>
    %34 = math.exp %33 : vector<2x32xf32>
    %cst_16 = arith.constant 1.000000e+00 : f32
    %35 = vector.broadcast %cst_16 : f32 to vector<2x32xf32>
    %36 = arith.addf %35, %34 : vector<2x32xf32>
    %cst_17 = arith.constant 1.000000e+00 : f32
    %37 = vector.broadcast %cst_17 : f32 to vector<2x32xf32>
    %38 = arith.divf %37, %36 : vector<2x32xf32>
    %c0_18 = arith.constant 0 : index
    %c0_19 = arith.constant 0 : index
    %39 = vector.load %arg6[%c0_18, %c0_19] : memref<2x32xf32, #tpu.memory_space<vmem>>, vector<2x32xf32>
    %40 = arith.mulf %28, %39 : vector<2x32xf32>
    %41 = arith.mulf %20, %30 : vector<2x32xf32>
    %42 = arith.addf %40, %41 : vector<2x32xf32>
    %43 = math.tanh %42 : vector<2x32xf32>
    %44 = arith.mulf %38, %43 : vector<2x32xf32>
    %c0_20 = arith.constant 0 : index
    %c0_21 = arith.constant 0 : index
    %45 = vector.load %arg5[%c0_20, %c0_21] : memref<2x32xf32, #tpu.memory_space<vmem>>, vector<2x32xf32>
    tpu.vector_store %arg5[%c0_20, %c0_21], %44 {strides = array<i32>} : memref<2x32xf32, #tpu.memory_space<vmem>>, vector<2x32xf32>,
    %c0_22 = arith.constant 0 : index
    %c0_23 = arith.constant 0 : index
    %46 = vector.load %arg6[%c0_22, %c0_23] : memref<2x32xf32, #tpu.memory_space<vmem>>, vector<2x32xf32>
    tpu.vector_store %arg6[%c0_22, %c0_23], %42 {strides = array<i32>} : memref<2x32xf32, #tpu.memory_space<vmem>>, vector<2x32xf32>,
    %c0_24 = arith.constant 0 : index
    %c0_25 = arith.constant 0 : index
    %c0_26 = arith.constant 0 : index
    %47 = vector.load %arg4[%c0_24, %c0_25, %c0_26] : memref<1x2x32xf32, #tpu.memory_space<vmem>>, vector<1x2x32xf32>
    %48 = vector.shape_cast %47 : vector<1x2x32xf32> to vector<2x32xf32>
    %49 = vector.shape_cast %44 : vector<2x32xf32> to vector<1x2x32xf32>
    tpu.vector_store %arg4[%c0_24, %c0_25, %c0_26], %49 {strides = array<i32>} : memref<1x2x32xf32, #tpu.memory_space<vmem>>, vector<1x2x32xf32>,
    return
  }
  func.func @transform_0(%arg0: i32) -> (i32, i32, i32) {
    %c0_i32 = arith.constant 0 : i32
    %c0_i32_0 = arith.constant 0 : i32
    %c0_i32_1 = arith.constant 0 : i32
    return %arg0, %c0_i32, %c0_i32_0 : i32, i32, i32
  }
  func.func @transform_1(%arg0: i32) -> (i32, i32) {
    %c0_i32 = arith.constant 0 : i32
    %c0_i32_0 = arith.constant 0 : i32
    %c0_i32_1 = arith.constant 0 : i32
    return %c0_i32, %c0_i32_0 : i32, i32
  }
  func.func @transform_2(%arg0: i32) -> (i32, i32) {
    %c0_i32 = arith.constant 0 : i32
    %c0_i32_0 = arith.constant 0 : i32
    %c0_i32_1 = arith.constant 0 : i32
    return %c0_i32, %c0_i32_0 : i32, i32
  }
  func.func @transform_3(%arg0: i32) -> (i32, i32, i32) {
    %c0_i32 = arith.constant 0 : i32
    %c0_i32_0 = arith.constant 0 : i32
    %c0_i32_1 = arith.constant 0 : i32
    return %arg0, %c0_i32, %c0_i32_0 : i32, i32, i32
  }
}

module attributes {stable_mosaic.version = 11 : i64} {
  func.func @_conv3_kernel(%arg0: i32, %arg1: memref<1x18x64xbf16, #tpu.memory_space<vmem>>, %arg2: memref<3x64x32xbf16, #tpu.memory_space<vmem>>, %arg3: memref<1x32xf32, #tpu.memory_space<vmem>>, %arg4: memref<1x32xf32, #tpu.memory_space<vmem>>, %arg5: memref<1x32xf32, #tpu.memory_space<vmem>>, %arg6: memref<1x16x1xf32, #tpu.memory_space<vmem>>, %arg7: memref<1x16x32xf32, #tpu.memory_space<vmem>>) attributes {dimension_semantics = [#tpu.dimension_semantics<parallel>], iteration_bounds = array<i64: 2>, scalar_prefetch = 0 : i64, scratch_operands = 0 : i64, tpu.core_type = #tpu.core_type<tc>, window_params = [{transform_indices = @transform_0, window_bounds = array<i64: 1, 18, 64>}, {pipeline_mode = #tpu.pipeline_mode<synchronous>, transform_indices = @transform_1, window_bounds = array<i64: 3, 64, 32>}, {pipeline_mode = #tpu.pipeline_mode<synchronous>, transform_indices = @transform_2, window_bounds = array<i64: 1, 32>}, {pipeline_mode = #tpu.pipeline_mode<synchronous>, transform_indices = @transform_3, window_bounds = array<i64: 1, 32>}, {pipeline_mode = #tpu.pipeline_mode<synchronous>, transform_indices = @transform_4, window_bounds = array<i64: 1, 32>}, {transform_indices = @transform_5, window_bounds = array<i64: 1, 16, 1>}, {transform_indices = @transform_6, window_bounds = array<i64: 1, 16, 32>}]} {
    %c0 = arith.constant 0 : index
    %c0_0 = arith.constant 0 : index
    %c0_1 = arith.constant 0 : index
    %0 = vector.load %arg1[%c0, %c0_0, %c0_1] : memref<1x18x64xbf16, #tpu.memory_space<vmem>>, vector<1x16x64xbf16>
    %1 = vector.shape_cast %0 : vector<1x16x64xbf16> to vector<16x64xbf16>
    %c0_2 = arith.constant 0 : index
    %c0_3 = arith.constant 0 : index
    %c0_4 = arith.constant 0 : index
    %2 = vector.load %arg2[%c0_2, %c0_3, %c0_4] : memref<3x64x32xbf16, #tpu.memory_space<vmem>>, vector<1x64x32xbf16>
    %3 = vector.shape_cast %2 : vector<1x64x32xbf16> to vector<64x32xbf16>
    %cst = arith.constant dense<0.000000e+00> : vector<16x32xf32>
    %4 = tpu.matmul %1, %3, %cst {dimension_numbers = #tpu.dot_dimension_numbers<[1], [0], [0], [1], [0, 0, 1, 1], [], []>} : vector<16x64xbf16>, vector<64x32xbf16>, vector<16x32xf32> -> vector<16x32xf32>
    %c0_5 = arith.constant 0 : index
    %c1 = arith.constant 1 : index
    %c0_6 = arith.constant 0 : index
    %5 = vector.load %arg1[%c0_5, %c1, %c0_6] : memref<1x18x64xbf16, #tpu.memory_space<vmem>>, vector<1x16x64xbf16>
    %6 = vector.shape_cast %5 : vector<1x16x64xbf16> to vector<16x64xbf16>
    %c1_7 = arith.constant 1 : index
    %c0_8 = arith.constant 0 : index
    %c0_9 = arith.constant 0 : index
    %7 = vector.load %arg2[%c1_7, %c0_8, %c0_9] : memref<3x64x32xbf16, #tpu.memory_space<vmem>>, vector<1x64x32xbf16>
    %8 = vector.shape_cast %7 : vector<1x64x32xbf16> to vector<64x32xbf16>
    %cst_10 = arith.constant dense<0.000000e+00> : vector<16x32xf32>
    %9 = tpu.matmul %6, %8, %cst_10 {dimension_numbers = #tpu.dot_dimension_numbers<[1], [0], [0], [1], [0, 0, 1, 1], [], []>} : vector<16x64xbf16>, vector<64x32xbf16>, vector<16x32xf32> -> vector<16x32xf32>
    %10 = arith.addf %4, %9 : vector<16x32xf32>
    %c0_11 = arith.constant 0 : index
    %c2 = arith.constant 2 : index
    %c0_12 = arith.constant 0 : index
    %11 = vector.load %arg1[%c0_11, %c2, %c0_12] : memref<1x18x64xbf16, #tpu.memory_space<vmem>>, vector<1x16x64xbf16>
    %12 = vector.shape_cast %11 : vector<1x16x64xbf16> to vector<16x64xbf16>
    %c2_13 = arith.constant 2 : index
    %c0_14 = arith.constant 0 : index
    %c0_15 = arith.constant 0 : index
    %13 = vector.load %arg2[%c2_13, %c0_14, %c0_15] : memref<3x64x32xbf16, #tpu.memory_space<vmem>>, vector<1x64x32xbf16>
    %14 = vector.shape_cast %13 : vector<1x64x32xbf16> to vector<64x32xbf16>
    %cst_16 = arith.constant dense<0.000000e+00> : vector<16x32xf32>
    %15 = tpu.matmul %12, %14, %cst_16 {dimension_numbers = #tpu.dot_dimension_numbers<[1], [0], [0], [1], [0, 0, 1, 1], [], []>} : vector<16x64xbf16>, vector<64x32xbf16>, vector<16x32xf32> -> vector<16x32xf32>
    %16 = arith.addf %10, %15 : vector<16x32xf32>
    %c0_17 = arith.constant 0 : index
    %c0_18 = arith.constant 0 : index
    %17 = vector.load %arg3[%c0_17, %c0_18] : memref<1x32xf32, #tpu.memory_space<vmem>>, vector<1x32xf32>
    %18 = vector.broadcast %17 : vector<1x32xf32> to vector<16x32xf32>
    %19 = arith.addf %16, %18 : vector<16x32xf32>
    %cst_19 = arith.constant dense<0.000000e+00> : vector<16xf32>
    %20 = vector.multi_reduction <add>, %19, %cst_19 [1] : vector<16x32xf32> to vector<16xf32>
    %21 = vector.shape_cast %20 : vector<16xf32> to vector<16x1xf32>
    %cst_20 = arith.constant 3.200000e+01 : f32
    %22 = vector.broadcast %cst_20 : f32 to vector<16x1xf32>
    %23 = arith.divf %21, %22 : vector<16x1xf32>
    %24 = vector.broadcast %23 : vector<16x1xf32> to vector<16x32xf32>
    %25 = arith.subf %19, %24 : vector<16x32xf32>
    %26 = arith.mulf %25, %25 : vector<16x32xf32>
    %cst_21 = arith.constant dense<0.000000e+00> : vector<16xf32>
    %27 = vector.multi_reduction <add>, %26, %cst_21 [1] : vector<16x32xf32> to vector<16xf32>
    %28 = vector.shape_cast %27 : vector<16xf32> to vector<16x1xf32>
    %cst_22 = arith.constant 3.200000e+01 : f32
    %29 = vector.broadcast %cst_22 : f32 to vector<16x1xf32>
    %30 = arith.divf %28, %29 : vector<16x1xf32>
    %cst_23 = arith.constant 9.99999974E-6 : f32
    %31 = vector.broadcast %cst_23 : f32 to vector<16x1xf32>
    %32 = arith.addf %30, %31 : vector<16x1xf32>
    %33 = math.rsqrt %32 : vector<16x1xf32>
    %34 = vector.broadcast %33 : vector<16x1xf32> to vector<16x32xf32>
    %35 = arith.mulf %25, %34 : vector<16x32xf32>
    %c0_24 = arith.constant 0 : index
    %c0_25 = arith.constant 0 : index
    %36 = vector.load %arg4[%c0_24, %c0_25] : memref<1x32xf32, #tpu.memory_space<vmem>>, vector<1x32xf32>
    %37 = vector.broadcast %36 : vector<1x32xf32> to vector<16x32xf32>
    %38 = arith.mulf %35, %37 : vector<16x32xf32>
    %c0_26 = arith.constant 0 : index
    %c0_27 = arith.constant 0 : index
    %39 = vector.load %arg5[%c0_26, %c0_27] : memref<1x32xf32, #tpu.memory_space<vmem>>, vector<1x32xf32>
    %40 = vector.broadcast %39 : vector<1x32xf32> to vector<16x32xf32>
    %41 = arith.addf %38, %40 : vector<16x32xf32>
    %cst_28 = arith.constant 0.000000e+00 : f32
    %42 = vector.broadcast %cst_28 : f32 to vector<16x32xf32>
    %43 = arith.maximumf %41, %42 : vector<16x32xf32>
    %c0_29 = arith.constant 0 : index
    %c0_30 = arith.constant 0 : index
    %c0_31 = arith.constant 0 : index
    %44 = vector.load %arg6[%c0_29, %c0_30, %c0_31] : memref<1x16x1xf32, #tpu.memory_space<vmem>>, vector<1x16x1xf32>
    %45 = vector.shape_cast %44 : vector<1x16x1xf32> to vector<16x1xf32>
    %46 = vector.broadcast %45 : vector<16x1xf32> to vector<16x32xf32>
    %47 = arith.mulf %43, %46 : vector<16x32xf32>
    %c0_32 = arith.constant 0 : index
    %c0_33 = arith.constant 0 : index
    %c0_34 = arith.constant 0 : index
    %48 = vector.load %arg7[%c0_32, %c0_33, %c0_34] : memref<1x16x32xf32, #tpu.memory_space<vmem>>, vector<1x16x32xf32>
    %49 = vector.shape_cast %48 : vector<1x16x32xf32> to vector<16x32xf32>
    %50 = vector.shape_cast %47 : vector<16x32xf32> to vector<1x16x32xf32>
    tpu.vector_store %arg7[%c0_32, %c0_33, %c0_34], %50 {strides = array<i32>} : memref<1x16x32xf32, #tpu.memory_space<vmem>>, vector<1x16x32xf32>,
    return
  }
  func.func @transform_0(%arg0: i32) -> (i32, i32, i32) {
    %c0_i32 = arith.constant 0 : i32
    %c0_i32_0 = arith.constant 0 : i32
    %c0_i32_1 = arith.constant 0 : i32
    return %arg0, %c0_i32, %c0_i32_0 : i32, i32, i32
  }
  func.func @transform_1(%arg0: i32) -> (i32, i32, i32) {
    %c0_i32 = arith.constant 0 : i32
    %c0_i32_0 = arith.constant 0 : i32
    %c0_i32_1 = arith.constant 0 : i32
    %c0_i32_2 = arith.constant 0 : i32
    return %c0_i32, %c0_i32_0, %c0_i32_1 : i32, i32, i32
  }
  func.func @transform_2(%arg0: i32) -> (i32, i32) {
    %c0_i32 = arith.constant 0 : i32
    %c0_i32_0 = arith.constant 0 : i32
    %c0_i32_1 = arith.constant 0 : i32
    return %c0_i32, %c0_i32_0 : i32, i32
  }
  func.func @transform_3(%arg0: i32) -> (i32, i32) {
    %c0_i32 = arith.constant 0 : i32
    %c0_i32_0 = arith.constant 0 : i32
    %c0_i32_1 = arith.constant 0 : i32
    return %c0_i32, %c0_i32_0 : i32, i32
  }
  func.func @transform_4(%arg0: i32) -> (i32, i32) {
    %c0_i32 = arith.constant 0 : i32
    %c0_i32_0 = arith.constant 0 : i32
    %c0_i32_1 = arith.constant 0 : i32
    return %c0_i32, %c0_i32_0 : i32, i32
  }
  func.func @transform_5(%arg0: i32) -> (i32, i32, i32) {
    %c0_i32 = arith.constant 0 : i32
    %c0_i32_0 = arith.constant 0 : i32
    %c0_i32_1 = arith.constant 0 : i32
    return %arg0, %c0_i32, %c0_i32_0 : i32, i32, i32
  }
  func.func @transform_6(%arg0: i32) -> (i32, i32, i32) {
    %c0_i32 = arith.constant 0 : i32
    %c0_i32_0 = arith.constant 0 : i32
    %c0_i32_1 = arith.constant 0 : i32
    return %arg0, %c0_i32, %c0_i32_0 : i32, i32, i32
  }
}

module attributes {stable_mosaic.version = 11 : i64} {
  func.func @_conv3_kernel(%arg0: i32, %arg1: memref<1x18x64xbf16, #tpu.memory_space<vmem>>, %arg2: memref<3x64x64xbf16, #tpu.memory_space<vmem>>, %arg3: memref<1x64xf32, #tpu.memory_space<vmem>>, %arg4: memref<1x64xf32, #tpu.memory_space<vmem>>, %arg5: memref<1x64xf32, #tpu.memory_space<vmem>>, %arg6: memref<1x16x64xf32, #tpu.memory_space<vmem>>) attributes {dimension_semantics = [#tpu.dimension_semantics<parallel>], iteration_bounds = array<i64: 2>, scalar_prefetch = 0 : i64, scratch_operands = 0 : i64, tpu.core_type = #tpu.core_type<tc>, window_params = [{transform_indices = @transform_0, window_bounds = array<i64: 1, 18, 64>}, {pipeline_mode = #tpu.pipeline_mode<synchronous>, transform_indices = @transform_1, window_bounds = array<i64: 3, 64, 64>}, {pipeline_mode = #tpu.pipeline_mode<synchronous>, transform_indices = @transform_2, window_bounds = array<i64: 1, 64>}, {pipeline_mode = #tpu.pipeline_mode<synchronous>, transform_indices = @transform_3, window_bounds = array<i64: 1, 64>}, {pipeline_mode = #tpu.pipeline_mode<synchronous>, transform_indices = @transform_4, window_bounds = array<i64: 1, 64>}, {transform_indices = @transform_5, window_bounds = array<i64: 1, 16, 64>}]} {
    %c0 = arith.constant 0 : index
    %c0_0 = arith.constant 0 : index
    %c0_1 = arith.constant 0 : index
    %0 = vector.load %arg1[%c0, %c0_0, %c0_1] : memref<1x18x64xbf16, #tpu.memory_space<vmem>>, vector<1x16x64xbf16>
    %1 = vector.shape_cast %0 : vector<1x16x64xbf16> to vector<16x64xbf16>
    %c0_2 = arith.constant 0 : index
    %c0_3 = arith.constant 0 : index
    %c0_4 = arith.constant 0 : index
    %2 = vector.load %arg2[%c0_2, %c0_3, %c0_4] : memref<3x64x64xbf16, #tpu.memory_space<vmem>>, vector<1x64x64xbf16>
    %3 = vector.shape_cast %2 : vector<1x64x64xbf16> to vector<64x64xbf16>
    %cst = arith.constant dense<0.000000e+00> : vector<16x64xf32>
    %4 = tpu.matmul %1, %3, %cst {dimension_numbers = #tpu.dot_dimension_numbers<[1], [0], [0], [1], [0, 0, 1, 1], [], []>} : vector<16x64xbf16>, vector<64x64xbf16>, vector<16x64xf32> -> vector<16x64xf32>
    %c0_5 = arith.constant 0 : index
    %c1 = arith.constant 1 : index
    %c0_6 = arith.constant 0 : index
    %5 = vector.load %arg1[%c0_5, %c1, %c0_6] : memref<1x18x64xbf16, #tpu.memory_space<vmem>>, vector<1x16x64xbf16>
    %6 = vector.shape_cast %5 : vector<1x16x64xbf16> to vector<16x64xbf16>
    %c1_7 = arith.constant 1 : index
    %c0_8 = arith.constant 0 : index
    %c0_9 = arith.constant 0 : index
    %7 = vector.load %arg2[%c1_7, %c0_8, %c0_9] : memref<3x64x64xbf16, #tpu.memory_space<vmem>>, vector<1x64x64xbf16>
    %8 = vector.shape_cast %7 : vector<1x64x64xbf16> to vector<64x64xbf16>
    %cst_10 = arith.constant dense<0.000000e+00> : vector<16x64xf32>
    %9 = tpu.matmul %6, %8, %cst_10 {dimension_numbers = #tpu.dot_dimension_numbers<[1], [0], [0], [1], [0, 0, 1, 1], [], []>} : vector<16x64xbf16>, vector<64x64xbf16>, vector<16x64xf32> -> vector<16x64xf32>
    %10 = arith.addf %4, %9 : vector<16x64xf32>
    %c0_11 = arith.constant 0 : index
    %c2 = arith.constant 2 : index
    %c0_12 = arith.constant 0 : index
    %11 = vector.load %arg1[%c0_11, %c2, %c0_12] : memref<1x18x64xbf16, #tpu.memory_space<vmem>>, vector<1x16x64xbf16>
    %12 = vector.shape_cast %11 : vector<1x16x64xbf16> to vector<16x64xbf16>
    %c2_13 = arith.constant 2 : index
    %c0_14 = arith.constant 0 : index
    %c0_15 = arith.constant 0 : index
    %13 = vector.load %arg2[%c2_13, %c0_14, %c0_15] : memref<3x64x64xbf16, #tpu.memory_space<vmem>>, vector<1x64x64xbf16>
    %14 = vector.shape_cast %13 : vector<1x64x64xbf16> to vector<64x64xbf16>
    %cst_16 = arith.constant dense<0.000000e+00> : vector<16x64xf32>
    %15 = tpu.matmul %12, %14, %cst_16 {dimension_numbers = #tpu.dot_dimension_numbers<[1], [0], [0], [1], [0, 0, 1, 1], [], []>} : vector<16x64xbf16>, vector<64x64xbf16>, vector<16x64xf32> -> vector<16x64xf32>
    %16 = arith.addf %10, %15 : vector<16x64xf32>
    %c0_17 = arith.constant 0 : index
    %c0_18 = arith.constant 0 : index
    %17 = vector.load %arg3[%c0_17, %c0_18] : memref<1x64xf32, #tpu.memory_space<vmem>>, vector<1x64xf32>
    %18 = vector.broadcast %17 : vector<1x64xf32> to vector<16x64xf32>
    %19 = arith.addf %16, %18 : vector<16x64xf32>
    %cst_19 = arith.constant dense<0.000000e+00> : vector<16xf32>
    %20 = vector.multi_reduction <add>, %19, %cst_19 [1] : vector<16x64xf32> to vector<16xf32>
    %21 = vector.shape_cast %20 : vector<16xf32> to vector<16x1xf32>
    %cst_20 = arith.constant 6.400000e+01 : f32
    %22 = vector.broadcast %cst_20 : f32 to vector<16x1xf32>
    %23 = arith.divf %21, %22 : vector<16x1xf32>
    %24 = vector.broadcast %23 : vector<16x1xf32> to vector<16x64xf32>
    %25 = arith.subf %19, %24 : vector<16x64xf32>
    %26 = arith.mulf %25, %25 : vector<16x64xf32>
    %cst_21 = arith.constant dense<0.000000e+00> : vector<16xf32>
    %27 = vector.multi_reduction <add>, %26, %cst_21 [1] : vector<16x64xf32> to vector<16xf32>
    %28 = vector.shape_cast %27 : vector<16xf32> to vector<16x1xf32>
    %cst_22 = arith.constant 6.400000e+01 : f32
    %29 = vector.broadcast %cst_22 : f32 to vector<16x1xf32>
    %30 = arith.divf %28, %29 : vector<16x1xf32>
    %cst_23 = arith.constant 9.99999974E-6 : f32
    %31 = vector.broadcast %cst_23 : f32 to vector<16x1xf32>
    %32 = arith.addf %30, %31 : vector<16x1xf32>
    %33 = math.rsqrt %32 : vector<16x1xf32>
    %34 = vector.broadcast %33 : vector<16x1xf32> to vector<16x64xf32>
    %35 = arith.mulf %25, %34 : vector<16x64xf32>
    %c0_24 = arith.constant 0 : index
    %c0_25 = arith.constant 0 : index
    %36 = vector.load %arg4[%c0_24, %c0_25] : memref<1x64xf32, #tpu.memory_space<vmem>>, vector<1x64xf32>
    %37 = vector.broadcast %36 : vector<1x64xf32> to vector<16x64xf32>
    %38 = arith.mulf %35, %37 : vector<16x64xf32>
    %c0_26 = arith.constant 0 : index
    %c0_27 = arith.constant 0 : index
    %39 = vector.load %arg5[%c0_26, %c0_27] : memref<1x64xf32, #tpu.memory_space<vmem>>, vector<1x64xf32>
    %40 = vector.broadcast %39 : vector<1x64xf32> to vector<16x64xf32>
    %41 = arith.addf %38, %40 : vector<16x64xf32>
    %cst_28 = arith.constant 0.000000e+00 : f32
    %42 = vector.broadcast %cst_28 : f32 to vector<16x64xf32>
    %43 = arith.maximumf %41, %42 : vector<16x64xf32>
    %c0_29 = arith.constant 0 : index
    %c0_30 = arith.constant 0 : index
    %c0_31 = arith.constant 0 : index
    %44 = vector.load %arg6[%c0_29, %c0_30, %c0_31] : memref<1x16x64xf32, #tpu.memory_space<vmem>>, vector<1x16x64xf32>
    %45 = vector.shape_cast %44 : vector<1x16x64xf32> to vector<16x64xf32>
    %46 = vector.shape_cast %43 : vector<16x64xf32> to vector<1x16x64xf32>
    tpu.vector_store %arg6[%c0_29, %c0_30, %c0_31], %46 {strides = array<i32>} : memref<1x16x64xf32, #tpu.memory_space<vmem>>, vector<1x16x64xf32>,
    return
  }
  func.func @transform_0(%arg0: i32) -> (i32, i32, i32) {
    %c0_i32 = arith.constant 0 : i32
    %c0_i32_0 = arith.constant 0 : i32
    %c0_i32_1 = arith.constant 0 : i32
    return %arg0, %c0_i32, %c0_i32_0 : i32, i32, i32
  }
  func.func @transform_1(%arg0: i32) -> (i32, i32, i32) {
    %c0_i32 = arith.constant 0 : i32
    %c0_i32_0 = arith.constant 0 : i32
    %c0_i32_1 = arith.constant 0 : i32
    %c0_i32_2 = arith.constant 0 : i32
    return %c0_i32, %c0_i32_0, %c0_i32_1 : i32, i32, i32
  }
  func.func @transform_2(%arg0: i32) -> (i32, i32) {
    %c0_i32 = arith.constant 0 : i32
    %c0_i32_0 = arith.constant 0 : i32
    %c0_i32_1 = arith.constant 0 : i32
    return %c0_i32, %c0_i32_0 : i32, i32
  }
  func.func @transform_3(%arg0: i32) -> (i32, i32) {
    %c0_i32 = arith.constant 0 : i32
    %c0_i32_0 = arith.constant 0 : i32
    %c0_i32_1 = arith.constant 0 : i32
    return %c0_i32, %c0_i32_0 : i32, i32
  }
  func.func @transform_4(%arg0: i32) -> (i32, i32) {
    %c0_i32 = arith.constant 0 : i32
    %c0_i32_0 = arith.constant 0 : i32
    %c0_i32_1 = arith.constant 0 : i32
    return %c0_i32, %c0_i32_0 : i32, i32
  }
  func.func @transform_5(%arg0: i32) -> (i32, i32, i32) {
    %c0_i32 = arith.constant 0 : i32
    %c0_i32_0 = arith.constant 0 : i32
    %c0_i32_1 = arith.constant 0 : i32
    return %arg0, %c0_i32, %c0_i32_0 : i32, i32, i32
  }
}

module attributes {stable_mosaic.version = 11 : i64} {
  func.func @_conv3_kernel(%arg0: i32, %arg1: memref<1x18x32xbf16, #tpu.memory_space<vmem>>, %arg2: memref<3x32x32xbf16, #tpu.memory_space<vmem>>, %arg3: memref<1x32xf32, #tpu.memory_space<vmem>>, %arg4: memref<1x32xf32, #tpu.memory_space<vmem>>, %arg5: memref<1x32xf32, #tpu.memory_space<vmem>>, %arg6: memref<1x16x1xf32, #tpu.memory_space<vmem>>, %arg7: memref<1x16x32xf32, #tpu.memory_space<vmem>>) attributes {dimension_semantics = [#tpu.dimension_semantics<parallel>], iteration_bounds = array<i64: 2>, scalar_prefetch = 0 : i64, scratch_operands = 0 : i64, tpu.core_type = #tpu.core_type<tc>, window_params = [{transform_indices = @transform_0, window_bounds = array<i64: 1, 18, 32>}, {pipeline_mode = #tpu.pipeline_mode<synchronous>, transform_indices = @transform_1, window_bounds = array<i64: 3, 32, 32>}, {pipeline_mode = #tpu.pipeline_mode<synchronous>, transform_indices = @transform_2, window_bounds = array<i64: 1, 32>}, {pipeline_mode = #tpu.pipeline_mode<synchronous>, transform_indices = @transform_3, window_bounds = array<i64: 1, 32>}, {pipeline_mode = #tpu.pipeline_mode<synchronous>, transform_indices = @transform_4, window_bounds = array<i64: 1, 32>}, {transform_indices = @transform_5, window_bounds = array<i64: 1, 16, 1>}, {transform_indices = @transform_6, window_bounds = array<i64: 1, 16, 32>}]} {
    %c0 = arith.constant 0 : index
    %c0_0 = arith.constant 0 : index
    %c0_1 = arith.constant 0 : index
    %0 = vector.load %arg1[%c0, %c0_0, %c0_1] : memref<1x18x32xbf16, #tpu.memory_space<vmem>>, vector<1x16x32xbf16>
    %1 = vector.shape_cast %0 : vector<1x16x32xbf16> to vector<16x32xbf16>
    %c0_2 = arith.constant 0 : index
    %c0_3 = arith.constant 0 : index
    %c0_4 = arith.constant 0 : index
    %2 = vector.load %arg2[%c0_2, %c0_3, %c0_4] : memref<3x32x32xbf16, #tpu.memory_space<vmem>>, vector<1x32x32xbf16>
    %3 = vector.shape_cast %2 : vector<1x32x32xbf16> to vector<32x32xbf16>
    %cst = arith.constant dense<0.000000e+00> : vector<16x32xf32>
    %4 = tpu.matmul %1, %3, %cst {dimension_numbers = #tpu.dot_dimension_numbers<[1], [0], [0], [1], [0, 0, 1, 1], [], []>} : vector<16x32xbf16>, vector<32x32xbf16>, vector<16x32xf32> -> vector<16x32xf32>
    %c0_5 = arith.constant 0 : index
    %c1 = arith.constant 1 : index
    %c0_6 = arith.constant 0 : index
    %5 = vector.load %arg1[%c0_5, %c1, %c0_6] : memref<1x18x32xbf16, #tpu.memory_space<vmem>>, vector<1x16x32xbf16>
    %6 = vector.shape_cast %5 : vector<1x16x32xbf16> to vector<16x32xbf16>
    %c1_7 = arith.constant 1 : index
    %c0_8 = arith.constant 0 : index
    %c0_9 = arith.constant 0 : index
    %7 = vector.load %arg2[%c1_7, %c0_8, %c0_9] : memref<3x32x32xbf16, #tpu.memory_space<vmem>>, vector<1x32x32xbf16>
    %8 = vector.shape_cast %7 : vector<1x32x32xbf16> to vector<32x32xbf16>
    %cst_10 = arith.constant dense<0.000000e+00> : vector<16x32xf32>
    %9 = tpu.matmul %6, %8, %cst_10 {dimension_numbers = #tpu.dot_dimension_numbers<[1], [0], [0], [1], [0, 0, 1, 1], [], []>} : vector<16x32xbf16>, vector<32x32xbf16>, vector<16x32xf32> -> vector<16x32xf32>
    %10 = arith.addf %4, %9 : vector<16x32xf32>
    %c0_11 = arith.constant 0 : index
    %c2 = arith.constant 2 : index
    %c0_12 = arith.constant 0 : index
    %11 = vector.load %arg1[%c0_11, %c2, %c0_12] : memref<1x18x32xbf16, #tpu.memory_space<vmem>>, vector<1x16x32xbf16>
    %12 = vector.shape_cast %11 : vector<1x16x32xbf16> to vector<16x32xbf16>
    %c2_13 = arith.constant 2 : index
    %c0_14 = arith.constant 0 : index
    %c0_15 = arith.constant 0 : index
    %13 = vector.load %arg2[%c2_13, %c0_14, %c0_15] : memref<3x32x32xbf16, #tpu.memory_space<vmem>>, vector<1x32x32xbf16>
    %14 = vector.shape_cast %13 : vector<1x32x32xbf16> to vector<32x32xbf16>
    %cst_16 = arith.constant dense<0.000000e+00> : vector<16x32xf32>
    %15 = tpu.matmul %12, %14, %cst_16 {dimension_numbers = #tpu.dot_dimension_numbers<[1], [0], [0], [1], [0, 0, 1, 1], [], []>} : vector<16x32xbf16>, vector<32x32xbf16>, vector<16x32xf32> -> vector<16x32xf32>
    %16 = arith.addf %10, %15 : vector<16x32xf32>
    %c0_17 = arith.constant 0 : index
    %c0_18 = arith.constant 0 : index
    %17 = vector.load %arg3[%c0_17, %c0_18] : memref<1x32xf32, #tpu.memory_space<vmem>>, vector<1x32xf32>
    %18 = vector.broadcast %17 : vector<1x32xf32> to vector<16x32xf32>
    %19 = arith.addf %16, %18 : vector<16x32xf32>
    %cst_19 = arith.constant dense<0.000000e+00> : vector<16xf32>
    %20 = vector.multi_reduction <add>, %19, %cst_19 [1] : vector<16x32xf32> to vector<16xf32>
    %21 = vector.shape_cast %20 : vector<16xf32> to vector<16x1xf32>
    %cst_20 = arith.constant 3.200000e+01 : f32
    %22 = vector.broadcast %cst_20 : f32 to vector<16x1xf32>
    %23 = arith.divf %21, %22 : vector<16x1xf32>
    %24 = vector.broadcast %23 : vector<16x1xf32> to vector<16x32xf32>
    %25 = arith.subf %19, %24 : vector<16x32xf32>
    %26 = arith.mulf %25, %25 : vector<16x32xf32>
    %cst_21 = arith.constant dense<0.000000e+00> : vector<16xf32>
    %27 = vector.multi_reduction <add>, %26, %cst_21 [1] : vector<16x32xf32> to vector<16xf32>
    %28 = vector.shape_cast %27 : vector<16xf32> to vector<16x1xf32>
    %cst_22 = arith.constant 3.200000e+01 : f32
    %29 = vector.broadcast %cst_22 : f32 to vector<16x1xf32>
    %30 = arith.divf %28, %29 : vector<16x1xf32>
    %cst_23 = arith.constant 9.99999974E-6 : f32
    %31 = vector.broadcast %cst_23 : f32 to vector<16x1xf32>
    %32 = arith.addf %30, %31 : vector<16x1xf32>
    %33 = math.rsqrt %32 : vector<16x1xf32>
    %34 = vector.broadcast %33 : vector<16x1xf32> to vector<16x32xf32>
    %35 = arith.mulf %25, %34 : vector<16x32xf32>
    %c0_24 = arith.constant 0 : index
    %c0_25 = arith.constant 0 : index
    %36 = vector.load %arg4[%c0_24, %c0_25] : memref<1x32xf32, #tpu.memory_space<vmem>>, vector<1x32xf32>
    %37 = vector.broadcast %36 : vector<1x32xf32> to vector<16x32xf32>
    %38 = arith.mulf %35, %37 : vector<16x32xf32>
    %c0_26 = arith.constant 0 : index
    %c0_27 = arith.constant 0 : index
    %39 = vector.load %arg5[%c0_26, %c0_27] : memref<1x32xf32, #tpu.memory_space<vmem>>, vector<1x32xf32>
    %40 = vector.broadcast %39 : vector<1x32xf32> to vector<16x32xf32>
    %41 = arith.addf %38, %40 : vector<16x32xf32>
    %cst_28 = arith.constant 0.000000e+00 : f32
    %42 = vector.broadcast %cst_28 : f32 to vector<16x32xf32>
    %43 = arith.maximumf %41, %42 : vector<16x32xf32>
    %c0_29 = arith.constant 0 : index
    %c0_30 = arith.constant 0 : index
    %c0_31 = arith.constant 0 : index
    %44 = vector.load %arg6[%c0_29, %c0_30, %c0_31] : memref<1x16x1xf32, #tpu.memory_space<vmem>>, vector<1x16x1xf32>
    %45 = vector.shape_cast %44 : vector<1x16x1xf32> to vector<16x1xf32>
    %46 = vector.broadcast %45 : vector<16x1xf32> to vector<16x32xf32>
    %47 = arith.mulf %43, %46 : vector<16x32xf32>
    %c0_32 = arith.constant 0 : index
    %c0_33 = arith.constant 0 : index
    %c0_34 = arith.constant 0 : index
    %48 = vector.load %arg7[%c0_32, %c0_33, %c0_34] : memref<1x16x32xf32, #tpu.memory_space<vmem>>, vector<1x16x32xf32>
    %49 = vector.shape_cast %48 : vector<1x16x32xf32> to vector<16x32xf32>
    %50 = vector.shape_cast %47 : vector<16x32xf32> to vector<1x16x32xf32>
    tpu.vector_store %arg7[%c0_32, %c0_33, %c0_34], %50 {strides = array<i32>} : memref<1x16x32xf32, #tpu.memory_space<vmem>>, vector<1x16x32xf32>,
    return
  }
  func.func @transform_0(%arg0: i32) -> (i32, i32, i32) {
    %c0_i32 = arith.constant 0 : i32
    %c0_i32_0 = arith.constant 0 : i32
    %c0_i32_1 = arith.constant 0 : i32
    return %arg0, %c0_i32, %c0_i32_0 : i32, i32, i32
  }
  func.func @transform_1(%arg0: i32) -> (i32, i32, i32) {
    %c0_i32 = arith.constant 0 : i32
    %c0_i32_0 = arith.constant 0 : i32
    %c0_i32_1 = arith.constant 0 : i32
    %c0_i32_2 = arith.constant 0 : i32
    return %c0_i32, %c0_i32_0, %c0_i32_1 : i32, i32, i32
  }
  func.func @transform_2(%arg0: i32) -> (i32, i32) {
    %c0_i32 = arith.constant 0 : i32
    %c0_i32_0 = arith.constant 0 : i32
    %c0_i32_1 = arith.constant 0 : i32
    return %c0_i32, %c0_i32_0 : i32, i32
  }
  func.func @transform_3(%arg0: i32) -> (i32, i32) {
    %c0_i32 = arith.constant 0 : i32
    %c0_i32_0 = arith.constant 0 : i32
    %c0_i32_1 = arith.constant 0 : i32
    return %c0_i32, %c0_i32_0 : i32, i32
  }
  func.func @transform_4(%arg0: i32) -> (i32, i32) {
    %c0_i32 = arith.constant 0 : i32
    %c0_i32_0 = arith.constant 0 : i32
    %c0_i32_1 = arith.constant 0 : i32
    return %c0_i32, %c0_i32_0 : i32, i32
  }
  func.func @transform_5(%arg0: i32) -> (i32, i32, i32) {
    %c0_i32 = arith.constant 0 : i32
    %c0_i32_0 = arith.constant 0 : i32
    %c0_i32_1 = arith.constant 0 : i32
    return %arg0, %c0_i32, %c0_i32_0 : i32, i32, i32
  }
  func.func @transform_6(%arg0: i32) -> (i32, i32, i32) {
    %c0_i32 = arith.constant 0 : i32
    %c0_i32_0 = arith.constant 0 : i32
    %c0_i32_1 = arith.constant 0 : i32
    return %arg0, %c0_i32, %c0_i32_0 : i32, i32, i32
  }
}

module attributes {stable_mosaic.version = 11 : i64} {
  func.func @_conv3_kernel(%arg0: i32, %arg1: memref<1x18x32xbf16, #tpu.memory_space<vmem>>, %arg2: memref<3x32x128xbf16, #tpu.memory_space<vmem>>, %arg3: memref<1x128xf32, #tpu.memory_space<vmem>>, %arg4: memref<1x16x128xf32, #tpu.memory_space<vmem>>) attributes {dimension_semantics = [#tpu.dimension_semantics<parallel>], iteration_bounds = array<i64: 2>, scalar_prefetch = 0 : i64, scratch_operands = 0 : i64, tpu.core_type = #tpu.core_type<tc>, window_params = [{transform_indices = @transform_0, window_bounds = array<i64: 1, 18, 32>}, {pipeline_mode = #tpu.pipeline_mode<synchronous>, transform_indices = @transform_1, window_bounds = array<i64: 3, 32, 128>}, {pipeline_mode = #tpu.pipeline_mode<synchronous>, transform_indices = @transform_2, window_bounds = array<i64: 1, 128>}, {transform_indices = @transform_3, window_bounds = array<i64: 1, 16, 128>}]} {
    %c0 = arith.constant 0 : index
    %c0_0 = arith.constant 0 : index
    %c0_1 = arith.constant 0 : index
    %0 = vector.load %arg1[%c0, %c0_0, %c0_1] : memref<1x18x32xbf16, #tpu.memory_space<vmem>>, vector<1x16x32xbf16>
    %1 = vector.shape_cast %0 : vector<1x16x32xbf16> to vector<16x32xbf16>
    %c0_2 = arith.constant 0 : index
    %c0_3 = arith.constant 0 : index
    %c0_4 = arith.constant 0 : index
    %2 = vector.load %arg2[%c0_2, %c0_3, %c0_4] : memref<3x32x128xbf16, #tpu.memory_space<vmem>>, vector<1x32x128xbf16>
    %3 = vector.shape_cast %2 : vector<1x32x128xbf16> to vector<32x128xbf16>
    %cst = arith.constant dense<0.000000e+00> : vector<16x128xf32>
    %4 = tpu.matmul %1, %3, %cst {dimension_numbers = #tpu.dot_dimension_numbers<[1], [0], [0], [1], [0, 0, 1, 1], [], []>} : vector<16x32xbf16>, vector<32x128xbf16>, vector<16x128xf32> -> vector<16x128xf32>
    %c0_5 = arith.constant 0 : index
    %c1 = arith.constant 1 : index
    %c0_6 = arith.constant 0 : index
    %5 = vector.load %arg1[%c0_5, %c1, %c0_6] : memref<1x18x32xbf16, #tpu.memory_space<vmem>>, vector<1x16x32xbf16>
    %6 = vector.shape_cast %5 : vector<1x16x32xbf16> to vector<16x32xbf16>
    %c1_7 = arith.constant 1 : index
    %c0_8 = arith.constant 0 : index
    %c0_9 = arith.constant 0 : index
    %7 = vector.load %arg2[%c1_7, %c0_8, %c0_9] : memref<3x32x128xbf16, #tpu.memory_space<vmem>>, vector<1x32x128xbf16>
    %8 = vector.shape_cast %7 : vector<1x32x128xbf16> to vector<32x128xbf16>
    %cst_10 = arith.constant dense<0.000000e+00> : vector<16x128xf32>
    %9 = tpu.matmul %6, %8, %cst_10 {dimension_numbers = #tpu.dot_dimension_numbers<[1], [0], [0], [1], [0, 0, 1, 1], [], []>} : vector<16x32xbf16>, vector<32x128xbf16>, vector<16x128xf32> -> vector<16x128xf32>
    %10 = arith.addf %4, %9 : vector<16x128xf32>
    %c0_11 = arith.constant 0 : index
    %c2 = arith.constant 2 : index
    %c0_12 = arith.constant 0 : index
    %11 = vector.load %arg1[%c0_11, %c2, %c0_12] : memref<1x18x32xbf16, #tpu.memory_space<vmem>>, vector<1x16x32xbf16>
    %12 = vector.shape_cast %11 : vector<1x16x32xbf16> to vector<16x32xbf16>
    %c2_13 = arith.constant 2 : index
    %c0_14 = arith.constant 0 : index
    %c0_15 = arith.constant 0 : index
    %13 = vector.load %arg2[%c2_13, %c0_14, %c0_15] : memref<3x32x128xbf16, #tpu.memory_space<vmem>>, vector<1x32x128xbf16>
    %14 = vector.shape_cast %13 : vector<1x32x128xbf16> to vector<32x128xbf16>
    %cst_16 = arith.constant dense<0.000000e+00> : vector<16x128xf32>
    %15 = tpu.matmul %12, %14, %cst_16 {dimension_numbers = #tpu.dot_dimension_numbers<[1], [0], [0], [1], [0, 0, 1, 1], [], []>} : vector<16x32xbf16>, vector<32x128xbf16>, vector<16x128xf32> -> vector<16x128xf32>
    %16 = arith.addf %10, %15 : vector<16x128xf32>
    %c0_17 = arith.constant 0 : index
    %c0_18 = arith.constant 0 : index
    %17 = vector.load %arg3[%c0_17, %c0_18] : memref<1x128xf32, #tpu.memory_space<vmem>>, vector<1x128xf32>
    %18 = vector.broadcast %17 : vector<1x128xf32> to vector<16x128xf32>
    %19 = arith.addf %16, %18 : vector<16x128xf32>
    %cst_19 = arith.constant 0.000000e+00 : f32
    %20 = vector.broadcast %cst_19 : f32 to vector<16x128xf32>
    %21 = arith.maximumf %19, %20 : vector<16x128xf32>
    %c0_20 = arith.constant 0 : index
    %c0_21 = arith.constant 0 : index
    %c0_22 = arith.constant 0 : index
    %22 = vector.load %arg4[%c0_20, %c0_21, %c0_22] : memref<1x16x128xf32, #tpu.memory_space<vmem>>, vector<1x16x128xf32>
    %23 = vector.shape_cast %22 : vector<1x16x128xf32> to vector<16x128xf32>
    %24 = vector.shape_cast %21 : vector<16x128xf32> to vector<1x16x128xf32>
    tpu.vector_store %arg4[%c0_20, %c0_21, %c0_22], %24 {strides = array<i32>} : memref<1x16x128xf32, #tpu.memory_space<vmem>>, vector<1x16x128xf32>,
    return
  }
  func.func @transform_0(%arg0: i32) -> (i32, i32, i32) {
    %c0_i32 = arith.constant 0 : i32
    %c0_i32_0 = arith.constant 0 : i32
    %c0_i32_1 = arith.constant 0 : i32
    return %arg0, %c0_i32, %c0_i32_0 : i32, i32, i32
  }
  func.func @transform_1(%arg0: i32) -> (i32, i32, i32) {
    %c0_i32 = arith.constant 0 : i32
    %c0_i32_0 = arith.constant 0 : i32
    %c0_i32_1 = arith.constant 0 : i32
    %c0_i32_2 = arith.constant 0 : i32
    return %c0_i32, %c0_i32_0, %c0_i32_1 : i32, i32, i32
  }
  func.func @transform_2(%arg0: i32) -> (i32, i32) {
    %c0_i32 = arith.constant 0 : i32
    %c0_i32_0 = arith.constant 0 : i32
    %c0_i32_1 = arith.constant 0 : i32
    return %c0_i32, %c0_i32_0 : i32, i32
  }
  func.func @transform_3(%arg0: i32) -> (i32, i32, i32) {
    %c0_i32 = arith.constant 0 : i32
    %c0_i32_0 = arith.constant 0 : i32
    %c0_i32_1 = arith.constant 0 : i32
    return %arg0, %c0_i32, %c0_i32_0 : i32, i32, i32
  }
}

module attributes {stable_mosaic.version = 11 : i64} {
  func.func @_conv3_kernel(%arg0: i32, %arg1: memref<1x18x32xbf16, #tpu.memory_space<vmem>>, %arg2: memref<3x32x128xbf16, #tpu.memory_space<vmem>>, %arg3: memref<1x128xf32, #tpu.memory_space<vmem>>, %arg4: memref<1x16x128xf32, #tpu.memory_space<vmem>>) attributes {dimension_semantics = [#tpu.dimension_semantics<parallel>], iteration_bounds = array<i64: 2>, scalar_prefetch = 0 : i64, scratch_operands = 0 : i64, tpu.core_type = #tpu.core_type<tc>, window_params = [{transform_indices = @transform_0, window_bounds = array<i64: 1, 18, 32>}, {pipeline_mode = #tpu.pipeline_mode<synchronous>, transform_indices = @transform_1, window_bounds = array<i64: 3, 32, 128>}, {pipeline_mode = #tpu.pipeline_mode<synchronous>, transform_indices = @transform_2, window_bounds = array<i64: 1, 128>}, {transform_indices = @transform_3, window_bounds = array<i64: 1, 16, 128>}]} {
    %c0 = arith.constant 0 : index
    %c0_0 = arith.constant 0 : index
    %c0_1 = arith.constant 0 : index
    %0 = vector.load %arg1[%c0, %c0_0, %c0_1] : memref<1x18x32xbf16, #tpu.memory_space<vmem>>, vector<1x16x32xbf16>
    %1 = vector.shape_cast %0 : vector<1x16x32xbf16> to vector<16x32xbf16>
    %c0_2 = arith.constant 0 : index
    %c0_3 = arith.constant 0 : index
    %c0_4 = arith.constant 0 : index
    %2 = vector.load %arg2[%c0_2, %c0_3, %c0_4] : memref<3x32x128xbf16, #tpu.memory_space<vmem>>, vector<1x32x128xbf16>
    %3 = vector.shape_cast %2 : vector<1x32x128xbf16> to vector<32x128xbf16>
    %cst = arith.constant dense<0.000000e+00> : vector<16x128xf32>
    %4 = tpu.matmul %1, %3, %cst {dimension_numbers = #tpu.dot_dimension_numbers<[1], [0], [0], [1], [0, 0, 1, 1], [], []>} : vector<16x32xbf16>, vector<32x128xbf16>, vector<16x128xf32> -> vector<16x128xf32>
    %c0_5 = arith.constant 0 : index
    %c1 = arith.constant 1 : index
    %c0_6 = arith.constant 0 : index
    %5 = vector.load %arg1[%c0_5, %c1, %c0_6] : memref<1x18x32xbf16, #tpu.memory_space<vmem>>, vector<1x16x32xbf16>
    %6 = vector.shape_cast %5 : vector<1x16x32xbf16> to vector<16x32xbf16>
    %c1_7 = arith.constant 1 : index
    %c0_8 = arith.constant 0 : index
    %c0_9 = arith.constant 0 : index
    %7 = vector.load %arg2[%c1_7, %c0_8, %c0_9] : memref<3x32x128xbf16, #tpu.memory_space<vmem>>, vector<1x32x128xbf16>
    %8 = vector.shape_cast %7 : vector<1x32x128xbf16> to vector<32x128xbf16>
    %cst_10 = arith.constant dense<0.000000e+00> : vector<16x128xf32>
    %9 = tpu.matmul %6, %8, %cst_10 {dimension_numbers = #tpu.dot_dimension_numbers<[1], [0], [0], [1], [0, 0, 1, 1], [], []>} : vector<16x32xbf16>, vector<32x128xbf16>, vector<16x128xf32> -> vector<16x128xf32>
    %10 = arith.addf %4, %9 : vector<16x128xf32>
    %c0_11 = arith.constant 0 : index
    %c2 = arith.constant 2 : index
    %c0_12 = arith.constant 0 : index
    %11 = vector.load %arg1[%c0_11, %c2, %c0_12] : memref<1x18x32xbf16, #tpu.memory_space<vmem>>, vector<1x16x32xbf16>
    %12 = vector.shape_cast %11 : vector<1x16x32xbf16> to vector<16x32xbf16>
    %c2_13 = arith.constant 2 : index
    %c0_14 = arith.constant 0 : index
    %c0_15 = arith.constant 0 : index
    %13 = vector.load %arg2[%c2_13, %c0_14, %c0_15] : memref<3x32x128xbf16, #tpu.memory_space<vmem>>, vector<1x32x128xbf16>
    %14 = vector.shape_cast %13 : vector<1x32x128xbf16> to vector<32x128xbf16>
    %cst_16 = arith.constant dense<0.000000e+00> : vector<16x128xf32>
    %15 = tpu.matmul %12, %14, %cst_16 {dimension_numbers = #tpu.dot_dimension_numbers<[1], [0], [0], [1], [0, 0, 1, 1], [], []>} : vector<16x32xbf16>, vector<32x128xbf16>, vector<16x128xf32> -> vector<16x128xf32>
    %16 = arith.addf %10, %15 : vector<16x128xf32>
    %c0_17 = arith.constant 0 : index
    %c0_18 = arith.constant 0 : index
    %17 = vector.load %arg3[%c0_17, %c0_18] : memref<1x128xf32, #tpu.memory_space<vmem>>, vector<1x128xf32>
    %18 = vector.broadcast %17 : vector<1x128xf32> to vector<16x128xf32>
    %19 = arith.addf %16, %18 : vector<16x128xf32>
    %c0_19 = arith.constant 0 : index
    %c0_20 = arith.constant 0 : index
    %c0_21 = arith.constant 0 : index
    %20 = vector.load %arg4[%c0_19, %c0_20, %c0_21] : memref<1x16x128xf32, #tpu.memory_space<vmem>>, vector<1x16x128xf32>
    %21 = vector.shape_cast %20 : vector<1x16x128xf32> to vector<16x128xf32>
    %22 = vector.shape_cast %19 : vector<16x128xf32> to vector<1x16x128xf32>
    tpu.vector_store %arg4[%c0_19, %c0_20, %c0_21], %22 {strides = array<i32>} : memref<1x16x128xf32, #tpu.memory_space<vmem>>, vector<1x16x128xf32>,
    return
  }
  func.func @transform_0(%arg0: i32) -> (i32, i32, i32) {
    %c0_i32 = arith.constant 0 : i32
    %c0_i32_0 = arith.constant 0 : i32
    %c0_i32_1 = arith.constant 0 : i32
    return %arg0, %c0_i32, %c0_i32_0 : i32, i32, i32
  }
  func.func @transform_1(%arg0: i32) -> (i32, i32, i32) {
    %c0_i32 = arith.constant 0 : i32
    %c0_i32_0 = arith.constant 0 : i32
    %c0_i32_1 = arith.constant 0 : i32
    %c0_i32_2 = arith.constant 0 : i32
    return %c0_i32, %c0_i32_0, %c0_i32_1 : i32, i32, i32
  }
  func.func @transform_2(%arg0: i32) -> (i32, i32) {
    %c0_i32 = arith.constant 0 : i32
    %c0_i32_0 = arith.constant 0 : i32
    %c0_i32_1 = arith.constant 0 : i32
    return %c0_i32, %c0_i32_0 : i32, i32
  }
  func.func @transform_3(%arg0: i32) -> (i32, i32, i32) {
    %c0_i32 = arith.constant 0 : i32
    %c0_i32_0 = arith.constant 0 : i32
    %c0_i32_1 = arith.constant 0 : i32
    return %arg0, %c0_i32, %c0_i32_0 : i32, i32, i32
  }
}

</mosaic_0001>

<llo_original>
// kernel: detector_forward.20
$region0: #{detector_forward.20}
  #allocation0 [shape = 'u32[]', space=smem, size = 0x4, offset = 0x4, fixed_abs, tag = 'smem constant byte address 0x4 - core index']
  #allocation1 [shape = 'u32[144,128]{1,0:T(1,128)}', space=vmem, size = 0x12000, scoped, tag = 'internal scratch']
  #allocation2 [shape = 'f32[128,128]{1,0:T(8,128)}', space=vmem, size = 0x10000, scoped, tag = 'scratch operand']
  %s0 = inlined_call_operand.vmem [shape: bf16[128,128], index: 0, kind: input, shape index: {}]
  %s1 = inlined_call_operand.vmem [shape: bf16[128,128], index: 1, kind: input, shape index: {}]
  %s2 = inlined_call_operand.vmem [shape: f32[1,128], index: 2, kind: input, shape index: {}]
  %s3 = inlined_call_operand.vmem [shape: f32[128,128], index: 3, kind: output, shape index: {}]
  %s4 = sld [smem:[#allocation0]]
  $region30: #{detector_forward.20} parent=0
    _
  %s6 = ssub.s32 1, %s4
  %s7 = scalar_select 0, %s6, %s4
  // Predicated region
  $region2: #{detector_forward.20} parent=0 // pred_check
    _
  $region3: #{detector_forward.20} parent=0 // pred_check_branch
    %9 = sbr.rel (0) target = $region5
  $region4: #{detector_forward.20} parent=0 // pred_region
    _
  $region5: #{detector_forward.20} parent=0 // pred_fallthru
    _
  // Predicated region
  $region6: #{detector_forward.20} parent=0 // pred_check
    _
  $region7: #{detector_forward.20} parent=0 // pred_check_branch
    %11 = sbr.rel (0) target = $region9
  $region8: #{detector_forward.20} parent=0 // pred_region
    _
  $region9: #{detector_forward.20} parent=0 // pred_fallthru
    _
  // Predicated region
  $region10: #{detector_forward.20} parent=0 // pred_check
    _
  $region11: #{detector_forward.20} parent=0 // pred_check_branch
    %13 = sbr.rel (0) target = $region13
  $region12: #{detector_forward.20} parent=0 // pred_region
    _
  $region13: #{detector_forward.20} parent=0 // pred_fallthru
    _
  %p15 = scmp.eq.s32.totalorder 0, 0
  // Predicated region
  $region14: #{detector_forward.20} parent=0 // pred_check
    %p16 = pneg %p15
  $region15: #{detector_forward.20} parent=0 // pred_check_branch
    %18 = sbr.rel (%p16) target = $region17
  $region16: #{detector_forward.20} parent=0 // pred_region
    %19 = vst [vmem:[#allocation2] sm:$0xff] 0.0
    %20 = vst [vmem:[#allocation2 + $0x8] sm:$0xff] 0.0
    %21 = vst [vmem:[#allocation2 + $0x10] sm:$0xff] 0.0
    %22 = vst [vmem:[#allocation2 + $0x18] sm:$0xff] 0.0
    %23 = vst [vmem:[#allocation2 + $0x20] sm:$0xff] 0.0
    %24 = vst [vmem:[#allocation2 + $0x28] sm:$0xff] 0.0
    %25 = vst [vmem:[#allocation2 + $0x30] sm:$0xff] 0.0
    %26 = vst [vmem:[#allocation2 + $0x38] sm:$0xff] 0.0
    %27 = vst [vmem:[#allocation2 + $0x40] sm:$0xff] 0.0
    %28 = vst [vmem:[#allocation2 + $0x48] sm:$0xff] 0.0
    %29 = vst [vmem:[#allocation2 + $0x50] sm:$0xff] 0.0
    %30 = vst [vmem:[#allocation2 + $0x58] sm:$0xff] 0.0
    %31 = vst [vmem:[#allocation2 + $0x60] sm:$0xff] 0.0
    %32 = vst [vmem:[#allocation2 + $0x68] sm:$0xff] 0.0
    %33 = vst [vmem:[#allocation2 + $0x70] sm:$0xff] 0.0
    %34 = vst [vmem:[#allocation2 + $0x78] sm:$0xff] 0.0
  $region17: #{detector_forward.20} parent=0 // pred_fallthru
    _
  %v35 = vld [vmem:[#allocation2] sm:$0xff]
  %v36 = vld [vmem:[#allocation2 + $0x8] sm:$0xff]
  %v37 = vld [vmem:[#allocation2 + $0x10] sm:$0xff]
  %v38 = vld [vmem:[#allocation2 + $0x18] sm:$0xff]
  %v39 = vld [vmem:[#allocation2 + $0x20] sm:$0xff]
  %v40 = vld [vmem:[#allocation2 + $0x28] sm:$0xff]
  %v41 = vld [vmem:[#allocation2 + $0x30] sm:$0xff]
  %v42 = vld [vmem:[#allocation2 + $0x38] sm:$0xff]
  %v43 = vld [vmem:[#allocation2 + $0x40] sm:$0xff]
  %v44 = vld [vmem:[#allocation2 + $0x48] sm:$0xff]
  %v45 = vld [vmem:[#allocation2 + $0x50] sm:$0xff]
  %v46 = vld [vmem:[#allocation2 + $0x58] sm:$0xff]
  %v47 = vld [vmem:[#allocation2 + $0x60] sm:$0xff]
  %v48 = vld [vmem:[#allocation2 + $0x68] sm:$0xff]
  %v49 = vld [vmem:[#allocation2 + $0x70] sm:$0xff]
  %v50 = vld [vmem:[#allocation2 + $0x78] sm:$0xff]
  %v51 = vld [vmem:[%s0] sm:$0xf]
  %v52 = vld [vmem:[%s0 + $0x4] sm:$0xf]
  %v53 = vld [vmem:[%s0 + $0x8] sm:$0xf]
  %v54 = vld [vmem:[%s0 + $0xc] sm:$0xf]
  %v55 = vld [vmem:[%s0 + $0x10] sm:$0xf]
  %v56 = vld [vmem:[%s0 + $0x14] sm:$0xf]
  %v57 = vld [vmem:[%s0 + $0x18] sm:$0xf]
  %v58 = vld [vmem:[%s0 + $0x1c] sm:$0xf]
  %v59 = vld [vmem:[%s0 + $0x20] sm:$0xf]
  %v60 = vld [vmem:[%s0 + $0x24] sm:$0xf]
  %v61 = vld [vmem:[%s0 + $0x28] sm:$0xf]
  %v62 = vld [vmem:[%s0 + $0x2c] sm:$0xf]
  %v63 = vld [vmem:[%s0 + $0x30] sm:$0xf]
  %v64 = vld [vmem:[%s0 + $0x34] sm:$0xf]
  %v65 = vld [vmem:[%s0 + $0x38] sm:$0xf]
  %v66 = vld [vmem:[%s0 + $0x3c] sm:$0xf]
  %v67 = vld [vmem:[%s1] sm:$0xf]
  %v68 = vld [vmem:[%s1 + $0x4] sm:$0xf]
  %v69 = vld [vmem:[%s1 + $0x8] sm:$0xf]
  %v70 = vld [vmem:[%s1 + $0xc] sm:$0xf]
  %v71 = vld [vmem:[%s1 + $0x10] sm:$0xf]
  %v72 = vld [vmem:[%s1 + $0x14] sm:$0xf]
  %v73 = vld [vmem:[%s1 + $0x18] sm:$0xf]
  %v74 = vld [vmem:[%s1 + $0x1c] sm:$0xf]
  %v75 = vld [vmem:[%s1 + $0x20] sm:$0xf]
  %v76 = vld [vmem:[%s1 + $0x24] sm:$0xf]
  %v77 = vld [vmem:[%s1 + $0x28] sm:$0xf]
  %v78 = vld [vmem:[%s1 + $0x2c] sm:$0xf]
  %v79 = vld [vmem:[%s1 + $0x30] sm:$0xf]
  %v80 = vld [vmem:[%s1 + $0x34] sm:$0xf]
  %v81 = vld [vmem:[%s1 + $0x38] sm:$0xf]
  %v82 = vld [vmem:[%s1 + $0x3c] sm:$0xf]
  %v99 = vunpack.c.l.b16 %v51
  %v100 = vunpack.c.l.b16 %v52
  %v101 = vunpack.c.l.b16 %v53
  %v102 = vunpack.c.l.b16 %v54
  %v103 = vunpack.c.l.b16 %v55
  %v104 = vunpack.c.l.b16 %v56
  %v105 = vunpack.c.l.b16 %v57
  %v106 = vunpack.c.l.b16 %v58
  %v107 = vunpack.c.l.b16 %v59
  %v108 = vunpack.c.l.b16 %v60
  %v109 = vunpack.c.l.b16 %v61
  %v110 = vunpack.c.l.b16 %v62
  %v111 = vunpack.c.l.b16 %v63
  %v112 = vunpack.c.l.b16 %v64
  %v113 = vunpack.c.l.b16 %v65
  %v114 = vunpack.c.l.b16 %v66
  %v115 = vpack.c.b16 %v100, %v99
  %v116 = vpack.c.b16 %v102, %v101
  %v117 = vpack.c.b16 %v104, %v103
  %v118 = vpack.c.b16 %v106, %v105
  %v119 = vpack.c.b16 %v108, %v107
  %v120 = vpack.c.b16 %v110, %v109
  %v121 = vpack.c.b16 %v112, %v111
  %v122 = vpack.c.b16 %v114, %v113
  %v147 = vunpack.c.l.b16 %v67
  %v148 = vunpack.c.l.b16 %v68
  %v149 = vunpack.c.l.b16 %v69
  %v150 = vunpack.c.l.b16 %v70
  %v151 = vunpack.c.l.b16 %v71
  %v152 = vunpack.c.l.b16 %v72
  %v153 = vunpack.c.l.b16 %v73
  %v154 = vunpack.c.l.b16 %v74
  %v155 = vunpack.c.l.b16 %v75
  %v156 = vunpack.c.l.b16 %v76
  %v157 = vunpack.c.l.b16 %v77
  %v158 = vunpack.c.l.b16 %v78
  %v159 = vunpack.c.l.b16 %v79
  %v160 = vunpack.c.l.b16 %v80
  %v161 = vunpack.c.l.b16 %v81
  %v162 = vunpack.c.l.b16 %v82
  %v163 = vpack.c.b16 %v148, %v147
  %v164 = vpack.c.b16 %v150, %v149
  %v165 = vpack.c.b16 %v152, %v151
  %v166 = vpack.c.b16 %v154, %v153
  %v167 = vpack.c.b16 %v156, %v155
  %v168 = vpack.c.b16 %v158, %v157
  %v169 = vpack.c.b16 %v160, %v159
  %v170 = vpack.c.b16 %v162, %v161
  %179 = vmatprep.subr.bf16.mxu0 0
  %180 = vmatpush1.bf16.msra.mxu0 %v170
  %181 = vmatprep.subr.bf16.mxu0 0
  %182 = vmatpush1.bf16.msra.mxu0 %v169
  %183 = vmatprep.subr.bf16.mxu0 0
  %184 = vmatpush1.bf16.msra.mxu0 %v168
  %185 = vmatprep.subr.bf16.mxu0 0
  %186 = vmatpush1.bf16.msra.mxu0 %v167
  %187 = vmatprep.subr.bf16.mxu0 0
  %188 = vmatpush1.bf16.msra.mxu0 %v166
  %189 = vmatprep.subr.bf16.mxu0 0
  %190 = vmatpush1.bf16.msra.mxu0 %v165
  %191 = vmatprep.subr.bf16.mxu0 0
  %192 = vmatpush1.bf16.msra.mxu0 %v164
  %193 = vmatprep.subr.bf16.mxu0 0
  %194 = vmatpush1.bf16.msra.mxu0 %v163
  %195 = vmatprep.subr.bf16.mxu0 0
  %196 = vmatpush2.bf16.msra.mxu0 0
  %197 = vmatprep.subr.bf16.mxu0 0
  %198 = vmatpush2.bf16.msra.mxu0 0
  %199 = vmatprep.subr.bf16.mxu0 0
  %200 = vmatpush2.bf16.msra.mxu0 0
  %201 = vmatprep.subr.bf16.mxu0 0
  %202 = vmatpush2.bf16.msra.mxu0 0
  %203 = vmatprep.subr.bf16.mxu0 0
  %204 = vmatpush2.bf16.msra.mxu0 0
  %205 = vmatprep.subr.bf16.mxu0 0
  %206 = vmatpush2.bf16.msra.mxu0 0
  %207 = vmatprep.subr.bf16.mxu0 0
  %208 = vmatpush2.bf16.msra.mxu0 0
  %209 = vmatprep.subr.bf16.mxu0 0
  %210 = vmatpush2.bf16.msra.mxu0 0
  %211 = vmatprep.mubr.bf16.mxu0 0
  %212 = vmatmul.mubr.bf16.gmra.mxu0 %v115
  %v213 = vpop.f32.mrf.mxu0
  %v214 = vadd.f32 0.0, %v213
  %v215 = vpop.f32.mrf.mxu0
  %v216 = vpop.f32.mrf.mxu0
  %v217 = vadd.f32 0.0, %v216
  %v218 = vpop.f32.mrf.mxu0
  %219 = vmatprep.mubr.bf16.mxu0 0
  %220 = vmatmul.mubr.bf16.gmra.mxu0 %v116
  %v221 = vpop.f32.mrf.mxu0
  %v222 = vadd.f32 0.0, %v221
  %v223 = vpop.f32.mrf.mxu0
  %v224 = vpop.f32.mrf.mxu0
  %v225 = vadd.f32 0.0, %v224
  %v226 = vpop.f32.mrf.mxu0
  %227 = vmatprep.mubr.bf16.mxu0 0
  %228 = vmatmul.mubr.bf16.gmra.mxu0 %v117
  %v229 = vpop.f32.mrf.mxu0
  %v230 = vadd.f32 0.0, %v229
  %v231 = vpop.f32.mrf.mxu0
  %v232 = vpop.f32.mrf.mxu0
  %v233 = vadd.f32 0.0, %v232
  %v234 = vpop.f32.mrf.mxu0
  %235 = vmatprep.mubr.bf16.mxu0 0
  %236 = vmatmul.mubr.bf16.gmra.mxu0 %v118
  %v237 = vpop.f32.mrf.mxu0
  %v238 = vadd.f32 0.0, %v237
  %v239 = vpop.f32.mrf.mxu0
  %v240 = vpop.f32.mrf.mxu0
  %v241 = vadd.f32 0.0, %v240
  %v242 = vpop.f32.mrf.mxu0
  %243 = vmatprep.mubr.bf16.mxu0 0
  %244 = vmatmul.mubr.bf16.gmra.mxu0 %v119
  %v245 = vpop.f32.mrf.mxu0
  %v246 = vadd.f32 0.0, %v245
  %v247 = vpop.f32.mrf.mxu0
  %v248 = vpop.f32.mrf.mxu0
  %v249 = vadd.f32 0.0, %v248
  %v250 = vpop.f32.mrf.mxu0
  %251 = vmatprep.mubr.bf16.mxu0 0
  %252 = vmatmul.mubr.bf16.gmra.mxu0 %v120
  %v253 = vpop.f32.mrf.mxu0
  %v254 = vadd.f32 0.0, %v253
  %v255 = vpop.f32.mrf.mxu0
  %v256 = vpop.f32.mrf.mxu0
  %v257 = vadd.f32 0.0, %v256
  %v258 = vpop.f32.mrf.mxu0
  %259 = vmatprep.mubr.bf16.mxu0 0
  %260 = vmatmul.mubr.bf16.gmra.mxu0 %v121
  %v261 = vpop.f32.mrf.mxu0
  %v262 = vadd.f32 0.0, %v261
  %v263 = vpop.f32.mrf.mxu0
  %v264 = vpop.f32.mrf.mxu0
  %v265 = vadd.f32 0.0, %v264
  %v266 = vpop.f32.mrf.mxu0
  %267 = vmatprep.mubr.bf16.mxu0 0
  %268 = vmatmul.mubr.bf16.gmra.mxu0 %v122
  %v269 = vpop.f32.mrf.mxu0
  %v270 = vadd.f32 0.0, %v269
  %v271 = vpop.f32.mrf.mxu0
  %v272 = vpop.f32.mrf.mxu0
  %v273 = vadd.f32 0.0, %v272
  %v274 = vpop.f32.mrf.mxu0
  %275 = vdwg.mxu0
  %v276 = vadd.f32 %v35, %v214
  %v277 = vadd.f32 %v36, %v217
  %v278 = vadd.f32 %v37, %v222
  %v279 = vadd.f32 %v38, %v225
  %v280 = vadd.f32 %v39, %v230
  %v281 = vadd.f32 %v40, %v233
  %v282 = vadd.f32 %v41, %v238
  %v283 = vadd.f32 %v42, %v241
  %v284 = vadd.f32 %v43, %v246
  %v285 = vadd.f32 %v44, %v249
  %v286 = vadd.f32 %v45, %v254
  %v287 = vadd.f32 %v46, %v257
  %v288 = vadd.f32 %v47, %v262
  %v289 = vadd.f32 %v48, %v265
  %v290 = vadd.f32 %v49, %v270
  %v291 = vadd.f32 %v50, %v273
  %292 = vst [vmem:[#allocation2] sm:$0xff] %v276
  %293 = vst [vmem:[#allocation2 + $0x8] sm:$0xff] %v277
  %294 = vst [vmem:[#allocation2 + $0x10] sm:$0xff] %v278
  %295 = vst [vmem:[#allocation2 + $0x18] sm:$0xff] %v279
  %296 = vst [vmem:[#allocation2 + $0x20] sm:$0xff] %v280
  %297 = vst [vmem:[#allocation2 + $0x28] sm:$0xff] %v281
  %298 = vst [vmem:[#allocation2 + $0x30] sm:$0xff] %v282
  %299 = vst [vmem:[#allocation2 + $0x38] sm:$0xff] %v283
  %300 = vst [vmem:[#allocation2 + $0x40] sm:$0xff] %v284
  %301 = vst [vmem:[#allocation2 + $0x48] sm:$0xff] %v285
  %302 = vst [vmem:[#allocation2 + $0x50] sm:$0xff] %v286
  %303 = vst [vmem:[#allocation2 + $0x58] sm:$0xff] %v287
  %304 = vst [vmem:[#allocation2 + $0x60] sm:$0xff] %v288
  %305 = vst [vmem:[#allocation2 + $0x68] sm:$0xff] %v289
  %306 = vst [vmem:[#allocation2 + $0x70] sm:$0xff] %v290
  %307 = vst [vmem:[#allocation2 + $0x78] sm:$0xff] %v291
  // Predicated region
  $region18: #{detector_forward.20} parent=0 // pred_check
    %p308 = pneg %p15
  $region19: #{detector_forward.20} parent=0 // pred_check_branch
    %310 = sbr.rel (%p308) target = $region21
  $region20: #{detector_forward.20} parent=0 // pred_region
    %v311 = vld [vmem:[#allocation2] sm:$0xff]
    %v312 = vld [vmem:[#allocation2 + $0x8] sm:$0xff]
    %v313 = vld [vmem:[#allocation2 + $0x10] sm:$0xff]
    %v314 = vld [vmem:[#allocation2 + $0x18] sm:$0xff]
    %v315 = vld [vmem:[#allocation2 + $0x20] sm:$0xff]
    %v316 = vld [vmem:[#allocation2 + $0x28] sm:$0xff]
    %v317 = vld [vmem:[#allocation2 + $0x30] sm:$0xff]
    %v318 = vld [vmem:[#allocation2 + $0x38] sm:$0xff]
    %v319 = vld [vmem:[#allocation2 + $0x40] sm:$0xff]
    %v320 = vld [vmem:[#allocation2 + $0x48] sm:$0xff]
    %v321 = vld [vmem:[#allocation2 + $0x50] sm:$0xff]
    %v322 = vld [vmem:[#allocation2 + $0x58] sm:$0xff]
    %v323 = vld [vmem:[#allocation2 + $0x60] sm:$0xff]
    %v324 = vld [vmem:[#allocation2 + $0x68] sm:$0xff]
    %v325 = vld [vmem:[#allocation2 + $0x70] sm:$0xff]
    %v326 = vld [vmem:[#allocation2 + $0x78] sm:$0xff]
    %v327 = vld [vmem:[%s2] sm:$0x1]
    %v329 = vlaneseq
    %v330 = vshrl.u32 %v329, 7
    %v331 = vsub.s32 0, %v330
    %v332 = vrot.slane %v327, %v331
    %v334 = vadd.f32 %v311, %v332
    %v335 = vadd.f32 %v312, %v332
    %v336 = vadd.f32 %v313, %v332
    %v337 = vadd.f32 %v314, %v332
    %v338 = vadd.f32 %v315, %v332
    %v339 = vadd.f32 %v316, %v332
    %v340 = vadd.f32 %v317, %v332
    %v341 = vadd.f32 %v318, %v332
    %v342 = vadd.f32 %v319, %v332
    %v343 = vadd.f32 %v320, %v332
    %v344 = vadd.f32 %v321, %v332
    %v345 = vadd.f32 %v322, %v332
    %v346 = vadd.f32 %v323, %v332
    %v347 = vadd.f32 %v324, %v332
    %v348 = vadd.f32 %v325, %v332
    %v349 = vadd.f32 %v326, %v332
    %v350 = vmax.f32 %v334, 0.0
    %v351 = vmax.f32 %v335, 0.0
    %v352 = vmax.f32 %v336, 0.0
    %v353 = vmax.f32 %v337, 0.0
    %v354 = vmax.f32 %v338, 0.0
    %v355 = vmax.f32 %v339, 0.0
    %v356 = vmax.f32 %v340, 0.0
    %v357 = vmax.f32 %v341, 0.0
    %v358 = vmax.f32 %v342, 0.0
    %v359 = vmax.f32 %v343, 0.0
    %v360 = vmax.f32 %v344, 0.0
    %v361 = vmax.f32 %v345, 0.0
    %v362 = vmax.f32 %v346, 0.0
    %v363 = vmax.f32 %v347, 0.0
    %v364 = vmax.f32 %v348, 0.0
    %v365 = vmax.f32 %v349, 0.0
    %366 = vst [vmem:[%s3] sm:$0xff] %v350
    %367 = vst [vmem:[%s3 + $0x8] sm:$0xff] %v351
    %368 = vst [vmem:[%s3 + $0x10] sm:$0xff] %v352
    %369 = vst [vmem:[%s3 + $0x18] sm:$0xff] %v353
    %370 = vst [vmem:[%s3 + $0x20] sm:$0xff] %v354
    %371 = vst [vmem:[%s3 + $0x28] sm:$0xff] %v355
    %372 = vst [vmem:[%s3 + $0x30] sm:$0xff] %v356
    %373 = vst [vmem:[%s3 + $0x38] sm:$0xff] %v357
    %374 = vst [vmem:[%s3 + $0x40] sm:$0xff] %v358
    %375 = vst [vmem:[%s3 + $0x48] sm:$0xff] %v359
    %376 = vst [vmem:[%s3 + $0x50] sm:$0xff] %v360
    %377 = vst [vmem:[%s3 + $0x58] sm:$0xff] %v361
    %378 = vst [vmem:[%s3 + $0x60] sm:$0xff] %v362
    %379 = vst [vmem:[%s3 + $0x68] sm:$0xff] %v363
    %380 = vst [vmem:[%s3 + $0x70] sm:$0xff] %v364
    %381 = vst [vmem:[%s3 + $0x78] sm:$0xff] %v365
  $region21: #{detector_forward.20} parent=0 // pred_fallthru
    _
  // Predicated region
  $region22: #{detector_forward.20} parent=0 // pred_check
    _
  $region23: #{detector_forward.20} parent=0 // pred_check_branch
    %383 = sbr.rel (0) target = $region25
  $region24: #{detector_forward.20} parent=0 // pred_region
    _
  $region25: #{detector_forward.20} parent=0 // pred_fallthru
    _
  // Predicated region
  $region26: #{detector_forward.20} parent=0 // pred_check
    _
  $region27: #{detector_forward.20} parent=0 // pred_check_branch
    %385 = sbr.rel (0) target = $region29
  $region28: #{detector_forward.20} parent=0 // pred_region
    _
  $region29: #{detector_forward.20} parent=0 // pred_fallthru
    _

// kernel: detector_forward.19
$region0: #{detector_forward.19}
  #allocation0 [shape = 'u32[]', space=smem, size = 0x4, offset = 0x4, fixed_abs, tag = 'smem constant byte address 0x4 - core index']
  #allocation1 [shape = 'u32[144,128]{1,0:T(1,128)}', space=vmem, size = 0x12000, scoped, tag = 'internal scratch']
  #allocation2 [shape = 'f32[128,128]{1,0:T(8,128)}', space=vmem, size = 0x10000, scoped, tag = 'scratch operand']
  %s0 = inlined_call_operand.vmem [shape: bf16[128,224], index: 0, kind: input, shape index: {}]
  %s1 = inlined_call_operand.vmem [shape: bf16[224,128], index: 1, kind: input, shape index: {}]
  %s2 = inlined_call_operand.vmem [shape: f32[1,128], index: 2, kind: input, shape index: {}]
  %s3 = inlined_call_operand.vmem [shape: f32[128,128], index: 3, kind: output, shape index: {}]
  %s4 = sld [smem:[#allocation0]]
  $region30: #{detector_forward.19} parent=0
    _
  %s6 = ssub.s32 1, %s4
  %s7 = scalar_select 0, %s6, %s4
  // Predicated region
  $region2: #{detector_forward.19} parent=0 // pred_check
    _
  $region3: #{detector_forward.19} parent=0 // pred_check_branch
    %9 = sbr.rel (0) target = $region5
  $region4: #{detector_forward.19} parent=0 // pred_region
    _
  $region5: #{detector_forward.19} parent=0 // pred_fallthru
    _
  // Predicated region
  $region6: #{detector_forward.19} parent=0 // pred_check
    _
  $region7: #{detector_forward.19} parent=0 // pred_check_branch
    %11 = sbr.rel (0) target = $region9
  $region8: #{detector_forward.19} parent=0 // pred_region
    _
  $region9: #{detector_forward.19} parent=0 // pred_fallthru
    _
  // Predicated region
  $region10: #{detector_forward.19} parent=0 // pred_check
    _
  $region11: #{detector_forward.19} parent=0 // pred_check_branch
    %13 = sbr.rel (0) target = $region13
  $region12: #{detector_forward.19} parent=0 // pred_region
    _
  $region13: #{detector_forward.19} parent=0 // pred_fallthru
    _
  %p15 = scmp.eq.s32.totalorder 0, 0
  // Predicated region
  $region14: #{detector_forward.19} parent=0 // pred_check
    %p16 = pneg %p15
  $region15: #{detector_forward.19} parent=0 // pred_check_branch
    %18 = sbr.rel (%p16) target = $region17
  $region16: #{detector_forward.19} parent=0 // pred_region
    %19 = vst [vmem:[#allocation2] sm:$0xff] 0.0
    %20 = vst [vmem:[#allocation2 + $0x8] sm:$0xff] 0.0
    %21 = vst [vmem:[#allocation2 + $0x10] sm:$0xff] 0.0
    %22 = vst [vmem:[#allocation2 + $0x18] sm:$0xff] 0.0
    %23 = vst [vmem:[#allocation2 + $0x20] sm:$0xff] 0.0
    %24 = vst [vmem:[#allocation2 + $0x28] sm:$0xff] 0.0
    %25 = vst [vmem:[#allocation2 + $0x30] sm:$0xff] 0.0
    %26 = vst [vmem:[#allocation2 + $0x38] sm:$0xff] 0.0
    %27 = vst [vmem:[#allocation2 + $0x40] sm:$0xff] 0.0
    %28 = vst [vmem:[#allocation2 + $0x48] sm:$0xff] 0.0
    %29 = vst [vmem:[#allocation2 + $0x50] sm:$0xff] 0.0
    %30 = vst [vmem:[#allocation2 + $0x58] sm:$0xff] 0.0
    %31 = vst [vmem:[#allocation2 + $0x60] sm:$0xff] 0.0
    %32 = vst [vmem:[#allocation2 + $0x68] sm:$0xff] 0.0
    %33 = vst [vmem:[#allocation2 + $0x70] sm:$0xff] 0.0
    %34 = vst [vmem:[#allocation2 + $0x78] sm:$0xff] 0.0
  $region17: #{detector_forward.19} parent=0 // pred_fallthru
    _
  %v35 = vld [vmem:[#allocation2] sm:$0xff]
  %v36 = vld [vmem:[#allocation2 + $0x8] sm:$0xff]
  %v37 = vld [vmem:[#allocation2 + $0x10] sm:$0xff]
  %v38 = vld [vmem:[#allocation2 + $0x18] sm:$0xff]
  %v39 = vld [vmem:[#allocation2 + $0x20] sm:$0xff]
  %v40 = vld [vmem:[#allocation2 + $0x28] sm:$0xff]
  %v41 = vld [vmem:[#allocation2 + $0x30] sm:$0xff]
  %v42 = vld [vmem:[#allocation2 + $0x38] sm:$0xff]
  %v43 = vld [vmem:[#allocation2 + $0x40] sm:$0xff]
  %v44 = vld [vmem:[#allocation2 + $0x48] sm:$0xff]
  %v45 = vld [vmem:[#allocation2 + $0x50] sm:$0xff]
  %v46 = vld [vmem:[#allocation2 + $0x58] sm:$0xff]
  %v47 = vld [vmem:[#allocation2 + $0x60] sm:$0xff]
  %v48 = vld [vmem:[#allocation2 + $0x68] sm:$0xff]
  %v49 = vld [vmem:[#allocation2 + $0x70] sm:$0xff]
  %v50 = vld [vmem:[#allocation2 + $0x78] sm:$0xff]
  %v51 = vld [vmem:[%s0] sm:$0xff]
  %v52 = vld [vmem:[%s0 + $0x8] sm:$0xff]
  %v53 = vld [vmem:[%s0 + $0x10] sm:$0xff]
  %v54 = vld [vmem:[%s0 + $0x18] sm:$0xff]
  %v55 = vld [vmem:[%s0 + $0x20] sm:$0xff]
  %v56 = vld [vmem:[%s0 + $0x28] sm:$0xff]
  %v57 = vld [vmem:[%s0 + $0x30] sm:$0xff]
  %v58 = vld [vmem:[%s0 + $0x38] sm:$0xff]
  %v59 = vld [vmem:[%s0 + $0x40] sm:$0xff]
  %v60 = vld [vmem:[%s0 + $0x48] sm:$0xff]
  %v61 = vld [vmem:[%s0 + $0x50] sm:$0xff]
  %v62 = vld [vmem:[%s0 + $0x58] sm:$0xff]
  %v63 = vld [vmem:[%s0 + $0x60] sm:$0xff]
  %v64 = vld [vmem:[%s0 + $0x68] sm:$0xff]
  %v65 = vld [vmem:[%s0 + $0x70] sm:$0xff]
  %v66 = vld [vmem:[%s0 + $0x78] sm:$0xff]
  %v67 = vld [vmem:[%s1] sm:$0xf]
  %v68 = vld [vmem:[%s1 + $0x4] sm:$0xf]
  %v69 = vld [vmem:[%s1 + $0x8] sm:$0xf]
  %v70 = vld [vmem:[%s1 + $0xc] sm:$0xf]
  %v71 = vld [vmem:[%s1 + $0x10] sm:$0xf]
  %v72 = vld [vmem:[%s1 + $0x14] sm:$0xf]
  %v73 = vld [vmem:[%s1 + $0x18] sm:$0xf]
  %v74 = vld [vmem:[%s1 + $0x1c] sm:$0xf]
  %v75 = vld [vmem:[%s1 + $0x20] sm:$0xf]
  %v76 = vld [vmem:[%s1 + $0x24] sm:$0xf]
  %v77 = vld [vmem:[%s1 + $0x28] sm:$0xf]
  %v78 = vld [vmem:[%s1 + $0x2c] sm:$0xf]
  %v79 = vld [vmem:[%s1 + $0x30] sm:$0xf]
  %v80 = vld [vmem:[%s1 + $0x34] sm:$0xf]
  %v81 = vld [vmem:[%s1 + $0x38] sm:$0xf]
  %v82 = vld [vmem:[%s1 + $0x3c] sm:$0xf]
  %v83 = vld [vmem:[%s1 + $0x40] sm:$0xf]
  %v84 = vld [vmem:[%s1 + $0x44] sm:$0xf]
  %v85 = vld [vmem:[%s1 + $0x48] sm:$0xf]
  %v86 = vld [vmem:[%s1 + $0x4c] sm:$0xf]
  %v87 = vld [vmem:[%s1 + $0x50] sm:$0xf]
  %v88 = vld [vmem:[%s1 + $0x54] sm:$0xf]
  %v89 = vld [vmem:[%s1 + $0x58] sm:$0xf]
  %v90 = vld [vmem:[%s1 + $0x5c] sm:$0xf]
  %v91 = vld [vmem:[%s1 + $0x60] sm:$0xf]
  %v92 = vld [vmem:[%s1 + $0x64] sm:$0xf]
  %v93 = vld [vmem:[%s1 + $0x68] sm:$0xf]
  %v94 = vld [vmem:[%s1 + $0x6c] sm:$0xf]
  %v111 = vunpack.c.l.b16 %v51
  %v112 = vunpack.c.h.b16 %v51
  %v113 = vunpack.c.l.b16 %v52
  %v114 = vunpack.c.h.b16 %v52
  %v115 = vunpack.c.l.b16 %v53
  %v116 = vunpack.c.h.b16 %v53
  %v117 = vunpack.c.l.b16 %v54
  %v118 = vunpack.c.h.b16 %v54
  %v119 = vunpack.c.l.b16 %v55
  %v120 = vunpack.c.h.b16 %v55
  %v121 = vunpack.c.l.b16 %v56
  %v122 = vunpack.c.h.b16 %v56
  %v123 = vunpack.c.l.b16 %v57
  %v124 = vunpack.c.h.b16 %v57
  %v125 = vunpack.c.l.b16 %v58
  %v126 = vunpack.c.h.b16 %v58
  %v127 = vunpack.c.l.b16 %v59
  %v128 = vunpack.c.h.b16 %v59
  %v129 = vunpack.c.l.b16 %v60
  %v130 = vunpack.c.h.b16 %v60
  %v131 = vunpack.c.l.b16 %v61
  %v132 = vunpack.c.h.b16 %v61
  %v133 = vunpack.c.l.b16 %v62
  %v134 = vunpack.c.h.b16 %v62
  %v135 = vunpack.c.l.b16 %v63
  %v136 = vunpack.c.h.b16 %v63
  %v137 = vunpack.c.l.b16 %v64
  %v138 = vunpack.c.h.b16 %v64
  %v139 = vunpack.c.l.b16 %v65
  %v140 = vunpack.c.h.b16 %v65
  %v141 = vunpack.c.l.b16 %v66
  %v142 = vunpack.c.h.b16 %v66
  %v143 = vpack.c.b16 %v113, %v111
  %v144 = vpack.c.b16 %v114, %v112
  %v145 = vpack.c.b16 %v117, %v115
  %v146 = vpack.c.b16 %v118, %v116
  %v147 = vpack.c.b16 %v121, %v119
  %v148 = vpack.c.b16 %v122, %v120
  %v149 = vpack.c.b16 %v125, %v123
  %v150 = vpack.c.b16 %v126, %v124
  %v151 = vpack.c.b16 %v129, %v127
  %v152 = vpack.c.b16 %v130, %v128
  %v153 = vpack.c.b16 %v133, %v131
  %v154 = vpack.c.b16 %v134, %v132
  %v155 = vpack.c.b16 %v137, %v135
  %v156 = vpack.c.b16 %v138, %v136
  %v157 = vpack.c.b16 %v141, %v139
  %v158 = vpack.c.b16 %v142, %v140
  %v195 = vunpack.c.l.b16 %v67
  %v196 = vunpack.c.l.b16 %v68
  %v197 = vunpack.c.l.b16 %v69
  %v198 = vunpack.c.l.b16 %v70
  %v199 = vunpack.c.l.b16 %v71
  %v200 = vunpack.c.l.b16 %v72
  %v201 = vunpack.c.l.b16 %v73
  %v202 = vunpack.c.l.b16 %v74
  %v203 = vunpack.c.l.b16 %v75
  %v204 = vunpack.c.l.b16 %v76
  %v205 = vunpack.c.l.b16 %v77
  %v206 = vunpack.c.l.b16 %v78
  %v207 = vunpack.c.l.b16 %v79
  %v208 = vunpack.c.l.b16 %v80
  %v209 = vunpack.c.l.b16 %v81
  %v210 = vunpack.c.l.b16 %v82
  %v211 = vunpack.c.l.b16 %v83
  %v212 = vunpack.c.l.b16 %v84
  %v213 = vunpack.c.l.b16 %v85
  %v214 = vunpack.c.l.b16 %v86
  %v215 = vunpack.c.l.b16 %v87
  %v216 = vunpack.c.l.b16 %v88
  %v217 = vunpack.c.l.b16 %v89
  %v218 = vunpack.c.l.b16 %v90
  %v219 = vunpack.c.l.b16 %v91
  %v220 = vunpack.c.l.b16 %v92
  %v221 = vunpack.c.l.b16 %v93
  %v222 = vunpack.c.l.b16 %v94
  %v223 = vpack.c.b16 %v196, %v195
  %v224 = vpack.c.b16 %v198, %v197
  %v225 = vpack.c.b16 %v200, %v199
  %v226 = vpack.c.b16 %v202, %v201
  %v227 = vpack.c.b16 %v204, %v203
  %v228 = vpack.c.b16 %v206, %v205
  %v229 = vpack.c.b16 %v208, %v207
  %v230 = vpack.c.b16 %v210, %v209
  %v231 = vpack.c.b16 %v212, %v211
  %v232 = vpack.c.b16 %v214, %v213
  %v233 = vpack.c.b16 %v216, %v215
  %v234 = vpack.c.b16 %v218, %v217
  %v235 = vpack.c.b16 %v220, %v219
  %v236 = vpack.c.b16 %v222, %v221
  %vm251 = vcmask 785408
  %v253 = vsel %vm251, %v144, 0
  %v256 = vsel %vm251, %v146, 0
  %v259 = vsel %vm251, %v148, 0
  %v262 = vsel %vm251, %v150, 0
  %v265 = vsel %vm251, %v152, 0
  %v268 = vsel %vm251, %v154, 0
  %v271 = vsel %vm251, %v156, 0
  %v274 = vsel %vm251, %v158, 0
  %276 = vmatprep.subr.bf16.mxu0 0
  %277 = vmatpush1.bf16.msra.mxu0 %v230
  %278 = vmatprep.subr.bf16.mxu0 0
  %279 = vmatpush1.bf16.msra.mxu0 %v229
  %280 = vmatprep.subr.bf16.mxu0 0
  %281 = vmatpush1.bf16.msra.mxu0 %v228
  %282 = vmatprep.subr.bf16.mxu0 0
  %283 = vmatpush1.bf16.msra.mxu0 %v227
  %284 = vmatprep.subr.bf16.mxu0 0
  %285 = vmatpush1.bf16.msra.mxu0 %v226
  %286 = vmatprep.subr.bf16.mxu0 0
  %287 = vmatpush1.bf16.msra.mxu0 %v225
  %288 = vmatprep.subr.bf16.mxu0 0
  %289 = vmatpush1.bf16.msra.mxu0 %v224
  %290 = vmatprep.subr.bf16.mxu0 0
  %291 = vmatpush1.bf16.msra.mxu0 %v223
  %292 = vmatprep.subr.bf16.mxu0 0
  %293 = vmatpush2.bf16.msra.mxu0 0
  %294 = vmatprep.subr.bf16.mxu0 0
  %295 = vmatpush2.bf16.msra.mxu0 0
  %296 = vmatprep.subr.bf16.mxu0 0
  %297 = vmatpush2.bf16.msra.mxu0 %v236
  %298 = vmatprep.subr.bf16.mxu0 0
  %299 = vmatpush2.bf16.msra.mxu0 %v235
  %300 = vmatprep.subr.bf16.mxu0 0
  %301 = vmatpush2.bf16.msra.mxu0 %v234
  %302 = vmatprep.subr.bf16.mxu0 0
  %303 = vmatpush2.bf16.msra.mxu0 %v233
  %304 = vmatprep.subr.bf16.mxu0 0
  %305 = vmatpush2.bf16.msra.mxu0 %v232
  %306 = vmatprep.subr.bf16.mxu0 0
  %307 = vmatpush2.bf16.msra.mxu0 %v231
  %308 = vmatprep.mubr.bf16.mxu0 %v253
  %309 = vmatmul.mubr.bf16.gmra.mxu0 %v143
  %v310 = vpop.f32.mrf.mxu0
  %v311 = vadd.f32 0.0, %v310
  %v312 = vpop.f32.mrf.mxu0
  %v313 = vpop.f32.mrf.mxu0
  %v314 = vadd.f32 0.0, %v313
  %v315 = vpop.f32.mrf.mxu0
  %316 = vmatprep.mubr.bf16.mxu0 %v256
  %317 = vmatmul.mubr.bf16.gmra.mxu0 %v145
  %v318 = vpop.f32.mrf.mxu0
  %v319 = vadd.f32 0.0, %v318
  %v320 = vpop.f32.mrf.mxu0
  %v321 = vpop.f32.mrf.mxu0
  %v322 = vadd.f32 0.0, %v321
  %v323 = vpop.f32.mrf.mxu0
  %324 = vmatprep.mubr.bf16.mxu0 %v259
  %325 = vmatmul.mubr.bf16.gmra.mxu0 %v147
  %v326 = vpop.f32.mrf.mxu0
  %v327 = vadd.f32 0.0, %v326
  %v328 = vpop.f32.mrf.mxu0
  %v329 = vpop.f32.mrf.mxu0
  %v330 = vadd.f32 0.0, %v329
  %v331 = vpop.f32.mrf.mxu0
  %332 = vmatprep.mubr.bf16.mxu0 %v262
  %333 = vmatmul.mubr.bf16.gmra.mxu0 %v149
  %v334 = vpop.f32.mrf.mxu0
  %v335 = vadd.f32 0.0, %v334
  %v336 = vpop.f32.mrf.mxu0
  %v337 = vpop.f32.mrf.mxu0
  %v338 = vadd.f32 0.0, %v337
  %v339 = vpop.f32.mrf.mxu0
  %340 = vmatprep.mubr.bf16.mxu0 %v265
  %341 = vmatmul.mubr.bf16.gmra.mxu0 %v151
  %v342 = vpop.f32.mrf.mxu0
  %v343 = vadd.f32 0.0, %v342
  %v344 = vpop.f32.mrf.mxu0
  %v345 = vpop.f32.mrf.mxu0
  %v346 = vadd.f32 0.0, %v345
  %v347 = vpop.f32.mrf.mxu0
  %348 = vmatprep.mubr.bf16.mxu0 %v268
  %349 = vmatmul.mubr.bf16.gmra.mxu0 %v153
  %v350 = vpop.f32.mrf.mxu0
  %v351 = vadd.f32 0.0, %v350
  %v352 = vpop.f32.mrf.mxu0
  %v353 = vpop.f32.mrf.mxu0
  %v354 = vadd.f32 0.0, %v353
  %v355 = vpop.f32.mrf.mxu0
  %356 = vmatprep.mubr.bf16.mxu0 %v271
  %357 = vmatmul.mubr.bf16.gmra.mxu0 %v155
  %v358 = vpop.f32.mrf.mxu0
  %v359 = vadd.f32 0.0, %v358
  %v360 = vpop.f32.mrf.mxu0
  %v361 = vpop.f32.mrf.mxu0
  %v362 = vadd.f32 0.0, %v361
  %v363 = vpop.f32.mrf.mxu0
  %364 = vmatprep.mubr.bf16.mxu0 %v274
  %365 = vmatmul.mubr.bf16.gmra.mxu0 %v157
  %v366 = vpop.f32.mrf.mxu0
  %v367 = vadd.f32 0.0, %v366
  %v368 = vpop.f32.mrf.mxu0
  %v369 = vpop.f32.mrf.mxu0
  %v370 = vadd.f32 0.0, %v369
  %v371 = vpop.f32.mrf.mxu0
  %372 = vdwg.mxu0
  %v373 = vadd.f32 %v35, %v311
  %v374 = vadd.f32 %v36, %v314
  %v375 = vadd.f32 %v37, %v319
  %v376 = vadd.f32 %v38, %v322
  %v377 = vadd.f32 %v39, %v327
  %v378 = vadd.f32 %v40, %v330
  %v379 = vadd.f32 %v41, %v335
  %v380 = vadd.f32 %v42, %v338
  %v381 = vadd.f32 %v43, %v343
  %v382 = vadd.f32 %v44, %v346
  %v383 = vadd.f32 %v45, %v351
  %v384 = vadd.f32 %v46, %v354
  %v385 = vadd.f32 %v47, %v359
  %v386 = vadd.f32 %v48, %v362
  %v387 = vadd.f32 %v49, %v367
  %v388 = vadd.f32 %v50, %v370
  %389 = vst [vmem:[#allocation2] sm:$0xff] %v373
  %390 = vst [vmem:[#allocation2 + $0x8] sm:$0xff] %v374
  %391 = vst [vmem:[#allocation2 + $0x10] sm:$0xff] %v375
  %392 = vst [vmem:[#allocation2 + $0x18] sm:$0xff] %v376
  %393 = vst [vmem:[#allocation2 + $0x20] sm:$0xff] %v377
  %394 = vst [vmem:[#allocation2 + $0x28] sm:$0xff] %v378
  %395 = vst [vmem:[#allocation2 + $0x30] sm:$0xff] %v379
  %396 = vst [vmem:[#allocation2 + $0x38] sm:$0xff] %v380
  %397 = vst [vmem:[#allocation2 + $0x40] sm:$0xff] %v381
  %398 = vst [vmem:[#allocation2 + $0x48] sm:$0xff] %v382
  %399 = vst [vmem:[#allocation2 + $0x50] sm:$0xff] %v383
  %400 = vst [vmem:[#allocation2 + $0x58] sm:$0xff] %v384
  %401 = vst [vmem:[#allocation2 + $0x60] sm:$0xff] %v385
  %402 = vst [vmem:[#allocation2 + $0x68] sm:$0xff] %v386
  %403 = vst [vmem:[#allocation2 + $0x70] sm:$0xff] %v387
  %404 = vst [vmem:[#allocation2 + $0x78] sm:$0xff] %v388
  // Predicated region
  $region18: #{detector_forward.19} parent=0 // pred_check
    %p405 = pneg %p15
  $region19: #{detector_forward.19} parent=0 // pred_check_branch
    %407 = sbr.rel (%p405) target = $region21
  $region20: #{detector_forward.19} parent=0 // pred_region
    %v408 = vld [vmem:[#allocation2] sm:$0xff]
    %v409 = vld [vmem:[#allocation2 + $0x8] sm:$0xff]
    %v410 = vld [vmem:[#allocation2 + $0x10] sm:$0xff]
    %v411 = vld [vmem:[#allocation2 + $0x18] sm:$0xff]
    %v412 = vld [vmem:[#allocation2 + $0x20] sm:$0xff]
    %v413 = vld [vmem:[#allocation2 + $0x28] sm:$0xff]
    %v414 = vld [vmem:[#allocation2 + $0x30] sm:$0xff]
    %v415 = vld [vmem:[#allocation2 + $0x38] sm:$0xff]
    %v416 = vld [vmem:[#allocation2 + $0x40] sm:$0xff]
    %v417 = vld [vmem:[#allocation2 + $0x48] sm:$0xff]
    %v418 = vld [vmem:[#allocation2 + $0x50] sm:$0xff]
    %v419 = vld [vmem:[#allocation2 + $0x58] sm:$0xff]
    %v420 = vld [vmem:[#allocation2 + $0x60] sm:$0xff]
    %v421 = vld [vmem:[#allocation2 + $0x68] sm:$0xff]
    %v422 = vld [vmem:[#allocation2 + $0x70] sm:$0xff]
    %v423 = vld [vmem:[#allocation2 + $0x78] sm:$0xff]
    %v424 = vld [vmem:[%s2] sm:$0x1]
    %v426 = vlaneseq
    %v427 = vshrl.u32 %v426, 7
    %v428 = vsub.s32 0, %v427
    %v429 = vrot.slane %v424, %v428
    %v431 = vadd.f32 %v408, %v429
    %v432 = vadd.f32 %v409, %v429
    %v433 = vadd.f32 %v410, %v429
    %v434 = vadd.f32 %v411, %v429
    %v435 = vadd.f32 %v412, %v429
    %v436 = vadd.f32 %v413, %v429
    %v437 = vadd.f32 %v414, %v429
    %v438 = vadd.f32 %v415, %v429
    %v439 = vadd.f32 %v416, %v429
    %v440 = vadd.f32 %v417, %v429
    %v441 = vadd.f32 %v418, %v429
    %v442 = vadd.f32 %v419, %v429
    %v443 = vadd.f32 %v420, %v429
    %v444 = vadd.f32 %v421, %v429
    %v445 = vadd.f32 %v422, %v429
    %v446 = vadd.f32 %v423, %v429
    %v447 = vmax.f32 %v431, 0.0
    %v448 = vmax.f32 %v432, 0.0
    %v449 = vmax.f32 %v433, 0.0
    %v450 = vmax.f32 %v434, 0.0
    %v451 = vmax.f32 %v435, 0.0
    %v452 = vmax.f32 %v436, 0.0
    %v453 = vmax.f32 %v437, 0.0
    %v454 = vmax.f32 %v438, 0.0
    %v455 = vmax.f32 %v439, 0.0
    %v456 = vmax.f32 %v440, 0.0
    %v457 = vmax.f32 %v441, 0.0
    %v458 = vmax.f32 %v442, 0.0
    %v459 = vmax.f32 %v443, 0.0
    %v460 = vmax.f32 %v444, 0.0
    %v461 = vmax.f32 %v445, 0.0
    %v462 = vmax.f32 %v446, 0.0
    %463 = vst [vmem:[%s3] sm:$0xff] %v447
    %464 = vst [vmem:[%s3 + $0x8] sm:$0xff] %v448
    %465 = vst [vmem:[%s3 + $0x10] sm:$0xff] %v449
    %466 = vst [vmem:[%s3 + $0x18] sm:$0xff] %v450
    %467 = vst [vmem:[%s3 + $0x20] sm:$0xff] %v451
    %468 = vst [vmem:[%s3 + $0x28] sm:$0xff] %v452
    %469 = vst [vmem:[%s3 + $0x30] sm:$0xff] %v453
    %470 = vst [vmem:[%s3 + $0x38] sm:$0xff] %v454
    %471 = vst [vmem:[%s3 + $0x40] sm:$0xff] %v455
    %472 = vst [vmem:[%s3 + $0x48] sm:$0xff] %v456
    %473 = vst [vmem:[%s3 + $0x50] sm:$0xff] %v457
    %474 = vst [vmem:[%s3 + $0x58] sm:$0xff] %v458
    %475 = vst [vmem:[%s3 + $0x60] sm:$0xff] %v459
    %476 = vst [vmem:[%s3 + $0x68] sm:$0xff] %v460
    %477 = vst [vmem:[%s3 + $0x70] sm:$0xff] %v461
    %478 = vst [vmem:[%s3 + $0x78] sm:$0xff] %v462
  $region21: #{detector_forward.19} parent=0 // pred_fallthru
    _
  // Predicated region
  $region22: #{detector_forward.19} parent=0 // pred_check
    _
  $region23: #{detector_forward.19} parent=0 // pred_check_branch
    %480 = sbr.rel (0) target = $region25
  $region24: #{detector_forward.19} parent=0 // pred_region
    _
  $region25: #{detector_forward.19} parent=0 // pred_fallthru
    _
  // Predicated region
  $region26: #{detector_forward.19} parent=0 // pred_check
    _
  $region27: #{detector_forward.19} parent=0 // pred_check_branch
    %482 = sbr.rel (0) target = $region29
  $region28: #{detector_forward.19} parent=0 // pred_region
    _
  $region29: #{detector_forward.19} parent=0 // pred_fallthru
    _

// kernel: detector_forward.21
$region0: #{detector_forward.21}
  #allocation0 [shape = 'u32[]', space=smem, size = 0x4, offset = 0x4, fixed_abs, tag = 'smem constant byte address 0x4 - core index']
  #allocation1 [shape = 'u32[144,128]{1,0:T(1,128)}', space=vmem, size = 0x12000, scoped, tag = 'internal scratch']
  #allocation2 [shape = 'f32[128,256]{1,0:T(8,128)}', space=vmem, size = 0x20000, scoped, tag = 'scratch operand']
  %s0 = inlined_call_operand.vmem [shape: bf16[128,64], index: 0, kind: input, shape index: {}]
  %s1 = inlined_call_operand.vmem [shape: bf16[64,256], index: 1, kind: input, shape index: {}]
  %s2 = inlined_call_operand.vmem [shape: f32[1,256], index: 2, kind: input, shape index: {}]
  %s3 = inlined_call_operand.vmem [shape: f32[128,256], index: 3, kind: output, shape index: {}]
  %s4 = sld [smem:[#allocation0]]
  $region30: #{detector_forward.21} parent=0
    _
  %s6 = ssub.s32 1, %s4
  %s7 = scalar_select 0, %s6, %s4
  // Predicated region
  $region2: #{detector_forward.21} parent=0 // pred_check
    _
  $region3: #{detector_forward.21} parent=0 // pred_check_branch
    %9 = sbr.rel (0) target = $region5
  $region4: #{detector_forward.21} parent=0 // pred_region
    _
  $region5: #{detector_forward.21} parent=0 // pred_fallthru
    _
  // Predicated region
  $region6: #{detector_forward.21} parent=0 // pred_check
    _
  $region7: #{detector_forward.21} parent=0 // pred_check_branch
    %11 = sbr.rel (0) target = $region9
  $region8: #{detector_forward.21} parent=0 // pred_region
    _
  $region9: #{detector_forward.21} parent=0 // pred_fallthru
    _
  // Predicated region
  $region10: #{detector_forward.21} parent=0 // pred_check
    _
  $region11: #{detector_forward.21} parent=0 // pred_check_branch
    %13 = sbr.rel (0) target = $region13
  $region12: #{detector_forward.21} parent=0 // pred_region
    _
  $region13: #{detector_forward.21} parent=0 // pred_fallthru
    _
  %p15 = scmp.eq.s32.totalorder 0, 0
  // Predicated region
  $region14: #{detector_forward.21} parent=0 // pred_check
    %p16 = pneg %p15
  $region15: #{detector_forward.21} parent=0 // pred_check_branch
    %18 = sbr.rel (%p16) target = $region17
  $region16: #{detector_forward.21} parent=0 // pred_region
    %19 = vst [vmem:[#allocation2] sm:$0xff] 0.0
    %20 = vst [vmem:[#allocation2 + $0x8] sm:$0xff] 0.0
    %21 = vst [vmem:[#allocation2 + $0x10] sm:$0xff] 0.0
    %22 = vst [vmem:[#allocation2 + $0x18] sm:$0xff] 0.0
    %23 = vst [vmem:[#allocation2 + $0x20] sm:$0xff] 0.0
    %24 = vst [vmem:[#allocation2 + $0x28] sm:$0xff] 0.0
    %25 = vst [vmem:[#allocation2 + $0x30] sm:$0xff] 0.0
    %26 = vst [vmem:[#allocation2 + $0x38] sm:$0xff] 0.0
    %27 = vst [vmem:[#allocation2 + $0x40] sm:$0xff] 0.0
    %28 = vst [vmem:[#allocation2 + $0x48] sm:$0xff] 0.0
    %29 = vst [vmem:[#allocation2 + $0x50] sm:$0xff] 0.0
    %30 = vst [vmem:[#allocation2 + $0x58] sm:$0xff] 0.0
    %31 = vst [vmem:[#allocation2 + $0x60] sm:$0xff] 0.0
    %32 = vst [vmem:[#allocation2 + $0x68] sm:$0xff] 0.0
    %33 = vst [vmem:[#allocation2 + $0x70] sm:$0xff] 0.0
    %34 = vst [vmem:[#allocation2 + $0x78] sm:$0xff] 0.0
    %35 = vst [vmem:[#allocation2 + $0x80] sm:$0xff] 0.0
    %36 = vst [vmem:[#allocation2 + $0x88] sm:$0xff] 0.0
    %37 = vst [vmem:[#allocation2 + $0x90] sm:$0xff] 0.0
    %38 = vst [vmem:[#allocation2 + $0x98] sm:$0xff] 0.0
    %39 = vst [vmem:[#allocation2 + $0xa0] sm:$0xff] 0.0
    %40 = vst [vmem:[#allocation2 + $0xa8] sm:$0xff] 0.0
    %41 = vst [vmem:[#allocation2 + $0xb0] sm:$0xff] 0.0
    %42 = vst [vmem:[#allocation2 + $0xb8] sm:$0xff] 0.0
    %43 = vst [vmem:[#allocation2 + $0xc0] sm:$0xff] 0.0
    %44 = vst [vmem:[#allocation2 + $0xc8] sm:$0xff] 0.0
    %45 = vst [vmem:[#allocation2 + $0xd0] sm:$0xff] 0.0
    %46 = vst [vmem:[#allocation2 + $0xd8] sm:$0xff] 0.0
    %47 = vst [vmem:[#allocation2 + $0xe0] sm:$0xff] 0.0
    %48 = vst [vmem:[#allocation2 + $0xe8] sm:$0xff] 0.0
    %49 = vst [vmem:[#allocation2 + $0xf0] sm:$0xff] 0.0
    %50 = vst [vmem:[#allocation2 + $0xf8] sm:$0xff] 0.0
  $region17: #{detector_forward.21} parent=0 // pred_fallthru
    _
  %v51 = vld [vmem:[#allocation2] sm:$0xff]
  %v52 = vld [vmem:[#allocation2 + $0x8] sm:$0xff]
  %v53 = vld [vmem:[#allocation2 + $0x10] sm:$0xff]
  %v54 = vld [vmem:[#allocation2 + $0x18] sm:$0xff]
  %v55 = vld [vmem:[#allocation2 + $0x20] sm:$0xff]
  %v56 = vld [vmem:[#allocation2 + $0x28] sm:$0xff]
  %v57 = vld [vmem:[#allocation2 + $0x30] sm:$0xff]
  %v58 = vld [vmem:[#allocation2 + $0x38] sm:$0xff]
  %v59 = vld [vmem:[#allocation2 + $0x40] sm:$0xff]
  %v60 = vld [vmem:[#allocation2 + $0x48] sm:$0xff]
  %v61 = vld [vmem:[#allocation2 + $0x50] sm:$0xff]
  %v62 = vld [vmem:[#allocation2 + $0x58] sm:$0xff]
  %v63 = vld [vmem:[#allocation2 + $0x60] sm:$0xff]
  %v64 = vld [vmem:[#allocation2 + $0x68] sm:$0xff]
  %v65 = vld [vmem:[#allocation2 + $0x70] sm:$0xff]
  %v66 = vld [vmem:[#allocation2 + $0x78] sm:$0xff]
  %v67 = vld [vmem:[#allocation2 + $0x80] sm:$0xff]
  %v68 = vld [vmem:[#allocation2 + $0x88] sm:$0xff]
  %v69 = vld [vmem:[#allocation2 + $0x90] sm:$0xff]
  %v70 = vld [vmem:[#allocation2 + $0x98] sm:$0xff]
  %v71 = vld [vmem:[#allocation2 + $0xa0] sm:$0xff]
  %v72 = vld [vmem:[#allocation2 + $0xa8] sm:$0xff]
  %v73 = vld [vmem:[#allocation2 + $0xb0] sm:$0xff]
  %v74 = vld [vmem:[#allocation2 + $0xb8] sm:$0xff]
  %v75 = vld [vmem:[#allocation2 + $0xc0] sm:$0xff]
  %v76 = vld [vmem:[#allocation2 + $0xc8] sm:$0xff]
  %v77 = vld [vmem:[#allocation2 + $0xd0] sm:$0xff]
  %v78 = vld [vmem:[#allocation2 + $0xd8] sm:$0xff]
  %v79 = vld [vmem:[#allocation2 + $0xe0] sm:$0xff]
  %v80 = vld [vmem:[#allocation2 + $0xe8] sm:$0xff]
  %v81 = vld [vmem:[#allocation2 + $0xf0] sm:$0xff]
  %v82 = vld [vmem:[#allocation2 + $0xf8] sm:$0xff]
  %v83 = vld [vmem:[%s0] sm:$0xf]
  %v84 = vld [vmem:[%s0 + $0x4] sm:$0xf]
  %v85 = vld [vmem:[%s0 + $0x8] sm:$0xf]
  %v86 = vld [vmem:[%s0 + $0xc] sm:$0xf]
  %v87 = vld [vmem:[%s0 + $0x10] sm:$0xf]
  %v88 = vld [vmem:[%s0 + $0x14] sm:$0xf]
  %v89 = vld [vmem:[%s0 + $0x18] sm:$0xf]
  %v90 = vld [vmem:[%s0 + $0x1c] sm:$0xf]
  %v91 = vld [vmem:[%s0 + $0x20] sm:$0xf]
  %v92 = vld [vmem:[%s0 + $0x24] sm:$0xf]
  %v93 = vld [vmem:[%s0 + $0x28] sm:$0xf]
  %v94 = vld [vmem:[%s0 + $0x2c] sm:$0xf]
  %v95 = vld [vmem:[%s0 + $0x30] sm:$0xf]
  %v96 = vld [vmem:[%s0 + $0x34] sm:$0xf]
  %v97 = vld [vmem:[%s0 + $0x38] sm:$0xf]
  %v98 = vld [vmem:[%s0 + $0x3c] sm:$0xf]
  %v99 = vld [vmem:[%s1] sm:$0xff]
  %v100 = vld [vmem:[%s1 + $0x8] sm:$0xff]
  %v101 = vld [vmem:[%s1 + $0x10] sm:$0xff]
  %v102 = vld [vmem:[%s1 + $0x18] sm:$0xff]
  %v103 = vld [vmem:[%s1 + $0x20] sm:$0xff]
  %v104 = vld [vmem:[%s1 + $0x28] sm:$0xff]
  %v105 = vld [vmem:[%s1 + $0x30] sm:$0xff]
  %v106 = vld [vmem:[%s1 + $0x38] sm:$0xff]
  %v123 = vunpack.c.l.b16 %v83
  %v124 = vunpack.c.l.b16 %v84
  %v125 = vunpack.c.l.b16 %v85
  %v126 = vunpack.c.l.b16 %v86
  %v127 = vunpack.c.l.b16 %v87
  %v128 = vunpack.c.l.b16 %v88
  %v129 = vunpack.c.l.b16 %v89
  %v130 = vunpack.c.l.b16 %v90
  %v131 = vunpack.c.l.b16 %v91
  %v132 = vunpack.c.l.b16 %v92
  %v133 = vunpack.c.l.b16 %v93
  %v134 = vunpack.c.l.b16 %v94
  %v135 = vunpack.c.l.b16 %v95
  %v136 = vunpack.c.l.b16 %v96
  %v137 = vunpack.c.l.b16 %v97
  %v138 = vunpack.c.l.b16 %v98
  %v139 = vpack.c.b16 %v124, %v123
  %v140 = vpack.c.b16 %v126, %v125
  %v141 = vpack.c.b16 %v128, %v127
  %v142 = vpack.c.b16 %v130, %v129
  %v143 = vpack.c.b16 %v132, %v131
  %v144 = vpack.c.b16 %v134, %v133
  %v145 = vpack.c.b16 %v136, %v135
  %v146 = vpack.c.b16 %v138, %v137
  %v155 = vunpack.c.l.b16 %v99
  %v156 = vunpack.c.h.b16 %v99
  %v157 = vunpack.c.l.b16 %v100
  %v158 = vunpack.c.h.b16 %v100
  %v159 = vunpack.c.l.b16 %v101
  %v160 = vunpack.c.h.b16 %v101
  %v161 = vunpack.c.l.b16 %v102
  %v162 = vunpack.c.h.b16 %v102
  %v163 = vunpack.c.l.b16 %v103
  %v164 = vunpack.c.h.b16 %v103
  %v165 = vunpack.c.l.b16 %v104
  %v166 = vunpack.c.h.b16 %v104
  %v167 = vunpack.c.l.b16 %v105
  %v168 = vunpack.c.h.b16 %v105
  %v169 = vunpack.c.l.b16 %v106
  %v170 = vunpack.c.h.b16 %v106
  %v171 = vpack.c.b16 %v157, %v155
  %v172 = vpack.c.b16 %v158, %v156
  %v173 = vpack.c.b16 %v161, %v159
  %v174 = vpack.c.b16 %v162, %v160
  %v175 = vpack.c.b16 %v165, %v163
  %v176 = vpack.c.b16 %v166, %v164
  %v177 = vpack.c.b16 %v169, %v167
  %v178 = vpack.c.b16 %v170, %v168
  %vm187 = vcmask 523264
  %v189 = vsel %vm187, %v139, 0
  %v192 = vsel %vm187, %v140, 0
  %v195 = vsel %vm187, %v141, 0
  %v198 = vsel %vm187, %v142, 0
  %v201 = vsel %vm187, %v143, 0
  %v204 = vsel %vm187, %v144, 0
  %v207 = vsel %vm187, %v145, 0
  %v210 = vsel %vm187, %v146, 0
  %212 = vmatprep.subr.bf16.mxu0 0
  %213 = vmatpush1.bf16.msra.mxu0 0
  %214 = vmatprep.subr.bf16.mxu0 0
  %215 = vmatpush1.bf16.msra.mxu0 0
  %216 = vmatprep.subr.bf16.mxu0 0
  %217 = vmatpush1.bf16.msra.mxu0 0
  %218 = vmatprep.subr.bf16.mxu0 0
  %219 = vmatpush1.bf16.msra.mxu0 0
  %220 = vmatprep.subr.bf16.mxu0 %v178
  %221 = vmatpush1.bf16.msra.mxu0 %v177
  %222 = vmatprep.subr.bf16.mxu0 %v176
  %223 = vmatpush1.bf16.msra.mxu0 %v175
  %224 = vmatprep.subr.bf16.mxu0 %v174
  %225 = vmatpush1.bf16.msra.mxu0 %v173
  %226 = vmatprep.subr.bf16.mxu0 %v172
  %227 = vmatpush1.bf16.msra.mxu0 %v171
  %228 = vmatprep.subr.bf16.mxu0 0
  %229 = vmatpush2.bf16.msra.mxu0 0
  %230 = vmatprep.subr.bf16.mxu0 0
  %231 = vmatpush2.bf16.msra.mxu0 0
  %232 = vmatprep.subr.bf16.mxu0 0
  %233 = vmatpush2.bf16.msra.mxu0 0
  %234 = vmatprep.subr.bf16.mxu0 0
  %235 = vmatpush2.bf16.msra.mxu0 0
  %236 = vmatprep.subr.bf16.mxu0 0
  %237 = vmatpush2.bf16.msra.mxu0 0
  %238 = vmatprep.subr.bf16.mxu0 0
  %239 = vmatpush2.bf16.msra.mxu0 0
  %240 = vmatprep.subr.bf16.mxu0 0
  %241 = vmatpush2.bf16.msra.mxu0 0
  %242 = vmatprep.subr.bf16.mxu0 0
  %243 = vmatpush2.bf16.msra.mxu0 0
  %244 = vmatprep.mubr.bf16.mxu0 0
  %245 = vmatmul.mubr.bf16.gmra.mxu0 %v189
  %v246 = vpop.f32.mrf.mxu0
  %v247 = vadd.f32 0.0, %v246
  %v248 = vpop.f32.mrf.mxu0
  %v249 = vadd.f32 0.0, %v248
  %v250 = vpop.f32.mrf.mxu0
  %v251 = vadd.f32 0.0, %v250
  %v252 = vpop.f32.mrf.mxu0
  %v253 = vadd.f32 0.0, %v252
  %254 = vmatprep.mubr.bf16.mxu0 0
  %255 = vmatmul.mubr.bf16.gmra.mxu0 %v192
  %v256 = vpop.f32.mrf.mxu0
  %v257 = vadd.f32 0.0, %v256
  %v258 = vpop.f32.mrf.mxu0
  %v259 = vadd.f32 0.0, %v258
  %v260 = vpop.f32.mrf.mxu0
  %v261 = vadd.f32 0.0, %v260
  %v262 = vpop.f32.mrf.mxu0
  %v263 = vadd.f32 0.0, %v262
  %264 = vmatprep.mubr.bf16.mxu0 0
  %265 = vmatmul.mubr.bf16.gmra.mxu0 %v195
  %v266 = vpop.f32.mrf.mxu0
  %v267 = vadd.f32 0.0, %v266
  %v268 = vpop.f32.mrf.mxu0
  %v269 = vadd.f32 0.0, %v268
  %v270 = vpop.f32.mrf.mxu0
  %v271 = vadd.f32 0.0, %v270
  %v272 = vpop.f32.mrf.mxu0
  %v273 = vadd.f32 0.0, %v272
  %274 = vmatprep.mubr.bf16.mxu0 0
  %275 = vmatmul.mubr.bf16.gmra.mxu0 %v198
  %v276 = vpop.f32.mrf.mxu0
  %v277 = vadd.f32 0.0, %v276
  %v278 = vpop.f32.mrf.mxu0
  %v279 = vadd.f32 0.0, %v278
  %v280 = vpop.f32.mrf.mxu0
  %v281 = vadd.f32 0.0, %v280
  %v282 = vpop.f32.mrf.mxu0
  %v283 = vadd.f32 0.0, %v282
  %284 = vmatprep.mubr.bf16.mxu0 0
  %285 = vmatmul.mubr.bf16.gmra.mxu0 %v201
  %v286 = vpop.f32.mrf.mxu0
  %v287 = vadd.f32 0.0, %v286
  %v288 = vpop.f32.mrf.mxu0
  %v289 = vadd.f32 0.0, %v288
  %v290 = vpop.f32.mrf.mxu0
  %v291 = vadd.f32 0.0, %v290
  %v292 = vpop.f32.mrf.mxu0
  %v293 = vadd.f32 0.0, %v292
  %294 = vmatprep.mubr.bf16.mxu0 0
  %295 = vmatmul.mubr.bf16.gmra.mxu0 %v204
  %v296 = vpop.f32.mrf.mxu0
  %v297 = vadd.f32 0.0, %v296
  %v298 = vpop.f32.mrf.mxu0
  %v299 = vadd.f32 0.0, %v298
  %v300 = vpop.f32.mrf.mxu0
  %v301 = vadd.f32 0.0, %v300
  %v302 = vpop.f32.mrf.mxu0
  %v303 = vadd.f32 0.0, %v302
  %304 = vmatprep.mubr.bf16.mxu0 0
  %305 = vmatmul.mubr.bf16.gmra.mxu0 %v207
  %v306 = vpop.f32.mrf.mxu0
  %v307 = vadd.f32 0.0, %v306
  %v308 = vpop.f32.mrf.mxu0
  %v309 = vadd.f32 0.0, %v308
  %v310 = vpop.f32.mrf.mxu0
  %v311 = vadd.f32 0.0, %v310
  %v312 = vpop.f32.mrf.mxu0
  %v313 = vadd.f32 0.0, %v312
  %314 = vmatprep.mubr.bf16.mxu0 0
  %315 = vmatmul.mubr.bf16.gmra.mxu0 %v210
  %v316 = vpop.f32.mrf.mxu0
  %v317 = vadd.f32 0.0, %v316
  %v318 = vpop.f32.mrf.mxu0
  %v319 = vadd.f32 0.0, %v318
  %v320 = vpop.f32.mrf.mxu0
  %v321 = vadd.f32 0.0, %v320
  %v322 = vpop.f32.mrf.mxu0
  %v323 = vadd.f32 0.0, %v322
  %324 = vdwg.mxu0
  %v325 = vadd.f32 %v51, %v247
  %v326 = vadd.f32 %v52, %v249
  %v327 = vadd.f32 %v53, %v251
  %v328 = vadd.f32 %v54, %v253
  %v329 = vadd.f32 %v55, %v257
  %v330 = vadd.f32 %v56, %v259
  %v331 = vadd.f32 %v57, %v261
  %v332 = vadd.f32 %v58, %v263
  %v333 = vadd.f32 %v59, %v267
  %v334 = vadd.f32 %v60, %v269
  %v335 = vadd.f32 %v61, %v271
  %v336 = vadd.f32 %v62, %v273
  %v337 = vadd.f32 %v63, %v277
  %v338 = vadd.f32 %v64, %v279
  %v339 = vadd.f32 %v65, %v281
  %v340 = vadd.f32 %v66, %v283
  %v341 = vadd.f32 %v67, %v287
  %v342 = vadd.f32 %v68, %v289
  %v343 = vadd.f32 %v69, %v291
  %v344 = vadd.f32 %v70, %v293
  %v345 = vadd.f32 %v71, %v297
  %v346 = vadd.f32 %v72, %v299
  %v347 = vadd.f32 %v73, %v301
  %v348 = vadd.f32 %v74, %v303
  %v349 = vadd.f32 %v75, %v307
  %v350 = vadd.f32 %v76, %v309
  %v351 = vadd.f32 %v77, %v311
  %v352 = vadd.f32 %v78, %v313
  %v353 = vadd.f32 %v79, %v317
  %v354 = vadd.f32 %v80, %v319
  %v355 = vadd.f32 %v81, %v321
  %v356 = vadd.f32 %v82, %v323
  %357 = vst [vmem:[#allocation2] sm:$0xff] %v325
  %358 = vst [vmem:[#allocation2 + $0x8] sm:$0xff] %v326
  %359 = vst [vmem:[#allocation2 + $0x10] sm:$0xff] %v327
  %360 = vst [vmem:[#allocation2 + $0x18] sm:$0xff] %v328
  %361 = vst [vmem:[#allocation2 + $0x20] sm:$0xff] %v329
  %362 = vst [vmem:[#allocation2 + $0x28] sm:$0xff] %v330
  %363 = vst [vmem:[#allocation2 + $0x30] sm:$0xff] %v331
  %364 = vst [vmem:[#allocation2 + $0x38] sm:$0xff] %v332
  %365 = vst [vmem:[#allocation2 + $0x40] sm:$0xff] %v333
  %366 = vst [vmem:[#allocation2 + $0x48] sm:$0xff] %v334
  %367 = vst [vmem:[#allocation2 + $0x50] sm:$0xff] %v335
  %368 = vst [vmem:[#allocation2 + $0x58] sm:$0xff] %v336
  %369 = vst [vmem:[#allocation2 + $0x60] sm:$0xff] %v337
  %370 = vst [vmem:[#allocation2 + $0x68] sm:$0xff] %v338
  %371 = vst [vmem:[#allocation2 + $0x70] sm:$0xff] %v339
  %372 = vst [vmem:[#allocation2 + $0x78] sm:$0xff] %v340
  %373 = vst [vmem:[#allocation2 + $0x80] sm:$0xff] %v341
  %374 = vst [vmem:[#allocation2 + $0x88] sm:$0xff] %v342
  %375 = vst [vmem:[#allocation2 + $0x90] sm:$0xff] %v343
  %376 = vst [vmem:[#allocation2 + $0x98] sm:$0xff] %v344
  %377 = vst [vmem:[#allocation2 + $0xa0] sm:$0xff] %v345
  %378 = vst [vmem:[#allocation2 + $0xa8] sm:$0xff] %v346
  %379 = vst [vmem:[#allocation2 + $0xb0] sm:$0xff] %v347
  %380 = vst [vmem:[#allocation2 + $0xb8] sm:$0xff] %v348
  %381 = vst [vmem:[#allocation2 + $0xc0] sm:$0xff] %v349
  %382 = vst [vmem:[#allocation2 + $0xc8] sm:$0xff] %v350
  %383 = vst [vmem:[#allocation2 + $0xd0] sm:$0xff] %v351
  %384 = vst [vmem:[#allocation2 + $0xd8] sm:$0xff] %v352
  %385 = vst [vmem:[#allocation2 + $0xe0] sm:$0xff] %v353
  %386 = vst [vmem:[#allocation2 + $0xe8] sm:$0xff] %v354
  %387 = vst [vmem:[#allocation2 + $0xf0] sm:$0xff] %v355
  %388 = vst [vmem:[#allocation2 + $0xf8] sm:$0xff] %v356
  // Predicated region
  $region18: #{detector_forward.21} parent=0 // pred_check
    %p389 = pneg %p15
  $region19: #{detector_forward.21} parent=0 // pred_check_branch
    %391 = sbr.rel (%p389) target = $region21
  $region20: #{detector_forward.21} parent=0 // pred_region
    %v392 = vld [vmem:[#allocation2] sm:$0xff]
    %v393 = vld [vmem:[#allocation2 + $0x8] sm:$0xff]
    %v394 = vld [vmem:[#allocation2 + $0x10] sm:$0xff]
    %v395 = vld [vmem:[#allocation2 + $0x18] sm:$0xff]
    %v396 = vld [vmem:[#allocation2 + $0x20] sm:$0xff]
    %v397 = vld [vmem:[#allocation2 + $0x28] sm:$0xff]
    %v398 = vld [vmem:[#allocation2 + $0x30] sm:$0xff]
    %v399 = vld [vmem:[#allocation2 + $0x38] sm:$0xff]
    %v400 = vld [vmem:[#allocation2 + $0x40] sm:$0xff]
    %v401 = vld [vmem:[#allocation2 + $0x48] sm:$0xff]
    %v402 = vld [vmem:[#allocation2 + $0x50] sm:$0xff]
    %v403 = vld [vmem:[#allocation2 + $0x58] sm:$0xff]
    %v404 = vld [vmem:[#allocation2 + $0x60] sm:$0xff]
    %v405 = vld [vmem:[#allocation2 + $0x68] sm:$0xff]
    %v406 = vld [vmem:[#allocation2 + $0x70] sm:$0xff]
    %v407 = vld [vmem:[#allocation2 + $0x78] sm:$0xff]
    %v408 = vld [vmem:[#allocation2 + $0x80] sm:$0xff]
    %v409 = vld [vmem:[#allocation2 + $0x88] sm:$0xff]
    %v410 = vld [vmem:[#allocation2 + $0x90] sm:$0xff]
    %v411 = vld [vmem:[#allocation2 + $0x98] sm:$0xff]
    %v412 = vld [vmem:[#allocation2 + $0xa0] sm:$0xff]
    %v413 = vld [vmem:[#allocation2 + $0xa8] sm:$0xff]
    %v414 = vld [vmem:[#allocation2 + $0xb0] sm:$0xff]
    %v415 = vld [vmem:[#allocation2 + $0xb8] sm:$0xff]
    %v416 = vld [vmem:[#allocation2 + $0xc0] sm:$0xff]
    %v417 = vld [vmem:[#allocation2 + $0xc8] sm:$0xff]
    %v418 = vld [vmem:[#allocation2 + $0xd0] sm:$0xff]
    %v419 = vld [vmem:[#allocation2 + $0xd8] sm:$0xff]
    %v420 = vld [vmem:[#allocation2 + $0xe0] sm:$0xff]
    %v421 = vld [vmem:[#allocation2 + $0xe8] sm:$0xff]
    %v422 = vld [vmem:[#allocation2 + $0xf0] sm:$0xff]
    %v423 = vld [vmem:[#allocation2 + $0xf8] sm:$0xff]
    %v424 = vld [vmem:[%s2] sm:$0x3]
    %v426 = vlaneseq
    %v427 = vshrl.u32 %v426, 7
    %v428 = vsub.s32 0, %v427
    %v429 = vrot.slane %v424, %v428
    %v430 = vlaneseq
    %v431 = vshrl.u32 %v430, 7
    %v432 = vsub.s32 1, %v431
    %v433 = vrot.slane %v424, %v432
    %v436 = vadd.f32 %v392, %v429
    %v437 = vadd.f32 %v393, %v433
    %v438 = vadd.f32 %v394, %v429
    %v439 = vadd.f32 %v395, %v433
    %v440 = vadd.f32 %v396, %v429
    %v441 = vadd.f32 %v397, %v433
    %v442 = vadd.f32 %v398, %v429
    %v443 = vadd.f32 %v399, %v433
    %v444 = vadd.f32 %v400, %v429
    %v445 = vadd.f32 %v401, %v433
    %v446 = vadd.f32 %v402, %v429
    %v447 = vadd.f32 %v403, %v433
    %v448 = vadd.f32 %v404, %v429
    %v449 = vadd.f32 %v405, %v433
    %v450 = vadd.f32 %v406, %v429
    %v451 = vadd.f32 %v407, %v433
    %v452 = vadd.f32 %v408, %v429
    %v453 = vadd.f32 %v409, %v433
    %v454 = vadd.f32 %v410, %v429
    %v455 = vadd.f32 %v411, %v433
    %v456 = vadd.f32 %v412, %v429
    %v457 = vadd.f32 %v413, %v433
    %v458 = vadd.f32 %v414, %v429
    %v459 = vadd.f32 %v415, %v433
    %v460 = vadd.f32 %v416, %v429
    %v461 = vadd.f32 %v417, %v433
    %v462 = vadd.f32 %v418, %v429
    %v463 = vadd.f32 %v419, %v433
    %v464 = vadd.f32 %v420, %v429
    %v465 = vadd.f32 %v421, %v433
    %v466 = vadd.f32 %v422, %v429
    %v467 = vadd.f32 %v423, %v433
    %468 = vst [vmem:[%s3] sm:$0xff] %v436
    %469 = vst [vmem:[%s3 + $0x8] sm:$0xff] %v437
    %470 = vst [vmem:[%s3 + $0x10] sm:$0xff] %v438
    %471 = vst [vmem:[%s3 + $0x18] sm:$0xff] %v439
    %472 = vst [vmem:[%s3 + $0x20] sm:$0xff] %v440
    %473 = vst [vmem:[%s3 + $0x28] sm:$0xff] %v441
    %474 = vst [vmem:[%s3 + $0x30] sm:$0xff] %v442
    %475 = vst [vmem:[%s3 + $0x38] sm:$0xff] %v443
    %476 = vst [vmem:[%s3 + $0x40] sm:$0xff] %v444
    %477 = vst [vmem:[%s3 + $0x48] sm:$0xff] %v445
    %478 = vst [vmem:[%s3 + $0x50] sm:$0xff] %v446
    %479 = vst [vmem:[%s3 + $0x58] sm:$0xff] %v447
    %480 = vst [vmem:[%s3 + $0x60] sm:$0xff] %v448
    %481 = vst [vmem:[%s3 + $0x68] sm:$0xff] %v449
    %482 = vst [vmem:[%s3 + $0x70] sm:$0xff] %v450
    %483 = vst [vmem:[%s3 + $0x78] sm:$0xff] %v451
    %484 = vst [vmem:[%s3 + $0x80] sm:$0xff] %v452
    %485 = vst [vmem:[%s3 + $0x88] sm:$0xff] %v453
    %486 = vst [vmem:[%s3 + $0x90] sm:$0xff] %v454
    %487 = vst [vmem:[%s3 + $0x98] sm:$0xff] %v455
    %488 = vst [vmem:[%s3 + $0xa0] sm:$0xff] %v456
    %489 = vst [vmem:[%s3 + $0xa8] sm:$0xff] %v457
    %490 = vst [vmem:[%s3 + $0xb0] sm:$0xff] %v458
    %491 = vst [vmem:[%s3 + $0xb8] sm:$0xff] %v459
    %492 = vst [vmem:[%s3 + $0xc0] sm:$0xff] %v460
    %493 = vst [vmem:[%s3 + $0xc8] sm:$0xff] %v461
    %494 = vst [vmem:[%s3 + $0xd0] sm:$0xff] %v462
    %495 = vst [vmem:[%s3 + $0xd8] sm:$0xff] %v463
    %496 = vst [vmem:[%s3 + $0xe0] sm:$0xff] %v464
    %497 = vst [vmem:[%s3 + $0xe8] sm:$0xff] %v465
    %498 = vst [vmem:[%s3 + $0xf0] sm:$0xff] %v466
    %499 = vst [vmem:[%s3 + $0xf8] sm:$0xff] %v467
  $region21: #{detector_forward.21} parent=0 // pred_fallthru
    _
  // Predicated region
  $region22: #{detector_forward.21} parent=0 // pred_check
    _
  $region23: #{detector_forward.21} parent=0 // pred_check_branch
    %501 = sbr.rel (0) target = $region25
  $region24: #{detector_forward.21} parent=0 // pred_region
    _
  $region25: #{detector_forward.21} parent=0 // pred_fallthru
    _
  // Predicated region
  $region26: #{detector_forward.21} parent=0 // pred_check
    _
  $region27: #{detector_forward.21} parent=0 // pred_check_branch
    %503 = sbr.rel (0) target = $region29
  $region28: #{detector_forward.21} parent=0 // pred_region
    _
  $region29: #{detector_forward.21} parent=0 // pred_fallthru
    _

// kernel: detector_forward.23
$region0: #{detector_forward.23}
  #allocation0 [shape = 'u32[]', space=smem, size = 0x4, offset = 0x4, fixed_abs, tag = 'smem constant byte address 0x4 - core index']
  #allocation1 [shape = 'u32[144,128]{1,0:T(1,128)}', space=vmem, size = 0x12000, scoped, tag = 'internal scratch']
  #allocation2 [shape = 'f32[2,32]{1,0:T(2,128)}', space=vmem, size = 0x400, scoped, tag = 'scratch operand']
  #allocation3 [shape = 'f32[2,32]{1,0:T(2,128)}', space=vmem, size = 0x400, scoped, tag = 'scratch operand']
  %s0 = inlined_call_operand.vmem [shape: f32[16,2,128], index: 0, kind: input, shape index: {}]
  %s1 = inlined_call_operand.vmem [shape: bf16[32,128], index: 1, kind: input, shape index: {}]
  %s2 = inlined_call_operand.vmem [shape: f32[1,128], index: 2, kind: input, shape index: {}]
  %s3 = inlined_call_operand.vmem [shape: f32[16,2,32], index: 3, kind: output, shape index: {}]
  %s4 = sld [smem:[#allocation0]]
  $region49: #{detector_forward.23} parent=0
    _
  %s6 = ssub.s32 1, %s4
  %s7 = scalar_select 0, %s6, %s4
  loop: start=0, step=1, limit=18
  $region2: #{detector_forward.23} parent=0 // loop_pre_header
    _
  $region3: #{detector_forward.23} parent=0 // loop_header
    %s9 = sphi 0, %s13
    %p10 = scmp.ge.s32.totalorder %s9, 18
    %s19 = sphi 0, %s21
    %s22 = sphi 0, %s19
    %s23 = sphi 0, %s22
    %s39 = sphi 0, %s23
    %s43 = sphi 0, %s43
    %s45 = sphi 0, %s43
    %s46 = sphi 0, %s45
    %s60 = sphi 0, %s46
    %s64 = sphi 0, %s64
    %s66 = sphi 0, %s64
    %s67 = sphi 0, %s66
    %s81 = sphi 0, %s67
    %s87 = sphi 0, %s89
    %s90 = sphi 0, %s87
    %s91 = sphi 0, %s90
    %s107 = sphi 0, %s91
  $region4: #{detector_forward.23} parent=0 // loop_header_branch
    %12 = sbr.rel (%p10) target = $region8
  $region5: #{detector_forward.23} parent=0 // loop_body
    %s14 = ssub.s32 %s9, 1
    %s15 = ssub.s32 %s9, 2
    %s16 = sadd.s32 %s9, 1
    %s17 = ssub.s32 %s9, %s16
    %p18 = scmp.eq.s32.totalorder %s17, 0
    %s20 = sadd.s32 %s19, 1
    %s21 = scalar_select %p18, %s19, %s20
    %p24 = pneg %p18
    %p25 = scmp.eq.s32.totalorder %s9, 15
    %p26 = por %p24, %p25
    %p27 = scmp.ne.s32.totalorder %s19, %s22
    %p28 = scmp.eq.s32.totalorder %s9, 0
    %p29 = por %p27, %p28
    %p30 = scmp.ne.s32.totalorder %s19, %s22
    %p31 = scmp.eq.s32.totalorder %s14, 15
    %p32 = por %p30, %p31
    %p33 = scmp.ne.s32.totalorder %s22, %s23
    %p34 = scmp.eq.s32.totalorder %s14, 0
    %p35 = por %p33, %p34
    %p36 = scmp.ne.s32.totalorder %s22, %s23
    %p37 = scmp.eq.s32.totalorder %s15, 15
    %p38 = por %p36, %p37
    %p40 = scmp.ne.s32.totalorder %s23, %s39
    %p41 = scmp.eq.s32.totalorder %s15, 0
    %p42 = por %p40, %p41
    %s44 = sadd.s32 %s43, 1
    %p47 = scmp.eq.s32.totalorder %s9, 15
    %p48 = scmp.ne.s32.totalorder %s43, %s45
    %p49 = scmp.eq.s32.totalorder %s9, 0
    %p50 = por %p48, %p49
    %p51 = scmp.ne.s32.totalorder %s43, %s45
    %p52 = scmp.eq.s32.totalorder %s14, 15
    %p53 = por %p51, %p52
    %p54 = scmp.ne.s32.totalorder %s45, %s46
    %p55 = scmp.eq.s32.totalorder %s14, 0
    %p56 = por %p54, %p55
    %p57 = scmp.ne.s32.totalorder %s45, %s46
    %p58 = scmp.eq.s32.totalorder %s15, 15
    %p59 = por %p57, %p58
    %p61 = scmp.ne.s32.totalorder %s46, %s60
    %p62 = scmp.eq.s32.totalorder %s15, 0
    %p63 = por %p61, %p62
    %s65 = sadd.s32 %s64, 1
    %p68 = scmp.eq.s32.totalorder %s9, 15
    %p69 = scmp.ne.s32.totalorder %s64, %s66
    %p70 = scmp.eq.s32.totalorder %s9, 0
    %p71 = por %p69, %p70
    %p72 = scmp.ne.s32.totalorder %s64, %s66
    %p73 = scmp.eq.s32.totalorder %s14, 15
    %p74 = por %p72, %p73
    %p75 = scmp.ne.s32.totalorder %s66, %s67
    %p76 = scmp.eq.s32.totalorder %s14, 0
    %p77 = por %p75, %p76
    %p78 = scmp.ne.s32.totalorder %s66, %s67
    %p79 = scmp.eq.s32.totalorder %s15, 15
    %p80 = por %p78, %p79
    %p82 = scmp.ne.s32.totalorder %s67, %s81
    %p83 = scmp.eq.s32.totalorder %s15, 0
    %p84 = por %p82, %p83
    %s85 = ssub.s32 %s9, %s16
    %p86 = scmp.eq.s32.totalorder %s85, 0
    %s88 = sadd.s32 %s87, 1
    %s89 = scalar_select %p86, %s87, %s88
    %p92 = pneg %p86
    %p93 = scmp.eq.s32.totalorder %s9, 15
    %p94 = por %p92, %p93
    %p95 = scmp.ne.s32.totalorder %s87, %s90
    %p96 = scmp.eq.s32.totalorder %s9, 0
    %p97 = por %p95, %p96
    %p98 = scmp.ne.s32.totalorder %s87, %s90
    %p99 = scmp.eq.s32.totalorder %s14, 15
    %p100 = por %p98, %p99
    %p101 = scmp.ne.s32.totalorder %s90, %s91
    %p102 = scmp.eq.s32.totalorder %s14, 0
    %p103 = por %p101, %p102
    %p104 = scmp.ne.s32.totalorder %s90, %s91
    %p105 = scmp.eq.s32.totalorder %s15, 15
    %p106 = por %p104, %p105
    %p108 = scmp.ne.s32.totalorder %s91, %s107
    %p109 = scmp.eq.s32.totalorder %s15, 0
    %p110 = por %p108, %p109
    %p111 = scmp.le.s32.totalorder 1, %s9
    %p112 = scmp.lt.s32.totalorder %s9, 17
    %p113 = pnand %p111, %p112
    %p114 = pneg %p113
    // Predicated region
    $region9: #{detector_forward.23} parent=5 // pred_check
      _
    $region10: #{detector_forward.23} parent=5 // pred_check_branch
      %116 = sbr.rel (%p113) target = $region12
    $region11: #{detector_forward.23} parent=5 // pred_region
      %s117 = ssub.s32 %s9, 1
      // Predicated region
      $region13: #{detector_forward.23} parent=11 // pred_check
        %p118 = pneg %p56
      $region14: #{detector_forward.23} parent=11 // pred_check_branch
        %120 = sbr.rel (%p118) target = $region16
      $region15: #{detector_forward.23} parent=11 // pred_region
        _
      $region16: #{detector_forward.23} parent=11 // pred_fallthru
        _
      // Predicated region
      $region17: #{detector_forward.23} parent=11 // pred_check
        %p121 = pneg %p77
      $region18: #{detector_forward.23} parent=11 // pred_check_branch
        %123 = sbr.rel (%p121) target = $region20
      $region19: #{detector_forward.23} parent=11 // pred_region
        _
      $region20: #{detector_forward.23} parent=11 // pred_fallthru
        _
    $region12: #{detector_forward.23} parent=5 // pred_fallthru
      _
    %p124 = scmp.lt.s32.totalorder %s9, 16
    // Predicated region
    $region21: #{detector_forward.23} parent=5 // pred_check
      %p125 = pneg %p124
    $region22: #{detector_forward.23} parent=5 // pred_check_branch
      %127 = sbr.rel (%p125) target = $region24
    $region23: #{detector_forward.23} parent=5 // pred_region
      // Predicated region
      $region25: #{detector_forward.23} parent=23 // pred_check
        %p128 = pneg %p29
      $region26: #{detector_forward.23} parent=23 // pred_check_branch
        %130 = sbr.rel (%p128) target = $region28
      $region27: #{detector_forward.23} parent=23 // pred_region
        %p131 = scmp.lt.s32.totalorder %s9, 15
        %s132 = scalar_select %p131, %s9, 15
        %s133 = smul.addr %s132, 2
        %s134 = scalar_lea.vmem %s0, %s133
      $region28: #{detector_forward.23} parent=23 // pred_fallthru
        _
    $region24: #{detector_forward.23} parent=5 // pred_fallthru
      _
    %p135 = scmp.le.s32.totalorder 1, %s9
    %p136 = scmp.lt.s32.totalorder %s9, 17
    %p137 = pnand %p135, %p136
    %p138 = pneg %p137
    // Predicated region
    $region29: #{detector_forward.23} parent=5 // pred_check
      _
    $region30: #{detector_forward.23} parent=5 // pred_check_branch
      %140 = sbr.rel (%p137) target = $region32
    $region31: #{detector_forward.23} parent=5 // pred_region
      %s141 = ssub.s32 %s9, 1
      %p142 = scmp.lt.s32.totalorder %s14, 15
      %s143 = scalar_select %p142, %s14, 15
      %s144 = smul.addr %s143, 2
      %s145 = scalar_lea.vmem %s0, %s144
      %p146 = pneg %p35
      %p147 = pneg %p32
      %p148 = pneg %p56
      %p149 = pneg %p53
      %p150 = pneg %p77
      %p151 = pneg %p74
      %p152 = pneg %p103
      %p153 = pneg %p100
      %p154 = scmp.lt.s32.totalorder %s14, 15
      %s155 = scalar_select %p154, %s14, 15
      %s156 = smul.addr %s155, 2
      %s157 = scalar_lea.vmem %s3, %s156
      %p158 = scmp.lt.s32.totalorder %s14, 15
      %s159 = scalar_select %p158, %s14, 15
      %s160 = smul.addr %s159, 2
      %s161 = scalar_lea.vmem %s0, %s160
      %p162 = scmp.lt.s32.totalorder %s14, 15
      %s163 = scalar_select %p162, %s14, 15
      %s164 = smul.addr %s163, 2
      %s165 = scalar_lea.vmem %s3, %s164
      %p167 = scmp.eq.s32.totalorder %s14, 0
      // Predicated region
      $region33: #{detector_forward.23} parent=31 // pred_check
        %p168 = pneg %p167
      $region34: #{detector_forward.23} parent=31 // pred_check_branch
        %170 = sbr.rel (%p168) target = $region36
      $region35: #{detector_forward.23} parent=31 // pred_region
        %vm171 = vcmask 254976
        %172 = vst.msk [vmem:[#allocation2] sm:$0x3] %vm171, 0.0
        %173 = vst.msk [vmem:[#allocation3] sm:$0x3] %vm171, 0.0
      $region36: #{detector_forward.23} parent=31 // pred_fallthru
        _
      %v174 = vld [vmem:[%s161] sm:$0x3]
      %v175 = vld [vmem:[#allocation2] sm:$0x3]
      %v176 = vpack.c.bf16 %v175, %v175
      %v177 = vld [vmem:[%s1] sm:$0xf]
      %v178 = vld [vmem:[%s1 + $0x4] sm:$0xf]
      %v179 = vld [vmem:[%s1 + $0x8] sm:$0xf]
      %v180 = vld [vmem:[%s1 + $0xc] sm:$0xf]
      %v185 = vunpack.c.l.b16 %v177
      %v186 = vunpack.c.l.b16 %v178
      %v187 = vunpack.c.l.b16 %v179
      %v188 = vunpack.c.l.b16 %v180
      %v189 = vpack.c.b16 %v186, %v185
      %v190 = vpack.c.b16 %v188, %v187
      %vm193 = vcmask 261120
      %v195 = vsel %vm193, %v176, 0
      %197 = vmatprep.subr.bf16.mxu0 0
      %198 = vmatpush1.bf16.msra.mxu0 0
      %199 = vmatprep.subr.bf16.mxu0 0
      %200 = vmatpush1.bf16.msra.mxu0 0
      %201 = vmatprep.subr.bf16.mxu0 0
      %202 = vmatpush1.bf16.msra.mxu0 0
      %203 = vmatprep.subr.bf16.mxu0 0
      %204 = vmatpush1.bf16.msra.mxu0 0
      %205 = vmatprep.subr.bf16.mxu0 0
      %206 = vmatpush1.bf16.msra.mxu0 0
      %207 = vmatprep.subr.bf16.mxu0 0
      %208 = vmatpush1.bf16.msra.mxu0 0
      %209 = vmatprep.subr.bf16.mxu0 0
      %210 = vmatpush1.bf16.msra.mxu0 %v190
      %211 = vmatprep.subr.bf16.mxu0 0
      %212 = vmatpush1.bf16.msra.mxu0 %v189
      %213 = vmatprep.subr.bf16.mxu0 0
      %214 = vmatpush2.bf16.msra.mxu0 0
      %215 = vmatprep.subr.bf16.mxu0 0
      %216 = vmatpush2.bf16.msra.mxu0 0
      %217 = vmatprep.subr.bf16.mxu0 0
      %218 = vmatpush2.bf16.msra.mxu0 0
      %219 = vmatprep.subr.bf16.mxu0 0
      %220 = vmatpush2.bf16.msra.mxu0 0
      %221 = vmatprep.subr.bf16.mxu0 0
      %222 = vmatpush2.bf16.msra.mxu0 0
      %223 = vmatprep.subr.bf16.mxu0 0
      %224 = vmatpush2.bf16.msra.mxu0 0
      %225 = vmatprep.subr.bf16.mxu0 0
      %226 = vmatpush2.bf16.msra.mxu0 0
      %227 = vmatprep.subr.bf16.mxu0 0
      %228 = vmatpush2.bf16.msra.mxu0 0
      %229 = vmatprep.mubr.bf16.mxu0 0
      %230 = vmatmul.mubr.bf16.gmra.mxu0 %v195
      %v231 = vpop.f32.mrf.mxu0
      %v232 = vadd.f32 0.0, %v231
      %v233 = vpop.f32.mrf.mxu0
      %v234 = vpop.f32.mrf.mxu0
      %v235 = vpop.f32.mrf.mxu0
      %236 = vdwg.mxu0
      %v237 = vadd.f32 %v174, %v232
      %v238 = vld [vmem:[%s2] sm:$0x1]
      %v240 = vlaneseq
      %v241 = vshrl.u32 %v240, 7
      %v242 = vsub.s32 0, %v241
      %v243 = vrot.slane %v238, %v242
      %v245 = vadd.f32 %v237, %v243
      %v246 = vsub.f32 0.0, %v245
      %v247 = vmul.f32 %v246, 1.442695
      %v248 = vpow.pop %v247
      %v249 = vadd.f32 %v248, 1.0
      %v250 = vrcp.pop %v249
      %v251 = vmul.f32 1.0, %v250
      %v252 = vtanh.pop %v245
      %v253 = vld [vmem:[#allocation3] sm:$0x3]
      %255 = vrot.lane.b32.xlu0 %v253, 32
      %v256 = vpop.permute.xlu0 %255
      %v258 = vmul.f32 %v251, %v256
      %260 = vrot.lane.b32.xlu0 %v252, 64
      %v261 = vpop.permute.xlu0 %260
      %v263 = vmul.f32 %v251, %v261
      %265 = vrot.lane.b32.xlu0 %v263, 32
      %v266 = vpop.permute.xlu0 %265
      %v268 = vadd.f32 %v258, %v266
      %v269 = vtanh.pop %v268
      %271 = vrot.lane.b32.xlu0 %v269, 64
      %v272 = vpop.permute.xlu0 %271
      %v274 = vmul.f32 %v251, %v272
      %276 = vrot.lane.b32.xlu0 %v274, 32
      %v277 = vpop.permute.xlu0 %276
      %vm279 = vcmask 254976
      %280 = vst.msk [vmem:[#allocation2] sm:$0x3] %vm279, %v277
      %282 = vrot.lane.b32.xlu0 %v268, 96
      %v283 = vpop.permute.xlu0 %282
      %285 = vst.msk [vmem:[#allocation3] sm:$0x3] %vm279, %v283
      %286 = vst.msk [vmem:[%s165] sm:$0x3] %vm279, %v277
      %p287 = scmp.lt.s32.totalorder %s14, 15
      %s288 = scalar_select %p287, %s14, 15
      %s289 = smul.addr %s288, 2
      %s290 = scalar_lea.vmem %s3, %s289
      // Predicated region
      $region37: #{detector_forward.23} parent=31 // pred_check
        %p291 = pneg %p100
      $region38: #{detector_forward.23} parent=31 // pred_check_branch
        %293 = sbr.rel (%p291) target = $region40
      $region39: #{detector_forward.23} parent=31 // pred_region
        _
      $region40: #{detector_forward.23} parent=31 // pred_fallthru
        _
    $region32: #{detector_forward.23} parent=5 // pred_fallthru
      _
    %p294 = scmp.le.s32.totalorder 2, %s9
    // Predicated region
    $region41: #{detector_forward.23} parent=5 // pred_check
      %p295 = pneg %p294
    $region42: #{detector_forward.23} parent=5 // pred_check_branch
      %297 = sbr.rel (%p295) target = $region44
    $region43: #{detector_forward.23} parent=5 // pred_region
      %s298 = ssub.s32 %s9, 2
      // Predicated region
      $region45: #{detector_forward.23} parent=43 // pred_check
        %p299 = pneg %p106
      $region46: #{detector_forward.23} parent=43 // pred_check_branch
        %301 = sbr.rel (%p299) target = $region48
      $region47: #{detector_forward.23} parent=43 // pred_region
        %p302 = scmp.lt.s32.totalorder %s15, 15
        %s303 = scalar_select %p302, %s15, 15
        %s304 = smul.addr %s303, 2
        %s305 = scalar_lea.vmem %s3, %s304
      $region48: #{detector_forward.23} parent=43 // pred_fallthru
        _
    $region44: #{detector_forward.23} parent=5 // pred_fallthru
      _
  $region6: #{detector_forward.23} parent=0 // loop_footer
    %s13 = sadd.s32 1, %s9
  $region7: #{detector_forward.23} parent=0 // loop_footer_branch
    %8 = sbr.rel target = $region3
  $region8: #{detector_forward.23} parent=0 // loop_exit
    _

// kernel: detector_forward.34
$region0: #{detector_forward.34}
  #allocation0 [shape = 'u32[]', space=smem, size = 0x4, offset = 0x4, fixed_abs, tag = 'smem constant byte address 0x4 - core index']
  #allocation1 [shape = 'u32[144,128]{1,0:T(1,128)}', space=vmem, size = 0x12000, scoped, tag = 'internal scratch']
  %s0 = inlined_call_operand.vmem [shape: bf16[2,18,64], index: 0, kind: input, shape index: {}]
  %s1 = inlined_call_operand.vmem [shape: bf16[3,64,32], index: 1, kind: input, shape index: {}]
  %s2 = inlined_call_operand.vmem [shape: f32[1,32], index: 2, kind: input, shape index: {}]
  %s3 = inlined_call_operand.vmem [shape: f32[1,32], index: 3, kind: input, shape index: {}]
  %s4 = inlined_call_operand.vmem [shape: f32[1,32], index: 4, kind: input, shape index: {}]
  %s5 = inlined_call_operand.vmem [shape: f32[2,16,1], index: 5, kind: input, shape index: {}]
  %s6 = inlined_call_operand.vmem [shape: f32[2,16,32], index: 6, kind: output, shape index: {}]
  %s7 = sld [smem:[#allocation0]]
  $region57: #{detector_forward.34} parent=0
    _
  %s9 = ssub.s32 1, %s7
  %s10 = scalar_select 0, %s9, %s7
  loop: start=0, step=1, limit=4
  $region2: #{detector_forward.34} parent=0 // loop_pre_header
    _
  $region3: #{detector_forward.34} parent=0 // loop_header
    %s12 = sphi 0, %s16
    %p13 = scmp.ge.s32.totalorder %s12, 4
    %s22 = sphi 0, %s24
    %s25 = sphi 0, %s22
    %s26 = sphi 0, %s25
    %s42 = sphi 0, %s26
    %s46 = sphi 0, %s46
    %s48 = sphi 0, %s46
    %s49 = sphi 0, %s48
    %s63 = sphi 0, %s49
    %s67 = sphi 0, %s67
    %s69 = sphi 0, %s67
    %s70 = sphi 0, %s69
    %s84 = sphi 0, %s70
    %s88 = sphi 0, %s88
    %s90 = sphi 0, %s88
    %s91 = sphi 0, %s90
    %s105 = sphi 0, %s91
    %s109 = sphi 0, %s109
    %s111 = sphi 0, %s109
    %s112 = sphi 0, %s111
    %s126 = sphi 0, %s112
    %s132 = sphi 0, %s134
    %s135 = sphi 0, %s132
    %s136 = sphi 0, %s135
    %s152 = sphi 0, %s136
    %s158 = sphi 0, %s160
    %s161 = sphi 0, %s158
    %s162 = sphi 0, %s161
    %s178 = sphi 0, %s162
  $region4: #{detector_forward.34} parent=0 // loop_header_branch
    %15 = sbr.rel (%p13) target = $region8
  $region5: #{detector_forward.34} parent=0 // loop_body
    %s17 = ssub.s32 %s12, 1
    %s18 = ssub.s32 %s12, 2
    %s19 = sadd.s32 %s12, 1
    %s20 = ssub.s32 %s12, %s19
    %p21 = scmp.eq.s32.totalorder %s20, 0
    %s23 = sadd.s32 %s22, 1
    %s24 = scalar_select %p21, %s22, %s23
    %p27 = pneg %p21
    %p28 = scmp.eq.s32.totalorder %s12, 1
    %p29 = por %p27, %p28
    %p30 = scmp.ne.s32.totalorder %s22, %s25
    %p31 = scmp.eq.s32.totalorder %s12, 0
    %p32 = por %p30, %p31
    %p33 = scmp.ne.s32.totalorder %s22, %s25
    %p34 = scmp.eq.s32.totalorder %s17, 1
    %p35 = por %p33, %p34
    %p36 = scmp.ne.s32.totalorder %s25, %s26
    %p37 = scmp.eq.s32.totalorder %s17, 0
    %p38 = por %p36, %p37
    %p39 = scmp.ne.s32.totalorder %s25, %s26
    %p40 = scmp.eq.s32.totalorder %s18, 1
    %p41 = por %p39, %p40
    %p43 = scmp.ne.s32.totalorder %s26, %s42
    %p44 = scmp.eq.s32.totalorder %s18, 0
    %p45 = por %p43, %p44
    %s47 = sadd.s32 %s46, 1
    %p50 = scmp.eq.s32.totalorder %s12, 1
    %p51 = scmp.ne.s32.totalorder %s46, %s48
    %p52 = scmp.eq.s32.totalorder %s12, 0
    %p53 = por %p51, %p52
    %p54 = scmp.ne.s32.totalorder %s46, %s48
    %p55 = scmp.eq.s32.totalorder %s17, 1
    %p56 = por %p54, %p55
    %p57 = scmp.ne.s32.totalorder %s48, %s49
    %p58 = scmp.eq.s32.totalorder %s17, 0
    %p59 = por %p57, %p58
    %p60 = scmp.ne.s32.totalorder %s48, %s49
    %p61 = scmp.eq.s32.totalorder %s18, 1
    %p62 = por %p60, %p61
    %p64 = scmp.ne.s32.totalorder %s49, %s63
    %p65 = scmp.eq.s32.totalorder %s18, 0
    %p66 = por %p64, %p65
    %s68 = sadd.s32 %s67, 1
    %p71 = scmp.eq.s32.totalorder %s12, 1
    %p72 = scmp.ne.s32.totalorder %s67, %s69
    %p73 = scmp.eq.s32.totalorder %s12, 0
    %p74 = por %p72, %p73
    %p75 = scmp.ne.s32.totalorder %s67, %s69
    %p76 = scmp.eq.s32.totalorder %s17, 1
    %p77 = por %p75, %p76
    %p78 = scmp.ne.s32.totalorder %s69, %s70
    %p79 = scmp.eq.s32.totalorder %s17, 0
    %p80 = por %p78, %p79
    %p81 = scmp.ne.s32.totalorder %s69, %s70
    %p82 = scmp.eq.s32.totalorder %s18, 1
    %p83 = por %p81, %p82
    %p85 = scmp.ne.s32.totalorder %s70, %s84
    %p86 = scmp.eq.s32.totalorder %s18, 0
    %p87 = por %p85, %p86
    %s89 = sadd.s32 %s88, 1
    %p92 = scmp.eq.s32.totalorder %s12, 1
    %p93 = scmp.ne.s32.totalorder %s88, %s90
    %p94 = scmp.eq.s32.totalorder %s12, 0
    %p95 = por %p93, %p94
    %p96 = scmp.ne.s32.totalorder %s88, %s90
    %p97 = scmp.eq.s32.totalorder %s17, 1
    %p98 = por %p96, %p97
    %p99 = scmp.ne.s32.totalorder %s90, %s91
    %p100 = scmp.eq.s32.totalorder %s17, 0
    %p101 = por %p99, %p100
    %p102 = scmp.ne.s32.totalorder %s90, %s91
    %p103 = scmp.eq.s32.totalorder %s18, 1
    %p104 = por %p102, %p103
    %p106 = scmp.ne.s32.totalorder %s91, %s105
    %p107 = scmp.eq.s32.totalorder %s18, 0
    %p108 = por %p106, %p107
    %s110 = sadd.s32 %s109, 1
    %p113 = scmp.eq.s32.totalorder %s12, 1
    %p114 = scmp.ne.s32.totalorder %s109, %s111
    %p115 = scmp.eq.s32.totalorder %s12, 0
    %p116 = por %p114, %p115
    %p117 = scmp.ne.s32.totalorder %s109, %s111
    %p118 = scmp.eq.s32.totalorder %s17, 1
    %p119 = por %p117, %p118
    %p120 = scmp.ne.s32.totalorder %s111, %s112
    %p121 = scmp.eq.s32.totalorder %s17, 0
    %p122 = por %p120, %p121
    %p123 = scmp.ne.s32.totalorder %s111, %s112
    %p124 = scmp.eq.s32.totalorder %s18, 1
    %p125 = por %p123, %p124
    %p127 = scmp.ne.s32.totalorder %s112, %s126
    %p128 = scmp.eq.s32.totalorder %s18, 0
    %p129 = por %p127, %p128
    %s130 = ssub.s32 %s12, %s19
    %p131 = scmp.eq.s32.totalorder %s130, 0
    %s133 = sadd.s32 %s132, 1
    %s134 = scalar_select %p131, %s132, %s133
    %p137 = pneg %p131
    %p138 = scmp.eq.s32.totalorder %s12, 1
    %p139 = por %p137, %p138
    %p140 = scmp.ne.s32.totalorder %s132, %s135
    %p141 = scmp.eq.s32.totalorder %s12, 0
    %p142 = por %p140, %p141
    %p143 = scmp.ne.s32.totalorder %s132, %s135
    %p144 = scmp.eq.s32.totalorder %s17, 1
    %p145 = por %p143, %p144
    %p146 = scmp.ne.s32.totalorder %s135, %s136
    %p147 = scmp.eq.s32.totalorder %s17, 0
    %p148 = por %p146, %p147
    %p149 = scmp.ne.s32.totalorder %s135, %s136
    %p150 = scmp.eq.s32.totalorder %s18, 1
    %p151 = por %p149, %p150
    %p153 = scmp.ne.s32.totalorder %s136, %s152
    %p154 = scmp.eq.s32.totalorder %s18, 0
    %p155 = por %p153, %p154
    %s156 = ssub.s32 %s12, %s19
    %p157 = scmp.eq.s32.totalorder %s156, 0
    %s159 = sadd.s32 %s158, 1
    %s160 = scalar_select %p157, %s158, %s159
    %p163 = pneg %p157
    %p164 = scmp.eq.s32.totalorder %s12, 1
    %p165 = por %p163, %p164
    %p166 = scmp.ne.s32.totalorder %s158, %s161
    %p167 = scmp.eq.s32.totalorder %s12, 0
    %p168 = por %p166, %p167
    %p169 = scmp.ne.s32.totalorder %s158, %s161
    %p170 = scmp.eq.s32.totalorder %s17, 1
    %p171 = por %p169, %p170
    %p172 = scmp.ne.s32.totalorder %s161, %s162
    %p173 = scmp.eq.s32.totalorder %s17, 0
    %p174 = por %p172, %p173
    %p175 = scmp.ne.s32.totalorder %s161, %s162
    %p176 = scmp.eq.s32.totalorder %s18, 1
    %p177 = por %p175, %p176
    %p179 = scmp.ne.s32.totalorder %s162, %s178
    %p180 = scmp.eq.s32.totalorder %s18, 0
    %p181 = por %p179, %p180
    %p182 = scmp.le.s32.totalorder 1, %s12
    %p183 = scmp.lt.s32.totalorder %s12, 3
    %p184 = pnand %p182, %p183
    %p185 = pneg %p184
    // Predicated region
    $region9: #{detector_forward.34} parent=5 // pred_check
      _
    $region10: #{detector_forward.34} parent=5 // pred_check_branch
      %187 = sbr.rel (%p184) target = $region12
    $region11: #{detector_forward.34} parent=5 // pred_region
      %s188 = ssub.s32 %s12, 1
      // Predicated region
      $region13: #{detector_forward.34} parent=11 // pred_check
        %p189 = pneg %p59
      $region14: #{detector_forward.34} parent=11 // pred_check_branch
        %191 = sbr.rel (%p189) target = $region16
      $region15: #{detector_forward.34} parent=11 // pred_region
        _
      $region16: #{detector_forward.34} parent=11 // pred_fallthru
        _
      // Predicated region
      $region17: #{detector_forward.34} parent=11 // pred_check
        %p192 = pneg %p80
      $region18: #{detector_forward.34} parent=11 // pred_check_branch
        %194 = sbr.rel (%p192) target = $region20
      $region19: #{detector_forward.34} parent=11 // pred_region
        _
      $region20: #{detector_forward.34} parent=11 // pred_fallthru
        _
      // Predicated region
      $region21: #{detector_forward.34} parent=11 // pred_check
        %p195 = pneg %p101
      $region22: #{detector_forward.34} parent=11 // pred_check_branch
        %197 = sbr.rel (%p195) target = $region24
      $region23: #{detector_forward.34} parent=11 // pred_region
        _
      $region24: #{detector_forward.34} parent=11 // pred_fallthru
        _
      // Predicated region
      $region25: #{detector_forward.34} parent=11 // pred_check
        %p198 = pneg %p122
      $region26: #{detector_forward.34} parent=11 // pred_check_branch
        %200 = sbr.rel (%p198) target = $region28
      $region27: #{detector_forward.34} parent=11 // pred_region
        _
      $region28: #{detector_forward.34} parent=11 // pred_fallthru
        _
    $region12: #{detector_forward.34} parent=5 // pred_fallthru
      _
    %p201 = scmp.lt.s32.totalorder %s12, 2
    // Predicated region
    $region29: #{detector_forward.34} parent=5 // pred_check
      %p202 = pneg %p201
    $region30: #{detector_forward.34} parent=5 // pred_check_branch
      %204 = sbr.rel (%p202) target = $region32
    $region31: #{detector_forward.34} parent=5 // pred_region
      // Predicated region
      $region33: #{detector_forward.34} parent=31 // pred_check
        %p205 = pneg %p32
      $region34: #{detector_forward.34} parent=31 // pred_check_branch
        %207 = sbr.rel (%p205) target = $region36
      $region35: #{detector_forward.34} parent=31 // pred_region
        %p208 = scmp.lt.s32.totalorder %s12, 1
        %s209 = scalar_select %p208, %s12, 1
        %s210 = smul.addr %s209, 3
        %s211 = smul.addr %s210, 4
        %s212 = scalar_lea.vmem %s0, %s211
      $region36: #{detector_forward.34} parent=31 // pred_fallthru
        _
      // Predicated region
      $region37: #{detector_forward.34} parent=31 // pred_check
        %p213 = pneg %p142
      $region38: #{detector_forward.34} parent=31 // pred_check_branch
        %215 = sbr.rel (%p213) target = $region40
      $region39: #{detector_forward.34} parent=31 // pred_region
        %p216 = scmp.lt.s32.totalorder %s12, 1
        %s217 = scalar_select %p216, %s12, 1
        %s218 = smul.addr %s217, 2
        %s219 = smul.addr %s218, 8
        %s220 = scalar_lea.vmem %s5, %s219
      $region40: #{detector_forward.34} parent=31 // pred_fallthru
        _
    $region32: #{detector_forward.34} parent=5 // pred_fallthru
      _
    %p221 = scmp.le.s32.totalorder 1, %s12
    %p222 = scmp.lt.s32.totalorder %s12, 3
    %p223 = pnand %p221, %p222
    %p224 = pneg %p223
    // Predicated region
    $region41: #{detector_forward.34} parent=5 // pred_check
      _
    $region42: #{detector_forward.34} parent=5 // pred_check_branch
      %226 = sbr.rel (%p223) target = $region44
    $region43: #{detector_forward.34} parent=5 // pred_region
      %s227 = ssub.s32 %s12, 1
      %p228 = scmp.lt.s32.totalorder %s17, 1
      %s229 = scalar_select %p228, %s17, 1
      %s230 = smul.addr %s229, 3
      %s231 = smul.addr %s230, 4
      %s232 = scalar_lea.vmem %s0, %s231
      %p233 = pneg %p38
      %p234 = pneg %p35
      %p235 = pneg %p59
      %p236 = pneg %p56
      %p237 = pneg %p80
      %p238 = pneg %p77
      %p239 = pneg %p101
      %p240 = pneg %p98
      %p241 = pneg %p122
      %p242 = pneg %p119
      %p243 = scmp.lt.s32.totalorder %s17, 1
      %s244 = scalar_select %p243, %s17, 1
      %s245 = smul.addr %s244, 2
      %s246 = smul.addr %s245, 8
      %s247 = scalar_lea.vmem %s5, %s246
      %p248 = pneg %p148
      %p249 = pneg %p145
      %p250 = pneg %p174
      %p251 = pneg %p171
      %p252 = scmp.lt.s32.totalorder %s17, 1
      %s253 = scalar_select %p252, %s17, 1
      %s254 = smul.addr %s253, 2
      %s255 = smul.addr %s254, 8
      %s256 = scalar_lea.vmem %s6, %s255
      %p257 = scmp.lt.s32.totalorder %s17, 1
      %s258 = scalar_select %p257, %s17, 1
      %s259 = smul.addr %s258, 3
      %s260 = smul.addr %s259, 4
      %s261 = scalar_lea.vmem %s0, %s260
      %p262 = scmp.lt.s32.totalorder %s17, 1
      %s263 = scalar_select %p262, %s17, 1
      %s264 = smul.addr %s263, 2
      %s265 = smul.addr %s264, 8
      %s266 = scalar_lea.vmem %s5, %s265
      %p267 = scmp.lt.s32.totalorder %s17, 1
      %s268 = scalar_select %p267, %s17, 1
      %s269 = smul.addr %s268, 2
      %s270 = smul.addr %s269, 8
      %s271 = scalar_lea.vmem %s6, %s270
      %v273 = vld [vmem:[%s261] sm:$0xf]
      %v274 = vld [vmem:[%s261 + $0x4] sm:$0xf]
      %v275 = vld [vmem:[%s1] sm:$0xf]
      %v276 = vld [vmem:[%s1 + $0x4] sm:$0xf]
      %v277 = vld [vmem:[%s1 + $0x8] sm:$0xf]
      %v278 = vld [vmem:[%s1 + $0xc] sm:$0xf]
      %v279 = vld [vmem:[%s1 + $0x10] sm:$0xf]
      %v280 = vld [vmem:[%s1 + $0x14] sm:$0xf]
      %v281 = vld [vmem:[%s1 + $0x18] sm:$0xf]
      %v282 = vld [vmem:[%s1 + $0x1c] sm:$0xf]
      %v283 = vld [vmem:[%s261 + $0x8] sm:$0x1]
      %s284 = scalar_lea.vmem %s1, 32
      %v285 = vld [vmem:[%s284] sm:$0xf]
      %v286 = vld [vmem:[%s284 + $0x4] sm:$0xf]
      %v287 = vld [vmem:[%s284 + $0x8] sm:$0xf]
      %v288 = vld [vmem:[%s284 + $0xc] sm:$0xf]
      %v289 = vld [vmem:[%s284 + $0x10] sm:$0xf]
      %v290 = vld [vmem:[%s284 + $0x14] sm:$0xf]
      %v291 = vld [vmem:[%s284 + $0x18] sm:$0xf]
      %v292 = vld [vmem:[%s284 + $0x1c] sm:$0xf]
      %v296 = vunpack.c.l.b16 %v273
      %v297 = vunpack.c.l.b16 %v274
      %v298 = vunpack.c.l.b16 %v283
      %v299 = vpack.c.b16 %v297, %v296
      %v300 = vpack.c.b16 %v298, %v298
      %vm301 = vsmask.f32 7424
      %v303 = vshrl.u32 %v299, 16
      %v305 = vshll.u32 %v299, 16
      %v307 = vrot.slane %v305, 1
      %v308 = vor.u32 %v303, %v307
      %v310 = vshll.u32 %v300, 16
      %v312 = vrot.slane %v310, 1
      %v313 = vsel %vm301, %v308, %v312
      %v322 = vunpack.c.l.b16 %v285
      %v323 = vunpack.c.l.b16 %v286
      %v324 = vunpack.c.l.b16 %v287
      %v325 = vunpack.c.l.b16 %v288
      %v326 = vunpack.c.l.b16 %v289
      %v327 = vunpack.c.l.b16 %v290
      %v328 = vunpack.c.l.b16 %v291
      %v329 = vunpack.c.l.b16 %v292
      %v330 = vpack.c.b16 %v323, %v322
      %v331 = vpack.c.b16 %v325, %v324
      %v332 = vpack.c.b16 %v327, %v326
      %v333 = vpack.c.b16 %v329, %v328
      %vm338 = vcmask 523264
      %v340 = vsel %vm338, %v313, 0
      %342 = vmatprep.subr.bf16.mxu0 0
      %343 = vmatpush1.bf16.msra.mxu0 0
      %344 = vmatprep.subr.bf16.mxu0 0
      %345 = vmatpush1.bf16.msra.mxu0 0
      %346 = vmatprep.subr.bf16.mxu0 0
      %347 = vmatpush1.bf16.msra.mxu0 0
      %348 = vmatprep.subr.bf16.mxu0 0
      %349 = vmatpush1.bf16.msra.mxu0 0
      %350 = vmatprep.subr.bf16.mxu0 0
      %351 = vmatpush1.bf16.msra.mxu0 %v333
      %352 = vmatprep.subr.bf16.mxu0 0
      %353 = vmatpush1.bf16.msra.mxu0 %v332
      %354 = vmatprep.subr.bf16.mxu0 0
      %355 = vmatpush1.bf16.msra.mxu0 %v331
      %356 = vmatprep.subr.bf16.mxu0 0
      %357 = vmatpush1.bf16.msra.mxu0 %v330
      %358 = vmatprep.subr.bf16.mxu0 0
      %359 = vmatpush2.bf16.msra.mxu0 0
      %360 = vmatprep.subr.bf16.mxu0 0
      %361 = vmatpush2.bf16.msra.mxu0 0
      %362 = vmatprep.subr.bf16.mxu0 0
      %363 = vmatpush2.bf16.msra.mxu0 0
      %364 = vmatprep.subr.bf16.mxu0 0
      %365 = vmatpush2.bf16.msra.mxu0 0
      %366 = vmatprep.subr.bf16.mxu0 0
      %367 = vmatpush2.bf16.msra.mxu0 0
      %368 = vmatprep.subr.bf16.mxu0 0
      %369 = vmatpush2.bf16.msra.mxu0 0
      %370 = vmatprep.subr.bf16.mxu0 0
      %371 = vmatpush2.bf16.msra.mxu0 0
      %372 = vmatprep.subr.bf16.mxu0 0
      %373 = vmatpush2.bf16.msra.mxu0 0
      %374 = vmatprep.mubr.bf16.mxu0 0
      %375 = vmatmul.mubr.bf16.gmra.mxu0 %v340
      %v376 = vpop.f32.mrf.mxu0
      %v377 = vadd.f32 0.0, %v376
      %v378 = vpop.f32.mrf.mxu0
      %v379 = vpop.f32.mrf.mxu0
      %v380 = vadd.f32 0.0, %v379
      %v381 = vpop.f32.mrf.mxu0
      %382 = vdwg.mxu0
      %v391 = vunpack.c.l.b16 %v275
      %v392 = vunpack.c.l.b16 %v276
      %v393 = vunpack.c.l.b16 %v277
      %v394 = vunpack.c.l.b16 %v278
      %v395 = vunpack.c.l.b16 %v279
      %v396 = vunpack.c.l.b16 %v280
      %v397 = vunpack.c.l.b16 %v281
      %v398 = vunpack.c.l.b16 %v282
      %v399 = vpack.c.b16 %v392, %v391
      %v400 = vpack.c.b16 %v394, %v393
      %v401 = vpack.c.b16 %v396, %v395
      %v402 = vpack.c.b16 %v398, %v397
      %v407 = vsel %vm338, %v299, 0
      %409 = vmatprep.subr.bf16.mxu0 0
      %410 = vmatpush1.bf16.msra.mxu0 0
      %411 = vmatprep.subr.bf16.mxu0 0
      %412 = vmatpush1.bf16.msra.mxu0 0
      %413 = vmatprep.subr.bf16.mxu0 0
      %414 = vmatpush1.bf16.msra.mxu0 0
      %415 = vmatprep.subr.bf16.mxu0 0
      %416 = vmatpush1.bf16.msra.mxu0 0
      %417 = vmatprep.subr.bf16.mxu0 0
      %418 = vmatpush1.bf16.msra.mxu0 %v402
      %419 = vmatprep.subr.bf16.mxu0 0
      %420 = vmatpush1.bf16.msra.mxu0 %v401
      %421 = vmatprep.subr.bf16.mxu0 0
      %422 = vmatpush1.bf16.msra.mxu0 %v400
      %423 = vmatprep.subr.bf16.mxu0 0
      %424 = vmatpush1.bf16.msra.mxu0 %v399
      %425 = vmatprep.subr.bf16.mxu0 0
      %426 = vmatpush2.bf16.msra.mxu0 0
      %427 = vmatprep.subr.bf16.mxu0 0
      %428 = vmatpush2.bf16.msra.mxu0 0
      %429 = vmatprep.subr.bf16.mxu0 0
      %430 = vmatpush2.bf16.msra.mxu0 0
      %431 = vmatprep.subr.bf16.mxu0 0
      %432 = vmatpush2.bf16.msra.mxu0 0
      %433 = vmatprep.subr.bf16.mxu0 0
      %434 = vmatpush2.bf16.msra.mxu0 0
      %435 = vmatprep.subr.bf16.mxu0 0
      %436 = vmatpush2.bf16.msra.mxu0 0
      %437 = vmatprep.subr.bf16.mxu0 0
      %438 = vmatpush2.bf16.msra.mxu0 0
      %439 = vmatprep.subr.bf16.mxu0 0
      %440 = vmatpush2.bf16.msra.mxu0 0
      %441 = vmatprep.mubr.bf16.mxu0 0
      %442 = vmatmul.mubr.bf16.gmra.mxu0 %v407
      %v443 = vpop.f32.mrf.mxu0
      %v444 = vadd.f32 %v377, %v443
      %v445 = vpop.f32.mrf.mxu0
      %v446 = vpop.f32.mrf.mxu0
      %v447 = vadd.f32 %v380, %v446
      %v448 = vpop.f32.mrf.mxu0
      %449 = vdwg.mxu0
      %v450 = vld [vmem:[%s261] sm:$0xe]
      %s451 = scalar_lea.vmem %s1, 64
      %v452 = vld [vmem:[%s451] sm:$0xf]
      %v453 = vld [vmem:[%s451 + $0x4] sm:$0xf]
      %v454 = vld [vmem:[%s451 + $0x8] sm:$0xf]
      %v455 = vld [vmem:[%s451 + $0xc] sm:$0xf]
      %v456 = vld [vmem:[%s451 + $0x10] sm:$0xf]
      %v457 = vld [vmem:[%s451 + $0x14] sm:$0xf]
      %v458 = vld [vmem:[%s451 + $0x18] sm:$0xf]
      %v459 = vld [vmem:[%s451 + $0x1c] sm:$0xf]
      %v461 = vunpack.c.l.b16 %v450
      %v462 = vpack.c.b16 %v297, %v461
      %vm463 = vcmask 1046528
      %v464 = vrot.slane %v462, 1
      %v465 = vrot.slane %v300, 1
      %v466 = vsel %vm463, %v464, %v465
      %v475 = vunpack.c.l.b16 %v452
      %v476 = vunpack.c.l.b16 %v453
      %v477 = vunpack.c.l.b16 %v454
      %v478 = vunpack.c.l.b16 %v455
      %v479 = vunpack.c.l.b16 %v456
      %v480 = vunpack.c.l.b16 %v457
      %v481 = vunpack.c.l.b16 %v458
      %v482 = vunpack.c.l.b16 %v459
      %v483 = vpack.c.b16 %v476, %v475
      %v484 = vpack.c.b16 %v478, %v477
      %v485 = vpack.c.b16 %v480, %v479
      %v486 = vpack.c.b16 %v482, %v481
      %v492 = vsel %vm338, %v466, 0
      %494 = vmatprep.subr.bf16.mxu0 0
      %495 = vmatpush1.bf16.msra.mxu0 0
      %496 = vmatprep.subr.bf16.mxu0 0
      %497 = vmatpush1.bf16.msra.mxu0 0
      %498 = vmatprep.subr.bf16.mxu0 0
      %499 = vmatpush1.bf16.msra.mxu0 0
      %500 = vmatprep.subr.bf16.mxu0 0
      %501 = vmatpush1.bf16.msra.mxu0 0
      %502 = vmatprep.subr.bf16.mxu0 0
      %503 = vmatpush1.bf16.msra.mxu0 %v486
      %504 = vmatprep.subr.bf16.mxu0 0
      %505 = vmatpush1.bf16.msra.mxu0 %v485
      %506 = vmatprep.subr.bf16.mxu0 0
      %507 = vmatpush1.bf16.msra.mxu0 %v484
      %508 = vmatprep.subr.bf16.mxu0 0
      %509 = vmatpush1.bf16.msra.mxu0 %v483
      %510 = vmatprep.subr.bf16.mxu0 0
      %511 = vmatpush2.bf16.msra.mxu0 0
      %512 = vmatprep.subr.bf16.mxu0 0
      %513 = vmatpush2.bf16.msra.mxu0 0
      %514 = vmatprep.subr.bf16.mxu0 0
      %515 = vmatpush2.bf16.msra.mxu0 0
      %516 = vmatprep.subr.bf16.mxu0 0
      %517 = vmatpush2.bf16.msra.mxu0 0
      %518 = vmatprep.subr.bf16.mxu0 0
      %519 = vmatpush2.bf16.msra.mxu0 0
      %520 = vmatprep.subr.bf16.mxu0 0
      %521 = vmatpush2.bf16.msra.mxu0 0
      %522 = vmatprep.subr.bf16.mxu0 0
      %523 = vmatpush2.bf16.msra.mxu0 0
      %524 = vmatprep.subr.bf16.mxu0 0
      %525 = vmatpush2.bf16.msra.mxu0 0
      %526 = vmatprep.mubr.bf16.mxu0 0
      %527 = vmatmul.mubr.bf16.gmra.mxu0 %v492
      %v528 = vpop.f32.mrf.mxu0
      %v529 = vadd.f32 0.0, %v528
      %v530 = vpop.f32.mrf.mxu0
      %v531 = vpop.f32.mrf.mxu0
      %v532 = vadd.f32 0.0, %v531
      %v533 = vpop.f32.mrf.mxu0
      %534 = vdwg.mxu0
      %v535 = vadd.f32 %v444, %v529
      %v536 = vadd.f32 %v447, %v532
      %v537 = vld [vmem:[%s2] sm:$0x1]
      %v539 = vlaneseq
      %v540 = vshrl.u32 %v539, 7
      %v541 = vsub.s32 0, %v540
      %v542 = vrot.slane %v537, %v541
      %v544 = vadd.f32 %v535, %v542
      %v545 = vadd.f32 %v536, %v542
      %vm546 = vcmask 261120
      %v547 = vsel %vm546, %v544, 0.0
      %548 = vadd.xlane.f32.xlu0 %v547
      %v549 = vpop.xlane.xlu0 %548
      %v550 = vsel %vm546, %v545, 0.0
      %551 = vadd.xlane.f32.xlu0 %v550
      %v552 = vpop.xlane.xlu0 %551
      %v553 = vrcp.pop 32.0
      %v554 = vmul.f32 %v549, %v553
      %v555 = vmul.f32 %v552, %v553
      %v556 = vsub.f32 %v544, %v554
      %v557 = vsub.f32 %v545, %v555
      %v558 = vmul.f32 %v556, %v556
      %v559 = vmul.f32 %v557, %v557
      %v560 = vsel %vm546, %v558, 0.0
      %561 = vadd.xlane.f32.xlu0 %v560
      %v562 = vpop.xlane.xlu0 %561
      %v563 = vsel %vm546, %v559, 0.0
      %564 = vadd.xlane.f32.xlu0 %v563
      %v565 = vpop.xlane.xlu0 %564
      %v566 = vmul.f32 %v562, %v553
      %v567 = vmul.f32 %v565, %v553
      %v568 = vadd.f32 %v566, 1e-05
      %v569 = vadd.f32 %v567, 1e-05
      %v570 = vrsqrt.pop %v568
      %v571 = vrsqrt.pop %v569
      %v572 = vmul.f32 %v556, %v570
      %v573 = vmul.f32 %v557, %v571
      %v574 = vld [vmem:[%s3] sm:$0x1]
      %v576 = vlaneseq
      %v577 = vshrl.u32 %v576, 7
      %v578 = vsub.s32 0, %v577
      %v579 = vrot.slane %v574, %v578
      %v581 = vmul.f32 %v572, %v579
      %v582 = vmul.f32 %v573, %v579
      %v583 = vld [vmem:[%s4] sm:$0x1]
      %v585 = vlaneseq
      %v586 = vshrl.u32 %v585, 7
      %v587 = vsub.s32 0, %v586
      %v588 = vrot.slane %v583, %v587
      %v590 = vadd.f32 %v581, %v588
      %v591 = vadd.f32 %v582, %v588
      %v592 = vmax.f32 %v590, 0.0
      %v593 = vmax.f32 %v591, 0.0
      %v594 = vld [vmem:[%s266] sm:$0xff]
      %v595 = vld [vmem:[%s266 + $0x8] sm:$0xff]
      %597 = vset.pattern.permute.xlu0 0
      %598 = vperm.xlu0 %597, %v594
      %v599 = vpop.permute.xlu0 %598
      %602 = vset.pattern.permute.xlu0 0
      %603 = vperm.xlu0 %602, %v595
      %v604 = vpop.permute.xlu0 %603
      %v606 = vmul.f32 %v592, %v599
      %v607 = vmul.f32 %v593, %v604
      %608 = vst.msk [vmem:[%s271] sm:$0xff] %vm546, %v606
      %609 = vst.msk [vmem:[%s271 + $0x8] sm:$0xff] %vm546, %v607
      %p610 = scmp.lt.s32.totalorder %s17, 1
      %s611 = scalar_select %p610, %s17, 1
      %s612 = smul.addr %s611, 2
      %s613 = smul.addr %s612, 8
      %s614 = scalar_lea.vmem %s6, %s613
      // Predicated region
      $region45: #{detector_forward.34} parent=43 // pred_check
        %p615 = pneg %p171
      $region46: #{detector_forward.34} parent=43 // pred_check_branch
        %617 = sbr.rel (%p615) target = $region48
      $region47: #{detector_forward.34} parent=43 // pred_region
        _
      $region48: #{detector_forward.34} parent=43 // pred_fallthru
        _
    $region44: #{detector_forward.34} parent=5 // pred_fallthru
      _
    %p618 = scmp.le.s32.totalorder 2, %s12
    // Predicated region
    $region49: #{detector_forward.34} parent=5 // pred_check
      %p619 = pneg %p618
    $region50: #{detector_forward.34} parent=5 // pred_check_branch
      %621 = sbr.rel (%p619) target = $region52
    $region51: #{detector_forward.34} parent=5 // pred_region
      %s622 = ssub.s32 %s12, 2
      // Predicated region
      $region53: #{detector_forward.34} parent=51 // pred_check
        %p623 = pneg %p177
      $region54: #{detector_forward.34} parent=51 // pred_check_branch
        %625 = sbr.rel (%p623) target = $region56
      $region55: #{detector_forward.34} parent=51 // pred_region
        %p626 = scmp.lt.s32.totalorder %s18, 1
        %s627 = scalar_select %p626, %s18, 1
        %s628 = smul.addr %s627, 2
        %s629 = smul.addr %s628, 8
        %s630 = scalar_lea.vmem %s6, %s629
      $region56: #{detector_forward.34} parent=51 // pred_fallthru
        _
    $region52: #{detector_forward.34} parent=5 // pred_fallthru
      _
  $region6: #{detector_forward.34} parent=0 // loop_footer
    %s16 = sadd.s32 1, %s12
  $region7: #{detector_forward.34} parent=0 // loop_footer_branch
    %11 = sbr.rel target = $region3
  $region8: #{detector_forward.34} parent=0 // loop_exit
    _

// kernel: detector_forward.27
$region0: #{detector_forward.27}
  #allocation0 [shape = 'u32[]', space=smem, size = 0x4, offset = 0x4, fixed_abs, tag = 'smem constant byte address 0x4 - core index']
  #allocation1 [shape = 'u32[144,128]{1,0:T(1,128)}', space=vmem, size = 0x12000, scoped, tag = 'internal scratch']
  %s0 = inlined_call_operand.vmem [shape: bf16[2,18,64], index: 0, kind: input, shape index: {}]
  %s1 = inlined_call_operand.vmem [shape: bf16[3,64,64], index: 1, kind: input, shape index: {}]
  %s2 = inlined_call_operand.vmem [shape: f32[1,64], index: 2, kind: input, shape index: {}]
  %s3 = inlined_call_operand.vmem [shape: f32[1,64], index: 3, kind: input, shape index: {}]
  %s4 = inlined_call_operand.vmem [shape: f32[1,64], index: 4, kind: input, shape index: {}]
  %s5 = inlined_call_operand.vmem [shape: f32[2,16,64], index: 5, kind: output, shape index: {}]
  %s6 = sld [smem:[#allocation0]]
  $region53: #{detector_forward.27} parent=0
    _
  %s8 = ssub.s32 1, %s6
  %s9 = scalar_select 0, %s8, %s6
  loop: start=0, step=1, limit=4
  $region2: #{detector_forward.27} parent=0 // loop_pre_header
    _
  $region3: #{detector_forward.27} parent=0 // loop_header
    %s11 = sphi 0, %s15
    %p12 = scmp.ge.s32.totalorder %s11, 4
    %s21 = sphi 0, %s23
    %s24 = sphi 0, %s21
    %s25 = sphi 0, %s24
    %s41 = sphi 0, %s25
    %s45 = sphi 0, %s45
    %s47 = sphi 0, %s45
    %s48 = sphi 0, %s47
    %s62 = sphi 0, %s48
    %s66 = sphi 0, %s66
    %s68 = sphi 0, %s66
    %s69 = sphi 0, %s68
    %s83 = sphi 0, %s69
    %s87 = sphi 0, %s87
    %s89 = sphi 0, %s87
    %s90 = sphi 0, %s89
    %s104 = sphi 0, %s90
    %s108 = sphi 0, %s108
    %s110 = sphi 0, %s108
    %s111 = sphi 0, %s110
    %s125 = sphi 0, %s111
    %s131 = sphi 0, %s133
    %s134 = sphi 0, %s131
    %s135 = sphi 0, %s134
    %s151 = sphi 0, %s135
  $region4: #{detector_forward.27} parent=0 // loop_header_branch
    %14 = sbr.rel (%p12) target = $region8
  $region5: #{detector_forward.27} parent=0 // loop_body
    %s16 = ssub.s32 %s11, 1
    %s17 = ssub.s32 %s11, 2
    %s18 = sadd.s32 %s11, 1
    %s19 = ssub.s32 %s11, %s18
    %p20 = scmp.eq.s32.totalorder %s19, 0
    %s22 = sadd.s32 %s21, 1
    %s23 = scalar_select %p20, %s21, %s22
    %p26 = pneg %p20
    %p27 = scmp.eq.s32.totalorder %s11, 1
    %p28 = por %p26, %p27
    %p29 = scmp.ne.s32.totalorder %s21, %s24
    %p30 = scmp.eq.s32.totalorder %s11, 0
    %p31 = por %p29, %p30
    %p32 = scmp.ne.s32.totalorder %s21, %s24
    %p33 = scmp.eq.s32.totalorder %s16, 1
    %p34 = por %p32, %p33
    %p35 = scmp.ne.s32.totalorder %s24, %s25
    %p36 = scmp.eq.s32.totalorder %s16, 0
    %p37 = por %p35, %p36
    %p38 = scmp.ne.s32.totalorder %s24, %s25
    %p39 = scmp.eq.s32.totalorder %s17, 1
    %p40 = por %p38, %p39
    %p42 = scmp.ne.s32.totalorder %s25, %s41
    %p43 = scmp.eq.s32.totalorder %s17, 0
    %p44 = por %p42, %p43
    %s46 = sadd.s32 %s45, 1
    %p49 = scmp.eq.s32.totalorder %s11, 1
    %p50 = scmp.ne.s32.totalorder %s45, %s47
    %p51 = scmp.eq.s32.totalorder %s11, 0
    %p52 = por %p50, %p51
    %p53 = scmp.ne.s32.totalorder %s45, %s47
    %p54 = scmp.eq.s32.totalorder %s16, 1
    %p55 = por %p53, %p54
    %p56 = scmp.ne.s32.totalorder %s47, %s48
    %p57 = scmp.eq.s32.totalorder %s16, 0
    %p58 = por %p56, %p57
    %p59 = scmp.ne.s32.totalorder %s47, %s48
    %p60 = scmp.eq.s32.totalorder %s17, 1
    %p61 = por %p59, %p60
    %p63 = scmp.ne.s32.totalorder %s48, %s62
    %p64 = scmp.eq.s32.totalorder %s17, 0
    %p65 = por %p63, %p64
    %s67 = sadd.s32 %s66, 1
    %p70 = scmp.eq.s32.totalorder %s11, 1
    %p71 = scmp.ne.s32.totalorder %s66, %s68
    %p72 = scmp.eq.s32.totalorder %s11, 0
    %p73 = por %p71, %p72
    %p74 = scmp.ne.s32.totalorder %s66, %s68
    %p75 = scmp.eq.s32.totalorder %s16, 1
    %p76 = por %p74, %p75
    %p77 = scmp.ne.s32.totalorder %s68, %s69
    %p78 = scmp.eq.s32.totalorder %s16, 0
    %p79 = por %p77, %p78
    %p80 = scmp.ne.s32.totalorder %s68, %s69
    %p81 = scmp.eq.s32.totalorder %s17, 1
    %p82 = por %p80, %p81
    %p84 = scmp.ne.s32.totalorder %s69, %s83
    %p85 = scmp.eq.s32.totalorder %s17, 0
    %p86 = por %p84, %p85
    %s88 = sadd.s32 %s87, 1
    %p91 = scmp.eq.s32.totalorder %s11, 1
    %p92 = scmp.ne.s32.totalorder %s87, %s89
    %p93 = scmp.eq.s32.totalorder %s11, 0
    %p94 = por %p92, %p93
    %p95 = scmp.ne.s32.totalorder %s87, %s89
    %p96 = scmp.eq.s32.totalorder %s16, 1
    %p97 = por %p95, %p96
    %p98 = scmp.ne.s32.totalorder %s89, %s90
    %p99 = scmp.eq.s32.totalorder %s16, 0
    %p100 = por %p98, %p99
    %p101 = scmp.ne.s32.totalorder %s89, %s90
    %p102 = scmp.eq.s32.totalorder %s17, 1
    %p103 = por %p101, %p102
    %p105 = scmp.ne.s32.totalorder %s90, %s104
    %p106 = scmp.eq.s32.totalorder %s17, 0
    %p107 = por %p105, %p106
    %s109 = sadd.s32 %s108, 1
    %p112 = scmp.eq.s32.totalorder %s11, 1
    %p113 = scmp.ne.s32.totalorder %s108, %s110
    %p114 = scmp.eq.s32.totalorder %s11, 0
    %p115 = por %p113, %p114
    %p116 = scmp.ne.s32.totalorder %s108, %s110
    %p117 = scmp.eq.s32.totalorder %s16, 1
    %p118 = por %p116, %p117
    %p119 = scmp.ne.s32.totalorder %s110, %s111
    %p120 = scmp.eq.s32.totalorder %s16, 0
    %p121 = por %p119, %p120
    %p122 = scmp.ne.s32.totalorder %s110, %s111
    %p123 = scmp.eq.s32.totalorder %s17, 1
    %p124 = por %p122, %p123
    %p126 = scmp.ne.s32.totalorder %s111, %s125
    %p127 = scmp.eq.s32.totalorder %s17, 0
    %p128 = por %p126, %p127
    %s129 = ssub.s32 %s11, %s18
    %p130 = scmp.eq.s32.totalorder %s129, 0
    %s132 = sadd.s32 %s131, 1
    %s133 = scalar_select %p130, %s131, %s132
    %p136 = pneg %p130
    %p137 = scmp.eq.s32.totalorder %s11, 1
    %p138 = por %p136, %p137
    %p139 = scmp.ne.s32.totalorder %s131, %s134
    %p140 = scmp.eq.s32.totalorder %s11, 0
    %p141 = por %p139, %p140
    %p142 = scmp.ne.s32.totalorder %s131, %s134
    %p143 = scmp.eq.s32.totalorder %s16, 1
    %p144 = por %p142, %p143
    %p145 = scmp.ne.s32.totalorder %s134, %s135
    %p146 = scmp.eq.s32.totalorder %s16, 0
    %p147 = por %p145, %p146
    %p148 = scmp.ne.s32.totalorder %s134, %s135
    %p149 = scmp.eq.s32.totalorder %s17, 1
    %p150 = por %p148, %p149
    %p152 = scmp.ne.s32.totalorder %s135, %s151
    %p153 = scmp.eq.s32.totalorder %s17, 0
    %p154 = por %p152, %p153
    %p155 = scmp.le.s32.totalorder 1, %s11
    %p156 = scmp.lt.s32.totalorder %s11, 3
    %p157 = pnand %p155, %p156
    %p158 = pneg %p157
    // Predicated region
    $region9: #{detector_forward.27} parent=5 // pred_check
      _
    $region10: #{detector_forward.27} parent=5 // pred_check_branch
      %160 = sbr.rel (%p157) target = $region12
    $region11: #{detector_forward.27} parent=5 // pred_region
      %s161 = ssub.s32 %s11, 1
      // Predicated region
      $region13: #{detector_forward.27} parent=11 // pred_check
        %p162 = pneg %p58
      $region14: #{detector_forward.27} parent=11 // pred_check_branch
        %164 = sbr.rel (%p162) target = $region16
      $region15: #{detector_forward.27} parent=11 // pred_region
        _
      $region16: #{detector_forward.27} parent=11 // pred_fallthru
        _
      // Predicated region
      $region17: #{detector_forward.27} parent=11 // pred_check
        %p165 = pneg %p79
      $region18: #{detector_forward.27} parent=11 // pred_check_branch
        %167 = sbr.rel (%p165) target = $region20
      $region19: #{detector_forward.27} parent=11 // pred_region
        _
      $region20: #{detector_forward.27} parent=11 // pred_fallthru
        _
      // Predicated region
      $region21: #{detector_forward.27} parent=11 // pred_check
        %p168 = pneg %p100
      $region22: #{detector_forward.27} parent=11 // pred_check_branch
        %170 = sbr.rel (%p168) target = $region24
      $region23: #{detector_forward.27} parent=11 // pred_region
        _
      $region24: #{detector_forward.27} parent=11 // pred_fallthru
        _
      // Predicated region
      $region25: #{detector_forward.27} parent=11 // pred_check
        %p171 = pneg %p121
      $region26: #{detector_forward.27} parent=11 // pred_check_branch
        %173 = sbr.rel (%p171) target = $region28
      $region27: #{detector_forward.27} parent=11 // pred_region
        _
      $region28: #{detector_forward.27} parent=11 // pred_fallthru
        _
    $region12: #{detector_forward.27} parent=5 // pred_fallthru
      _
    %p174 = scmp.lt.s32.totalorder %s11, 2
    // Predicated region
    $region29: #{detector_forward.27} parent=5 // pred_check
      %p175 = pneg %p174
    $region30: #{detector_forward.27} parent=5 // pred_check_branch
      %177 = sbr.rel (%p175) target = $region32
    $region31: #{detector_forward.27} parent=5 // pred_region
      // Predicated region
      $region33: #{detector_forward.27} parent=31 // pred_check
        %p178 = pneg %p31
      $region34: #{detector_forward.27} parent=31 // pred_check_branch
        %180 = sbr.rel (%p178) target = $region36
      $region35: #{detector_forward.27} parent=31 // pred_region
        %p181 = scmp.lt.s32.totalorder %s11, 1
        %s182 = scalar_select %p181, %s11, 1
        %s183 = smul.addr %s182, 3
        %s184 = smul.addr %s183, 4
        %s185 = scalar_lea.vmem %s0, %s184
      $region36: #{detector_forward.27} parent=31 // pred_fallthru
        _
    $region32: #{detector_forward.27} parent=5 // pred_fallthru
      _
    %p186 = scmp.le.s32.totalorder 1, %s11
    %p187 = scmp.lt.s32.totalorder %s11, 3
    %p188 = pnand %p186, %p187
    %p189 = pneg %p188
    // Predicated region
    $region37: #{detector_forward.27} parent=5 // pred_check
      _
    $region38: #{detector_forward.27} parent=5 // pred_check_branch
      %191 = sbr.rel (%p188) target = $region40
    $region39: #{detector_forward.27} parent=5 // pred_region
      %s192 = ssub.s32 %s11, 1
      %p193 = scmp.lt.s32.totalorder %s16, 1
      %s194 = scalar_select %p193, %s16, 1
      %s195 = smul.addr %s194, 3
      %s196 = smul.addr %s195, 4
      %s197 = scalar_lea.vmem %s0, %s196
      %p198 = pneg %p37
      %p199 = pneg %p34
      %p200 = pneg %p58
      %p201 = pneg %p55
      %p202 = pneg %p79
      %p203 = pneg %p76
      %p204 = pneg %p100
      %p205 = pneg %p97
      %p206 = pneg %p121
      %p207 = pneg %p118
      %p208 = pneg %p147
      %p209 = pneg %p144
      %p210 = scmp.lt.s32.totalorder %s16, 1
      %s211 = scalar_select %p210, %s16, 1
      %s212 = smul.addr %s211, 2
      %s213 = smul.addr %s212, 8
      %s214 = scalar_lea.vmem %s5, %s213
      %p215 = scmp.lt.s32.totalorder %s16, 1
      %s216 = scalar_select %p215, %s16, 1
      %s217 = smul.addr %s216, 3
      %s218 = smul.addr %s217, 4
      %s219 = scalar_lea.vmem %s0, %s218
      %p220 = scmp.lt.s32.totalorder %s16, 1
      %s221 = scalar_select %p220, %s16, 1
      %s222 = smul.addr %s221, 2
      %s223 = smul.addr %s222, 8
      %s224 = scalar_lea.vmem %s5, %s223
      %v226 = vld [vmem:[%s219] sm:$0xf]
      %v227 = vld [vmem:[%s219 + $0x4] sm:$0xf]
      %v228 = vld [vmem:[%s1] sm:$0xf]
      %v229 = vld [vmem:[%s1 + $0x4] sm:$0xf]
      %v230 = vld [vmem:[%s1 + $0x8] sm:$0xf]
      %v231 = vld [vmem:[%s1 + $0xc] sm:$0xf]
      %v232 = vld [vmem:[%s1 + $0x10] sm:$0xf]
      %v233 = vld [vmem:[%s1 + $0x14] sm:$0xf]
      %v234 = vld [vmem:[%s1 + $0x18] sm:$0xf]
      %v235 = vld [vmem:[%s1 + $0x1c] sm:$0xf]
      %v236 = vld [vmem:[%s219 + $0x8] sm:$0x1]
      %s237 = scalar_lea.vmem %s1, 32
      %v238 = vld [vmem:[%s237] sm:$0xf]
      %v239 = vld [vmem:[%s237 + $0x4] sm:$0xf]
      %v240 = vld [vmem:[%s237 + $0x8] sm:$0xf]
      %v241 = vld [vmem:[%s237 + $0xc] sm:$0xf]
      %v242 = vld [vmem:[%s237 + $0x10] sm:$0xf]
      %v243 = vld [vmem:[%s237 + $0x14] sm:$0xf]
      %v244 = vld [vmem:[%s237 + $0x18] sm:$0xf]
      %v245 = vld [vmem:[%s237 + $0x1c] sm:$0xf]
      %v249 = vunpack.c.l.b16 %v226
      %v250 = vunpack.c.l.b16 %v227
      %v251 = vunpack.c.l.b16 %v236
      %v252 = vpack.c.b16 %v250, %v249
      %v253 = vpack.c.b16 %v251, %v251
      %vm254 = vsmask.f32 7424
      %v256 = vshrl.u32 %v252, 16
      %v258 = vshll.u32 %v252, 16
      %v260 = vrot.slane %v258, 1
      %v261 = vor.u32 %v256, %v260
      %v263 = vshll.u32 %v253, 16
      %v265 = vrot.slane %v263, 1
      %v266 = vsel %vm254, %v261, %v265
      %v275 = vunpack.c.l.b16 %v238
      %v276 = vunpack.c.l.b16 %v239
      %v277 = vunpack.c.l.b16 %v240
      %v278 = vunpack.c.l.b16 %v241
      %v279 = vunpack.c.l.b16 %v242
      %v280 = vunpack.c.l.b16 %v243
      %v281 = vunpack.c.l.b16 %v244
      %v282 = vunpack.c.l.b16 %v245
      %v283 = vpack.c.b16 %v276, %v275
      %v284 = vpack.c.b16 %v278, %v277
      %v285 = vpack.c.b16 %v280, %v279
      %v286 = vpack.c.b16 %v282, %v281
      %vm291 = vcmask 523264
      %v293 = vsel %vm291, %v266, 0
      %295 = vmatprep.subr.bf16.mxu0 0
      %296 = vmatpush1.bf16.msra.mxu0 0
      %297 = vmatprep.subr.bf16.mxu0 0
      %298 = vmatpush1.bf16.msra.mxu0 0
      %299 = vmatprep.subr.bf16.mxu0 0
      %300 = vmatpush1.bf16.msra.mxu0 0
      %301 = vmatprep.subr.bf16.mxu0 0
      %302 = vmatpush1.bf16.msra.mxu0 0
      %303 = vmatprep.subr.bf16.mxu0 0
      %304 = vmatpush1.bf16.msra.mxu0 %v286
      %305 = vmatprep.subr.bf16.mxu0 0
      %306 = vmatpush1.bf16.msra.mxu0 %v285
      %307 = vmatprep.subr.bf16.mxu0 0
      %308 = vmatpush1.bf16.msra.mxu0 %v284
      %309 = vmatprep.subr.bf16.mxu0 0
      %310 = vmatpush1.bf16.msra.mxu0 %v283
      %311 = vmatprep.subr.bf16.mxu0 0
      %312 = vmatpush2.bf16.msra.mxu0 0
      %313 = vmatprep.subr.bf16.mxu0 0
      %314 = vmatpush2.bf16.msra.mxu0 0
      %315 = vmatprep.subr.bf16.mxu0 0
      %316 = vmatpush2.bf16.msra.mxu0 0
      %317 = vmatprep.subr.bf16.mxu0 0
      %318 = vmatpush2.bf16.msra.mxu0 0
      %319 = vmatprep.subr.bf16.mxu0 0
      %320 = vmatpush2.bf16.msra.mxu0 0
      %321 = vmatprep.subr.bf16.mxu0 0
      %322 = vmatpush2.bf16.msra.mxu0 0
      %323 = vmatprep.subr.bf16.mxu0 0
      %324 = vmatpush2.bf16.msra.mxu0 0
      %325 = vmatprep.subr.bf16.mxu0 0
      %326 = vmatpush2.bf16.msra.mxu0 0
      %327 = vmatprep.mubr.bf16.mxu0 0
      %328 = vmatmul.mubr.bf16.gmra.mxu0 %v293
      %v329 = vpop.f32.mrf.mxu0
      %v330 = vadd.f32 0.0, %v329
      %v331 = vpop.f32.mrf.mxu0
      %v332 = vpop.f32.mrf.mxu0
      %v333 = vadd.f32 0.0, %v332
      %v334 = vpop.f32.mrf.mxu0
      %335 = vdwg.mxu0
      %v344 = vunpack.c.l.b16 %v228
      %v345 = vunpack.c.l.b16 %v229
      %v346 = vunpack.c.l.b16 %v230
      %v347 = vunpack.c.l.b16 %v231
      %v348 = vunpack.c.l.b16 %v232
      %v349 = vunpack.c.l.b16 %v233
      %v350 = vunpack.c.l.b16 %v234
      %v351 = vunpack.c.l.b16 %v235
      %v352 = vpack.c.b16 %v345, %v344
      %v353 = vpack.c.b16 %v347, %v346
      %v354 = vpack.c.b16 %v349, %v348
      %v355 = vpack.c.b16 %v351, %v350
      %v360 = vsel %vm291, %v252, 0
      %362 = vmatprep.subr.bf16.mxu0 0
      %363 = vmatpush1.bf16.msra.mxu0 0
      %364 = vmatprep.subr.bf16.mxu0 0
      %365 = vmatpush1.bf16.msra.mxu0 0
      %366 = vmatprep.subr.bf16.mxu0 0
      %367 = vmatpush1.bf16.msra.mxu0 0
      %368 = vmatprep.subr.bf16.mxu0 0
      %369 = vmatpush1.bf16.msra.mxu0 0
      %370 = vmatprep.subr.bf16.mxu0 0
      %371 = vmatpush1.bf16.msra.mxu0 %v355
      %372 = vmatprep.subr.bf16.mxu0 0
      %373 = vmatpush1.bf16.msra.mxu0 %v354
      %374 = vmatprep.subr.bf16.mxu0 0
      %375 = vmatpush1.bf16.msra.mxu0 %v353
      %376 = vmatprep.subr.bf16.mxu0 0
      %377 = vmatpush1.bf16.msra.mxu0 %v352
      %378 = vmatprep.subr.bf16.mxu0 0
      %379 = vmatpush2.bf16.msra.mxu0 0
      %380 = vmatprep.subr.bf16.mxu0 0
      %381 = vmatpush2.bf16.msra.mxu0 0
      %382 = vmatprep.subr.bf16.mxu0 0
      %383 = vmatpush2.bf16.msra.mxu0 0
      %384 = vmatprep.subr.bf16.mxu0 0
      %385 = vmatpush2.bf16.msra.mxu0 0
      %386 = vmatprep.subr.bf16.mxu0 0
      %387 = vmatpush2.bf16.msra.mxu0 0
      %388 = vmatprep.subr.bf16.mxu0 0
      %389 = vmatpush2.bf16.msra.mxu0 0
      %390 = vmatprep.subr.bf16.mxu0 0
      %391 = vmatpush2.bf16.msra.mxu0 0
      %392 = vmatprep.subr.bf16.mxu0 0
      %393 = vmatpush2.bf16.msra.mxu0 0
      %394 = vmatprep.mubr.bf16.mxu0 0
      %395 = vmatmul.mubr.bf16.gmra.mxu0 %v360
      %v396 = vpop.f32.mrf.mxu0
      %v397 = vadd.f32 %v330, %v396
      %v398 = vpop.f32.mrf.mxu0
      %v399 = vpop.f32.mrf.mxu0
      %v400 = vadd.f32 %v333, %v399
      %v401 = vpop.f32.mrf.mxu0
      %402 = vdwg.mxu0
      %v403 = vld [vmem:[%s219] sm:$0xe]
      %s404 = scalar_lea.vmem %s1, 64
      %v405 = vld [vmem:[%s404] sm:$0xf]
      %v406 = vld [vmem:[%s404 + $0x4] sm:$0xf]
      %v407 = vld [vmem:[%s404 + $0x8] sm:$0xf]
      %v408 = vld [vmem:[%s404 + $0xc] sm:$0xf]
      %v409 = vld [vmem:[%s404 + $0x10] sm:$0xf]
      %v410 = vld [vmem:[%s404 + $0x14] sm:$0xf]
      %v411 = vld [vmem:[%s404 + $0x18] sm:$0xf]
      %v412 = vld [vmem:[%s404 + $0x1c] sm:$0xf]
      %v414 = vunpack.c.l.b16 %v403
      %v415 = vpack.c.b16 %v250, %v414
      %vm416 = vcmask 1046528
      %v417 = vrot.slane %v415, 1
      %v418 = vrot.slane %v253, 1
      %v419 = vsel %vm416, %v417, %v418
      %v428 = vunpack.c.l.b16 %v405
      %v429 = vunpack.c.l.b16 %v406
      %v430 = vunpack.c.l.b16 %v407
      %v431 = vunpack.c.l.b16 %v408
      %v432 = vunpack.c.l.b16 %v409
      %v433 = vunpack.c.l.b16 %v410
      %v434 = vunpack.c.l.b16 %v411
      %v435 = vunpack.c.l.b16 %v412
      %v436 = vpack.c.b16 %v429, %v428
      %v437 = vpack.c.b16 %v431, %v430
      %v438 = vpack.c.b16 %v433, %v432
      %v439 = vpack.c.b16 %v435, %v434
      %v445 = vsel %vm291, %v419, 0
      %447 = vmatprep.subr.bf16.mxu0 0
      %448 = vmatpush1.bf16.msra.mxu0 0
      %449 = vmatprep.subr.bf16.mxu0 0
      %450 = vmatpush1.bf16.msra.mxu0 0
      %451 = vmatprep.subr.bf16.mxu0 0
      %452 = vmatpush1.bf16.msra.mxu0 0
      %453 = vmatprep.subr.bf16.mxu0 0
      %454 = vmatpush1.bf16.msra.mxu0 0
      %455 = vmatprep.subr.bf16.mxu0 0
      %456 = vmatpush1.bf16.msra.mxu0 %v439
      %457 = vmatprep.subr.bf16.mxu0 0
      %458 = vmatpush1.bf16.msra.mxu0 %v438
      %459 = vmatprep.subr.bf16.mxu0 0
      %460 = vmatpush1.bf16.msra.mxu0 %v437
      %461 = vmatprep.subr.bf16.mxu0 0
      %462 = vmatpush1.bf16.msra.mxu0 %v436
      %463 = vmatprep.subr.bf16.mxu0 0
      %464 = vmatpush2.bf16.msra.mxu0 0
      %465 = vmatprep.subr.bf16.mxu0 0
      %466 = vmatpush2.bf16.msra.mxu0 0
      %467 = vmatprep.subr.bf16.mxu0 0
      %468 = vmatpush2.bf16.msra.mxu0 0
      %469 = vmatprep.subr.bf16.mxu0 0
      %470 = vmatpush2.bf16.msra.mxu0 0
      %471 = vmatprep.subr.bf16.mxu0 0
      %472 = vmatpush2.bf16.msra.mxu0 0
      %473 = vmatprep.subr.bf16.mxu0 0
      %474 = vmatpush2.bf16.msra.mxu0 0
      %475 = vmatprep.subr.bf16.mxu0 0
      %476 = vmatpush2.bf16.msra.mxu0 0
      %477 = vmatprep.subr.bf16.mxu0 0
      %478 = vmatpush2.bf16.msra.mxu0 0
      %479 = vmatprep.mubr.bf16.mxu0 0
      %480 = vmatmul.mubr.bf16.gmra.mxu0 %v445
      %v481 = vpop.f32.mrf.mxu0
      %v482 = vadd.f32 0.0, %v481
      %v483 = vpop.f32.mrf.mxu0
      %v484 = vpop.f32.mrf.mxu0
      %v485 = vadd.f32 0.0, %v484
      %v486 = vpop.f32.mrf.mxu0
      %487 = vdwg.mxu0
      %v488 = vadd.f32 %v397, %v482
      %v489 = vadd.f32 %v400, %v485
      %v490 = vld [vmem:[%s2] sm:$0x1]
      %v492 = vlaneseq
      %v493 = vshrl.u32 %v492, 7
      %v494 = vsub.s32 0, %v493
      %v495 = vrot.slane %v490, %v494
      %v497 = vadd.f32 %v488, %v495
      %v498 = vadd.f32 %v489, %v495
      %v499 = vsel %vm291, %v497, 0.0
      %500 = vadd.xlane.f32.xlu0 %v499
      %v501 = vpop.xlane.xlu0 %500
      %v502 = vsel %vm291, %v498, 0.0
      %503 = vadd.xlane.f32.xlu0 %v502
      %v504 = vpop.xlane.xlu0 %503
      %v505 = vrcp.pop 64.0
      %v506 = vmul.f32 %v501, %v505
      %v507 = vmul.f32 %v504, %v505
      %v508 = vsub.f32 %v497, %v506
      %v509 = vsub.f32 %v498, %v507
      %v510 = vmul.f32 %v508, %v508
      %v511 = vmul.f32 %v509, %v509
      %v512 = vsel %vm291, %v510, 0.0
      %513 = vadd.xlane.f32.xlu0 %v512
      %v514 = vpop.xlane.xlu0 %513
      %v515 = vsel %vm291, %v511, 0.0
      %516 = vadd.xlane.f32.xlu0 %v515
      %v517 = vpop.xlane.xlu0 %516
      %v518 = vmul.f32 %v514, %v505
      %v519 = vmul.f32 %v517, %v505
      %v520 = vadd.f32 %v518, 1e-05
      %v521 = vadd.f32 %v519, 1e-05
      %v522 = vrsqrt.pop %v520
      %v523 = vrsqrt.pop %v521
      %v524 = vmul.f32 %v508, %v522
      %v525 = vmul.f32 %v509, %v523
      %v526 = vld [vmem:[%s3] sm:$0x1]
      %v528 = vlaneseq
      %v529 = vshrl.u32 %v528, 7
      %v530 = vsub.s32 0, %v529
      %v531 = vrot.slane %v526, %v530
      %v533 = vmul.f32 %v524, %v531
      %v534 = vmul.f32 %v525, %v531
      %v535 = vld [vmem:[%s4] sm:$0x1]
      %v537 = vlaneseq
      %v538 = vshrl.u32 %v537, 7
      %v539 = vsub.s32 0, %v538
      %v540 = vrot.slane %v535, %v539
      %v542 = vadd.f32 %v533, %v540
      %v543 = vadd.f32 %v534, %v540
      %v544 = vmax.f32 %v542, 0.0
      %v545 = vmax.f32 %v543, 0.0
      %546 = vst.msk [vmem:[%s224] sm:$0xff] %vm291, %v544
      %547 = vst.msk [vmem:[%s224 + $0x8] sm:$0xff] %vm291, %v545
      %p548 = scmp.lt.s32.totalorder %s16, 1
      %s549 = scalar_select %p548, %s16, 1
      %s550 = smul.addr %s549, 2
      %s551 = smul.addr %s550, 8
      %s552 = scalar_lea.vmem %s5, %s551
      // Predicated region
      $region41: #{detector_forward.27} parent=39 // pred_check
        %p553 = pneg %p144
      $region42: #{detector_forward.27} parent=39 // pred_check_branch
        %555 = sbr.rel (%p553) target = $region44
      $region43: #{detector_forward.27} parent=39 // pred_region
        _
      $region44: #{detector_forward.27} parent=39 // pred_fallthru
        _
    $region40: #{detector_forward.27} parent=5 // pred_fallthru
      _
    %p556 = scmp.le.s32.totalorder 2, %s11
    // Predicated region
    $region45: #{detector_forward.27} parent=5 // pred_check
      %p557 = pneg %p556
    $region46: #{detector_forward.27} parent=5 // pred_check_branch
      %559 = sbr.rel (%p557) target = $region48
    $region47: #{detector_forward.27} parent=5 // pred_region
      %s560 = ssub.s32 %s11, 2
      // Predicated region
      $region49: #{detector_forward.27} parent=47 // pred_check
        %p561 = pneg %p150
      $region50: #{detector_forward.27} parent=47 // pred_check_branch
        %563 = sbr.rel (%p561) target = $region52
      $region51: #{detector_forward.27} parent=47 // pred_region
        %p564 = scmp.lt.s32.totalorder %s17, 1
        %s565 = scalar_select %p564, %s17, 1
        %s566 = smul.addr %s565, 2
        %s567 = smul.addr %s566, 8
        %s568 = scalar_lea.vmem %s5, %s567
      $region52: #{detector_forward.27} parent=47 // pred_fallthru
        _
    $region48: #{detector_forward.27} parent=5 // pred_fallthru
      _
  $region6: #{detector_forward.27} parent=0 // loop_footer
    %s15 = sadd.s32 1, %s11
  $region7: #{detector_forward.27} parent=0 // loop_footer_branch
    %10 = sbr.rel target = $region3
  $region8: #{detector_forward.27} parent=0 // loop_exit
    _

// kernel: detector_forward.35
$region0: #{detector_forward.35}
  #allocation0 [shape = 'u32[]', space=smem, size = 0x4, offset = 0x4, fixed_abs, tag = 'smem constant byte address 0x4 - core index']
  #allocation1 [shape = 'u32[144,128]{1,0:T(1,128)}', space=vmem, size = 0x12000, scoped, tag = 'internal scratch']
  %s0 = inlined_call_operand.vmem [shape: bf16[2,18,32], index: 0, kind: input, shape index: {}]
  %s1 = inlined_call_operand.vmem [shape: bf16[3,32,32], index: 1, kind: input, shape index: {}]
  %s2 = inlined_call_operand.vmem [shape: f32[1,32], index: 2, kind: input, shape index: {}]
  %s3 = inlined_call_operand.vmem [shape: f32[1,32], index: 3, kind: input, shape index: {}]
  %s4 = inlined_call_operand.vmem [shape: f32[1,32], index: 4, kind: input, shape index: {}]
  %s5 = inlined_call_operand.vmem [shape: f32[2,16,1], index: 5, kind: input, shape index: {}]
  %s6 = inlined_call_operand.vmem [shape: f32[2,16,32], index: 6, kind: output, shape index: {}]
  %s7 = sld [smem:[#allocation0]]
  $region57: #{detector_forward.35} parent=0
    _
  %s9 = ssub.s32 1, %s7
  %s10 = scalar_select 0, %s9, %s7
  loop: start=0, step=1, limit=4
  $region2: #{detector_forward.35} parent=0 // loop_pre_header
    _
  $region3: #{detector_forward.35} parent=0 // loop_header
    %s12 = sphi 0, %s16
    %p13 = scmp.ge.s32.totalorder %s12, 4
    %s22 = sphi 0, %s24
    %s25 = sphi 0, %s22
    %s26 = sphi 0, %s25
    %s42 = sphi 0, %s26
    %s46 = sphi 0, %s46
    %s48 = sphi 0, %s46
    %s49 = sphi 0, %s48
    %s63 = sphi 0, %s49
    %s67 = sphi 0, %s67
    %s69 = sphi 0, %s67
    %s70 = sphi 0, %s69
    %s84 = sphi 0, %s70
    %s88 = sphi 0, %s88
    %s90 = sphi 0, %s88
    %s91 = sphi 0, %s90
    %s105 = sphi 0, %s91
    %s109 = sphi 0, %s109
    %s111 = sphi 0, %s109
    %s112 = sphi 0, %s111
    %s126 = sphi 0, %s112
    %s132 = sphi 0, %s134
    %s135 = sphi 0, %s132
    %s136 = sphi 0, %s135
    %s152 = sphi 0, %s136
    %s158 = sphi 0, %s160
    %s161 = sphi 0, %s158
    %s162 = sphi 0, %s161
    %s178 = sphi 0, %s162
  $region4: #{detector_forward.35} parent=0 // loop_header_branch
    %15 = sbr.rel (%p13) target = $region8
  $region5: #{detector_forward.35} parent=0 // loop_body
    %s17 = ssub.s32 %s12, 1
    %s18 = ssub.s32 %s12, 2
    %s19 = sadd.s32 %s12, 1
    %s20 = ssub.s32 %s12, %s19
    %p21 = scmp.eq.s32.totalorder %s20, 0
    %s23 = sadd.s32 %s22, 1
    %s24 = scalar_select %p21, %s22, %s23
    %p27 = pneg %p21
    %p28 = scmp.eq.s32.totalorder %s12, 1
    %p29 = por %p27, %p28
    %p30 = scmp.ne.s32.totalorder %s22, %s25
    %p31 = scmp.eq.s32.totalorder %s12, 0
    %p32 = por %p30, %p31
    %p33 = scmp.ne.s32.totalorder %s22, %s25
    %p34 = scmp.eq.s32.totalorder %s17, 1
    %p35 = por %p33, %p34
    %p36 = scmp.ne.s32.totalorder %s25, %s26
    %p37 = scmp.eq.s32.totalorder %s17, 0
    %p38 = por %p36, %p37
    %p39 = scmp.ne.s32.totalorder %s25, %s26
    %p40 = scmp.eq.s32.totalorder %s18, 1
    %p41 = por %p39, %p40
    %p43 = scmp.ne.s32.totalorder %s26, %s42
    %p44 = scmp.eq.s32.totalorder %s18, 0
    %p45 = por %p43, %p44
    %s47 = sadd.s32 %s46, 1
    %p50 = scmp.eq.s32.totalorder %s12, 1
    %p51 = scmp.ne.s32.totalorder %s46, %s48
    %p52 = scmp.eq.s32.totalorder %s12, 0
    %p53 = por %p51, %p52
    %p54 = scmp.ne.s32.totalorder %s46, %s48
    %p55 = scmp.eq.s32.totalorder %s17, 1
    %p56 = por %p54, %p55
    %p57 = scmp.ne.s32.totalorder %s48, %s49
    %p58 = scmp.eq.s32.totalorder %s17, 0
    %p59 = por %p57, %p58
    %p60 = scmp.ne.s32.totalorder %s48, %s49
    %p61 = scmp.eq.s32.totalorder %s18, 1
    %p62 = por %p60, %p61
    %p64 = scmp.ne.s32.totalorder %s49, %s63
    %p65 = scmp.eq.s32.totalorder %s18, 0
    %p66 = por %p64, %p65
    %s68 = sadd.s32 %s67, 1
    %p71 = scmp.eq.s32.totalorder %s12, 1
    %p72 = scmp.ne.s32.totalorder %s67, %s69
    %p73 = scmp.eq.s32.totalorder %s12, 0
    %p74 = por %p72, %p73
    %p75 = scmp.ne.s32.totalorder %s67, %s69
    %p76 = scmp.eq.s32.totalorder %s17, 1
    %p77 = por %p75, %p76
    %p78 = scmp.ne.s32.totalorder %s69, %s70
    %p79 = scmp.eq.s32.totalorder %s17, 0
    %p80 = por %p78, %p79
    %p81 = scmp.ne.s32.totalorder %s69, %s70
    %p82 = scmp.eq.s32.totalorder %s18, 1
    %p83 = por %p81, %p82
    %p85 = scmp.ne.s32.totalorder %s70, %s84
    %p86 = scmp.eq.s32.totalorder %s18, 0
    %p87 = por %p85, %p86
    %s89 = sadd.s32 %s88, 1
    %p92 = scmp.eq.s32.totalorder %s12, 1
    %p93 = scmp.ne.s32.totalorder %s88, %s90
    %p94 = scmp.eq.s32.totalorder %s12, 0
    %p95 = por %p93, %p94
    %p96 = scmp.ne.s32.totalorder %s88, %s90
    %p97 = scmp.eq.s32.totalorder %s17, 1
    %p98 = por %p96, %p97
    %p99 = scmp.ne.s32.totalorder %s90, %s91
    %p100 = scmp.eq.s32.totalorder %s17, 0
    %p101 = por %p99, %p100
    %p102 = scmp.ne.s32.totalorder %s90, %s91
    %p103 = scmp.eq.s32.totalorder %s18, 1
    %p104 = por %p102, %p103
    %p106 = scmp.ne.s32.totalorder %s91, %s105
    %p107 = scmp.eq.s32.totalorder %s18, 0
    %p108 = por %p106, %p107
    %s110 = sadd.s32 %s109, 1
    %p113 = scmp.eq.s32.totalorder %s12, 1
    %p114 = scmp.ne.s32.totalorder %s109, %s111
    %p115 = scmp.eq.s32.totalorder %s12, 0
    %p116 = por %p114, %p115
    %p117 = scmp.ne.s32.totalorder %s109, %s111
    %p118 = scmp.eq.s32.totalorder %s17, 1
    %p119 = por %p117, %p118
    %p120 = scmp.ne.s32.totalorder %s111, %s112
    %p121 = scmp.eq.s32.totalorder %s17, 0
    %p122 = por %p120, %p121
    %p123 = scmp.ne.s32.totalorder %s111, %s112
    %p124 = scmp.eq.s32.totalorder %s18, 1
    %p125 = por %p123, %p124
    %p127 = scmp.ne.s32.totalorder %s112, %s126
    %p128 = scmp.eq.s32.totalorder %s18, 0
    %p129 = por %p127, %p128
    %s130 = ssub.s32 %s12, %s19
    %p131 = scmp.eq.s32.totalorder %s130, 0
    %s133 = sadd.s32 %s132, 1
    %s134 = scalar_select %p131, %s132, %s133
    %p137 = pneg %p131
    %p138 = scmp.eq.s32.totalorder %s12, 1
    %p139 = por %p137, %p138
    %p140 = scmp.ne.s32.totalorder %s132, %s135
    %p141 = scmp.eq.s32.totalorder %s12, 0
    %p142 = por %p140, %p141
    %p143 = scmp.ne.s32.totalorder %s132, %s135
    %p144 = scmp.eq.s32.totalorder %s17, 1
    %p145 = por %p143, %p144
    %p146 = scmp.ne.s32.totalorder %s135, %s136
    %p147 = scmp.eq.s32.totalorder %s17, 0
    %p148 = por %p146, %p147
    %p149 = scmp.ne.s32.totalorder %s135, %s136
    %p150 = scmp.eq.s32.totalorder %s18, 1
    %p151 = por %p149, %p150
    %p153 = scmp.ne.s32.totalorder %s136, %s152
    %p154 = scmp.eq.s32.totalorder %s18, 0
    %p155 = por %p153, %p154
    %s156 = ssub.s32 %s12, %s19
    %p157 = scmp.eq.s32.totalorder %s156, 0
    %s159 = sadd.s32 %s158, 1
    %s160 = scalar_select %p157, %s158, %s159
    %p163 = pneg %p157
    %p164 = scmp.eq.s32.totalorder %s12, 1
    %p165 = por %p163, %p164
    %p166 = scmp.ne.s32.totalorder %s158, %s161
    %p167 = scmp.eq.s32.totalorder %s12, 0
    %p168 = por %p166, %p167
    %p169 = scmp.ne.s32.totalorder %s158, %s161
    %p170 = scmp.eq.s32.totalorder %s17, 1
    %p171 = por %p169, %p170
    %p172 = scmp.ne.s32.totalorder %s161, %s162
    %p173 = scmp.eq.s32.totalorder %s17, 0
    %p174 = por %p172, %p173
    %p175 = scmp.ne.s32.totalorder %s161, %s162
    %p176 = scmp.eq.s32.totalorder %s18, 1
    %p177 = por %p175, %p176
    %p179 = scmp.ne.s32.totalorder %s162, %s178
    %p180 = scmp.eq.s32.totalorder %s18, 0
    %p181 = por %p179, %p180
    %p182 = scmp.le.s32.totalorder 1, %s12
    %p183 = scmp.lt.s32.totalorder %s12, 3
    %p184 = pnand %p182, %p183
    %p185 = pneg %p184
    // Predicated region
    $region9: #{detector_forward.35} parent=5 // pred_check
      _
    $region10: #{detector_forward.35} parent=5 // pred_check_branch
      %187 = sbr.rel (%p184) target = $region12
    $region11: #{detector_forward.35} parent=5 // pred_region
      %s188 = ssub.s32 %s12, 1
      // Predicated region
      $region13: #{detector_forward.35} parent=11 // pred_check
        %p189 = pneg %p59
      $region14: #{detector_forward.35} parent=11 // pred_check_branch
        %191 = sbr.rel (%p189) target = $region16
      $region15: #{detector_forward.35} parent=11 // pred_region
        _
      $region16: #{detector_forward.35} parent=11 // pred_fallthru
        _
      // Predicated region
      $region17: #{detector_forward.35} parent=11 // pred_check
        %p192 = pneg %p80
      $region18: #{detector_forward.35} parent=11 // pred_check_branch
        %194 = sbr.rel (%p192) target = $region20
      $region19: #{detector_forward.35} parent=11 // pred_region
        _
      $region20: #{detector_forward.35} parent=11 // pred_fallthru
        _
      // Predicated region
      $region21: #{detector_forward.35} parent=11 // pred_check
        %p195 = pneg %p101
      $region22: #{detector_forward.35} parent=11 // pred_check_branch
        %197 = sbr.rel (%p195) target = $region24
      $region23: #{detector_forward.35} parent=11 // pred_region
        _
      $region24: #{detector_forward.35} parent=11 // pred_fallthru
        _
      // Predicated region
      $region25: #{detector_forward.35} parent=11 // pred_check
        %p198 = pneg %p122
      $region26: #{detector_forward.35} parent=11 // pred_check_branch
        %200 = sbr.rel (%p198) target = $region28
      $region27: #{detector_forward.35} parent=11 // pred_region
        _
      $region28: #{detector_forward.35} parent=11 // pred_fallthru
        _
    $region12: #{detector_forward.35} parent=5 // pred_fallthru
      _
    %p201 = scmp.lt.s32.totalorder %s12, 2
    // Predicated region
    $region29: #{detector_forward.35} parent=5 // pred_check
      %p202 = pneg %p201
    $region30: #{detector_forward.35} parent=5 // pred_check_branch
      %204 = sbr.rel (%p202) target = $region32
    $region31: #{detector_forward.35} parent=5 // pred_region
      // Predicated region
      $region33: #{detector_forward.35} parent=31 // pred_check
        %p205 = pneg %p32
      $region34: #{detector_forward.35} parent=31 // pred_check_branch
        %207 = sbr.rel (%p205) target = $region36
      $region35: #{detector_forward.35} parent=31 // pred_region
        %p208 = scmp.lt.s32.totalorder %s12, 1
        %s209 = scalar_select %p208, %s12, 1
        %s210 = smul.addr %s209, 3
        %s211 = smul.addr %s210, 4
        %s212 = scalar_lea.vmem %s0, %s211
      $region36: #{detector_forward.35} parent=31 // pred_fallthru
        _
      // Predicated region
      $region37: #{detector_forward.35} parent=31 // pred_check
        %p213 = pneg %p142
      $region38: #{detector_forward.35} parent=31 // pred_check_branch
        %215 = sbr.rel (%p213) target = $region40
      $region39: #{detector_forward.35} parent=31 // pred_region
        %p216 = scmp.lt.s32.totalorder %s12, 1
        %s217 = scalar_select %p216, %s12, 1
        %s218 = smul.addr %s217, 2
        %s219 = smul.addr %s218, 8
        %s220 = scalar_lea.vmem %s5, %s219
      $region40: #{detector_forward.35} parent=31 // pred_fallthru
        _
    $region32: #{detector_forward.35} parent=5 // pred_fallthru
      _
    %p221 = scmp.le.s32.totalorder 1, %s12
    %p222 = scmp.lt.s32.totalorder %s12, 3
    %p223 = pnand %p221, %p222
    %p224 = pneg %p223
    // Predicated region
    $region41: #{detector_forward.35} parent=5 // pred_check
      _
    $region42: #{detector_forward.35} parent=5 // pred_check_branch
      %226 = sbr.rel (%p223) target = $region44
    $region43: #{detector_forward.35} parent=5 // pred_region
      %s227 = ssub.s32 %s12, 1
      %p228 = scmp.lt.s32.totalorder %s17, 1
      %s229 = scalar_select %p228, %s17, 1
      %s230 = smul.addr %s229, 3
      %s231 = smul.addr %s230, 4
      %s232 = scalar_lea.vmem %s0, %s231
      %p233 = pneg %p38
      %p234 = pneg %p35
      %p235 = pneg %p59
      %p236 = pneg %p56
      %p237 = pneg %p80
      %p238 = pneg %p77
      %p239 = pneg %p101
      %p240 = pneg %p98
      %p241 = pneg %p122
      %p242 = pneg %p119
      %p243 = scmp.lt.s32.totalorder %s17, 1
      %s244 = scalar_select %p243, %s17, 1
      %s245 = smul.addr %s244, 2
      %s246 = smul.addr %s245, 8
      %s247 = scalar_lea.vmem %s5, %s246
      %p248 = pneg %p148
      %p249 = pneg %p145
      %p250 = pneg %p174
      %p251 = pneg %p171
      %p252 = scmp.lt.s32.totalorder %s17, 1
      %s253 = scalar_select %p252, %s17, 1
      %s254 = smul.addr %s253, 2
      %s255 = smul.addr %s254, 8
      %s256 = scalar_lea.vmem %s6, %s255
      %p257 = scmp.lt.s32.totalorder %s17, 1
      %s258 = scalar_select %p257, %s17, 1
      %s259 = smul.addr %s258, 3
      %s260 = smul.addr %s259, 4
      %s261 = scalar_lea.vmem %s0, %s260
      %p262 = scmp.lt.s32.totalorder %s17, 1
      %s263 = scalar_select %p262, %s17, 1
      %s264 = smul.addr %s263, 2
      %s265 = smul.addr %s264, 8
      %s266 = scalar_lea.vmem %s5, %s265
      %p267 = scmp.lt.s32.totalorder %s17, 1
      %s268 = scalar_select %p267, %s17, 1
      %s269 = smul.addr %s268, 2
      %s270 = smul.addr %s269, 8
      %s271 = scalar_lea.vmem %s6, %s270
      %v273 = vld [vmem:[%s261] sm:$0xf]
      %v274 = vld [vmem:[%s261 + $0x4] sm:$0xf]
      %v275 = vld [vmem:[%s1] sm:$0xf]
      %v276 = vld [vmem:[%s1 + $0x4] sm:$0xf]
      %v277 = vld [vmem:[%s1 + $0x8] sm:$0xf]
      %v278 = vld [vmem:[%s1 + $0xc] sm:$0xf]
      %v279 = vld [vmem:[%s261 + $0x8] sm:$0x1]
      %s280 = scalar_lea.vmem %s1, 16
      %v281 = vld [vmem:[%s280] sm:$0xf]
      %v282 = vld [vmem:[%s280 + $0x4] sm:$0xf]
      %v283 = vld [vmem:[%s280 + $0x8] sm:$0xf]
      %v284 = vld [vmem:[%s280 + $0xc] sm:$0xf]
      %v288 = vunpack.c.l.b16 %v273
      %v289 = vunpack.c.l.b16 %v274
      %v290 = vunpack.c.l.b16 %v279
      %v291 = vpack.c.b16 %v289, %v288
      %v292 = vpack.c.b16 %v290, %v290
      %vm293 = vsmask.f32 7424
      %v295 = vshrl.u32 %v291, 16
      %v297 = vshll.u32 %v291, 16
      %v299 = vrot.slane %v297, 1
      %v300 = vor.u32 %v295, %v299
      %v302 = vshll.u32 %v292, 16
      %v304 = vrot.slane %v302, 1
      %v305 = vsel %vm293, %v300, %v304
      %v310 = vunpack.c.l.b16 %v281
      %v311 = vunpack.c.l.b16 %v282
      %v312 = vunpack.c.l.b16 %v283
      %v313 = vunpack.c.l.b16 %v284
      %v314 = vpack.c.b16 %v311, %v310
      %v315 = vpack.c.b16 %v313, %v312
      %vm318 = vcmask 261120
      %v320 = vsel %vm318, %v305, 0
      %322 = vmatprep.subr.bf16.mxu0 0
      %323 = vmatpush1.bf16.msra.mxu0 0
      %324 = vmatprep.subr.bf16.mxu0 0
      %325 = vmatpush1.bf16.msra.mxu0 0
      %326 = vmatprep.subr.bf16.mxu0 0
      %327 = vmatpush1.bf16.msra.mxu0 0
      %328 = vmatprep.subr.bf16.mxu0 0
      %329 = vmatpush1.bf16.msra.mxu0 0
      %330 = vmatprep.subr.bf16.mxu0 0
      %331 = vmatpush1.bf16.msra.mxu0 0
      %332 = vmatprep.subr.bf16.mxu0 0
      %333 = vmatpush1.bf16.msra.mxu0 0
      %334 = vmatprep.subr.bf16.mxu0 0
      %335 = vmatpush1.bf16.msra.mxu0 %v315
      %336 = vmatprep.subr.bf16.mxu0 0
      %337 = vmatpush1.bf16.msra.mxu0 %v314
      %338 = vmatprep.subr.bf16.mxu0 0
      %339 = vmatpush2.bf16.msra.mxu0 0
      %340 = vmatprep.subr.bf16.mxu0 0
      %341 = vmatpush2.bf16.msra.mxu0 0
      %342 = vmatprep.subr.bf16.mxu0 0
      %343 = vmatpush2.bf16.msra.mxu0 0
      %344 = vmatprep.subr.bf16.mxu0 0
      %345 = vmatpush2.bf16.msra.mxu0 0
      %346 = vmatprep.subr.bf16.mxu0 0
      %347 = vmatpush2.bf16.msra.mxu0 0
      %348 = vmatprep.subr.bf16.mxu0 0
      %349 = vmatpush2.bf16.msra.mxu0 0
      %350 = vmatprep.subr.bf16.mxu0 0
      %351 = vmatpush2.bf16.msra.mxu0 0
      %352 = vmatprep.subr.bf16.mxu0 0
      %353 = vmatpush2.bf16.msra.mxu0 0
      %354 = vmatprep.mubr.bf16.mxu0 0
      %355 = vmatmul.mubr.bf16.gmra.mxu0 %v320
      %v356 = vpop.f32.mrf.mxu0
      %v357 = vadd.f32 0.0, %v356
      %v358 = vpop.f32.mrf.mxu0
      %v359 = vpop.f32.mrf.mxu0
      %v360 = vadd.f32 0.0, %v359
      %v361 = vpop.f32.mrf.mxu0
      %362 = vdwg.mxu0
      %v367 = vunpack.c.l.b16 %v275
      %v368 = vunpack.c.l.b16 %v276
      %v369 = vunpack.c.l.b16 %v277
      %v370 = vunpack.c.l.b16 %v278
      %v371 = vpack.c.b16 %v368, %v367
      %v372 = vpack.c.b16 %v370, %v369
      %v375 = vsel %vm318, %v291, 0
      %377 = vmatprep.subr.bf16.mxu0 0
      %378 = vmatpush1.bf16.msra.mxu0 0
      %379 = vmatprep.subr.bf16.mxu0 0
      %380 = vmatpush1.bf16.msra.mxu0 0
      %381 = vmatprep.subr.bf16.mxu0 0
      %382 = vmatpush1.bf16.msra.mxu0 0
      %383 = vmatprep.subr.bf16.mxu0 0
      %384 = vmatpush1.bf16.msra.mxu0 0
      %385 = vmatprep.subr.bf16.mxu0 0
      %386 = vmatpush1.bf16.msra.mxu0 0
      %387 = vmatprep.subr.bf16.mxu0 0
      %388 = vmatpush1.bf16.msra.mxu0 0
      %389 = vmatprep.subr.bf16.mxu0 0
      %390 = vmatpush1.bf16.msra.mxu0 %v372
      %391 = vmatprep.subr.bf16.mxu0 0
      %392 = vmatpush1.bf16.msra.mxu0 %v371
      %393 = vmatprep.subr.bf16.mxu0 0
      %394 = vmatpush2.bf16.msra.mxu0 0
      %395 = vmatprep.subr.bf16.mxu0 0
      %396 = vmatpush2.bf16.msra.mxu0 0
      %397 = vmatprep.subr.bf16.mxu0 0
      %398 = vmatpush2.bf16.msra.mxu0 0
      %399 = vmatprep.subr.bf16.mxu0 0
      %400 = vmatpush2.bf16.msra.mxu0 0
      %401 = vmatprep.subr.bf16.mxu0 0
      %402 = vmatpush2.bf16.msra.mxu0 0
      %403 = vmatprep.subr.bf16.mxu0 0
      %404 = vmatpush2.bf16.msra.mxu0 0
      %405 = vmatprep.subr.bf16.mxu0 0
      %406 = vmatpush2.bf16.msra.mxu0 0
      %407 = vmatprep.subr.bf16.mxu0 0
      %408 = vmatpush2.bf16.msra.mxu0 0
      %409 = vmatprep.mubr.bf16.mxu0 0
      %410 = vmatmul.mubr.bf16.gmra.mxu0 %v375
      %v411 = vpop.f32.mrf.mxu0
      %v412 = vadd.f32 %v357, %v411
      %v413 = vpop.f32.mrf.mxu0
      %v414 = vpop.f32.mrf.mxu0
      %v415 = vadd.f32 %v360, %v414
      %v416 = vpop.f32.mrf.mxu0
      %417 = vdwg.mxu0
      %v418 = vld [vmem:[%s261] sm:$0xe]
      %s419 = scalar_lea.vmem %s1, 32
      %v420 = vld [vmem:[%s419] sm:$0xf]
      %v421 = vld [vmem:[%s419 + $0x4] sm:$0xf]
      %v422 = vld [vmem:[%s419 + $0x8] sm:$0xf]
      %v423 = vld [vmem:[%s419 + $0xc] sm:$0xf]
      %v425 = vunpack.c.l.b16 %v418
      %v426 = vpack.c.b16 %v289, %v425
      %vm427 = vcmask 1046528
      %v428 = vrot.slane %v426, 1
      %v429 = vrot.slane %v292, 1
      %v430 = vsel %vm427, %v428, %v429
      %v435 = vunpack.c.l.b16 %v420
      %v436 = vunpack.c.l.b16 %v421
      %v437 = vunpack.c.l.b16 %v422
      %v438 = vunpack.c.l.b16 %v423
      %v439 = vpack.c.b16 %v436, %v435
      %v440 = vpack.c.b16 %v438, %v437
      %v444 = vsel %vm318, %v430, 0
      %446 = vmatprep.subr.bf16.mxu0 0
      %447 = vmatpush1.bf16.msra.mxu0 0
      %448 = vmatprep.subr.bf16.mxu0 0
      %449 = vmatpush1.bf16.msra.mxu0 0
      %450 = vmatprep.subr.bf16.mxu0 0
      %451 = vmatpush1.bf16.msra.mxu0 0
      %452 = vmatprep.subr.bf16.mxu0 0
      %453 = vmatpush1.bf16.msra.mxu0 0
      %454 = vmatprep.subr.bf16.mxu0 0
      %455 = vmatpush1.bf16.msra.mxu0 0
      %456 = vmatprep.subr.bf16.mxu0 0
      %457 = vmatpush1.bf16.msra.mxu0 0
      %458 = vmatprep.subr.bf16.mxu0 0
      %459 = vmatpush1.bf16.msra.mxu0 %v440
      %460 = vmatprep.subr.bf16.mxu0 0
      %461 = vmatpush1.bf16.msra.mxu0 %v439
      %462 = vmatprep.subr.bf16.mxu0 0
      %463 = vmatpush2.bf16.msra.mxu0 0
      %464 = vmatprep.subr.bf16.mxu0 0
      %465 = vmatpush2.bf16.msra.mxu0 0
      %466 = vmatprep.subr.bf16.mxu0 0
      %467 = vmatpush2.bf16.msra.mxu0 0
      %468 = vmatprep.subr.bf16.mxu0 0
      %469 = vmatpush2.bf16.msra.mxu0 0
      %470 = vmatprep.subr.bf16.mxu0 0
      %471 = vmatpush2.bf16.msra.mxu0 0
      %472 = vmatprep.subr.bf16.mxu0 0
      %473 = vmatpush2.bf16.msra.mxu0 0
      %474 = vmatprep.subr.bf16.mxu0 0
      %475 = vmatpush2.bf16.msra.mxu0 0
      %476 = vmatprep.subr.bf16.mxu0 0
      %477 = vmatpush2.bf16.msra.mxu0 0
      %478 = vmatprep.mubr.bf16.mxu0 0
      %479 = vmatmul.mubr.bf16.gmra.mxu0 %v444
      %v480 = vpop.f32.mrf.mxu0
      %v481 = vadd.f32 0.0, %v480
      %v482 = vpop.f32.mrf.mxu0
      %v483 = vpop.f32.mrf.mxu0
      %v484 = vadd.f32 0.0, %v483
      %v485 = vpop.f32.mrf.mxu0
      %486 = vdwg.mxu0
      %v487 = vadd.f32 %v412, %v481
      %v488 = vadd.f32 %v415, %v484
      %v489 = vld [vmem:[%s2] sm:$0x1]
      %v491 = vlaneseq
      %v492 = vshrl.u32 %v491, 7
      %v493 = vsub.s32 0, %v492
      %v494 = vrot.slane %v489, %v493
      %v496 = vadd.f32 %v487, %v494
      %v497 = vadd.f32 %v488, %v494
      %v498 = vsel %vm318, %v496, 0.0
      %499 = vadd.xlane.f32.xlu0 %v498
      %v500 = vpop.xlane.xlu0 %499
      %v501 = vsel %vm318, %v497, 0.0
      %502 = vadd.xlane.f32.xlu0 %v501
      %v503 = vpop.xlane.xlu0 %502
      %v504 = vrcp.pop 32.0
      %v505 = vmul.f32 %v500, %v504
      %v506 = vmul.f32 %v503, %v504
      %v507 = vsub.f32 %v496, %v505
      %v508 = vsub.f32 %v497, %v506
      %v509 = vmul.f32 %v507, %v507
      %v510 = vmul.f32 %v508, %v508
      %v511 = vsel %vm318, %v509, 0.0
      %512 = vadd.xlane.f32.xlu0 %v511
      %v513 = vpop.xlane.xlu0 %512
      %v514 = vsel %vm318, %v510, 0.0
      %515 = vadd.xlane.f32.xlu0 %v514
      %v516 = vpop.xlane.xlu0 %515
      %v517 = vmul.f32 %v513, %v504
      %v518 = vmul.f32 %v516, %v504
      %v519 = vadd.f32 %v517, 1e-05
      %v520 = vadd.f32 %v518, 1e-05
      %v521 = vrsqrt.pop %v519
      %v522 = vrsqrt.pop %v520
      %v523 = vmul.f32 %v507, %v521
      %v524 = vmul.f32 %v508, %v522
      %v525 = vld [vmem:[%s3] sm:$0x1]
      %v527 = vlaneseq
      %v528 = vshrl.u32 %v527, 7
      %v529 = vsub.s32 0, %v528
      %v530 = vrot.slane %v525, %v529
      %v532 = vmul.f32 %v523, %v530
      %v533 = vmul.f32 %v524, %v530
      %v534 = vld [vmem:[%s4] sm:$0x1]
      %v536 = vlaneseq
      %v537 = vshrl.u32 %v536, 7
      %v538 = vsub.s32 0, %v537
      %v539 = vrot.slane %v534, %v538
      %v541 = vadd.f32 %v532, %v539
      %v542 = vadd.f32 %v533, %v539
      %v543 = vmax.f32 %v541, 0.0
      %v544 = vmax.f32 %v542, 0.0
      %v545 = vld [vmem:[%s266] sm:$0xff]
      %v546 = vld [vmem:[%s266 + $0x8] sm:$0xff]
      %548 = vset.pattern.permute.xlu0 0
      %549 = vperm.xlu0 %548, %v545
      %v550 = vpop.permute.xlu0 %549
      %553 = vset.pattern.permute.xlu0 0
      %554 = vperm.xlu0 %553, %v546
      %v555 = vpop.permute.xlu0 %554
      %v557 = vmul.f32 %v543, %v550
      %v558 = vmul.f32 %v544, %v555
      %559 = vst.msk [vmem:[%s271] sm:$0xff] %vm318, %v557
      %560 = vst.msk [vmem:[%s271 + $0x8] sm:$0xff] %vm318, %v558
      %p561 = scmp.lt.s32.totalorder %s17, 1
      %s562 = scalar_select %p561, %s17, 1
      %s563 = smul.addr %s562, 2
      %s564 = smul.addr %s563, 8
      %s565 = scalar_lea.vmem %s6, %s564
      // Predicated region
      $region45: #{detector_forward.35} parent=43 // pred_check
        %p566 = pneg %p171
      $region46: #{detector_forward.35} parent=43 // pred_check_branch
        %568 = sbr.rel (%p566) target = $region48
      $region47: #{detector_forward.35} parent=43 // pred_region
        _
      $region48: #{detector_forward.35} parent=43 // pred_fallthru
        _
    $region44: #{detector_forward.35} parent=5 // pred_fallthru
      _
    %p569 = scmp.le.s32.totalorder 2, %s12
    // Predicated region
    $region49: #{detector_forward.35} parent=5 // pred_check
      %p570 = pneg %p569
    $region50: #{detector_forward.35} parent=5 // pred_check_branch
      %572 = sbr.rel (%p570) target = $region52
    $region51: #{detector_forward.35} parent=5 // pred_region
      %s573 = ssub.s32 %s12, 2
      // Predicated region
      $region53: #{detector_forward.35} parent=51 // pred_check
        %p574 = pneg %p177
      $region54: #{detector_forward.35} parent=51 // pred_check_branch
        %576 = sbr.rel (%p574) target = $region56
      $region55: #{detector_forward.35} parent=51 // pred_region
        %p577 = scmp.lt.s32.totalorder %s18, 1
        %s578 = scalar_select %p577, %s18, 1
        %s579 = smul.addr %s578, 2
        %s580 = smul.addr %s579, 8
        %s581 = scalar_lea.vmem %s6, %s580
      $region56: #{detector_forward.35} parent=51 // pred_fallthru
        _
    $region52: #{detector_forward.35} parent=5 // pred_fallthru
      _
  $region6: #{detector_forward.35} parent=0 // loop_footer
    %s16 = sadd.s32 1, %s12
  $region7: #{detector_forward.35} parent=0 // loop_footer_branch
    %11 = sbr.rel target = $region3
  $region8: #{detector_forward.35} parent=0 // loop_exit
    _

// kernel: detector_forward.37
$region0: #{detector_forward.37}
  #allocation0 [shape = 'u32[]', space=smem, size = 0x4, offset = 0x4, fixed_abs, tag = 'smem constant byte address 0x4 - core index']
  #allocation1 [shape = 'u32[144,128]{1,0:T(1,128)}', space=vmem, size = 0x12000, scoped, tag = 'internal scratch']
  %s0 = inlined_call_operand.vmem [shape: bf16[2,18,32], index: 0, kind: input, shape index: {}]
  %s1 = inlined_call_operand.vmem [shape: bf16[3,32,128], index: 1, kind: input, shape index: {}]
  %s2 = inlined_call_operand.vmem [shape: f32[1,128], index: 2, kind: input, shape index: {}]
  %s3 = inlined_call_operand.vmem [shape: f32[2,16,128], index: 3, kind: output, shape index: {}]
  %s4 = sld [smem:[#allocation0]]
  $region45: #{detector_forward.37} parent=0
    _
  %s6 = ssub.s32 1, %s4
  %s7 = scalar_select 0, %s6, %s4
  loop: start=0, step=1, limit=4
  $region2: #{detector_forward.37} parent=0 // loop_pre_header
    _
  $region3: #{detector_forward.37} parent=0 // loop_header
    %s9 = sphi 0, %s13
    %p10 = scmp.ge.s32.totalorder %s9, 4
    %s19 = sphi 0, %s21
    %s22 = sphi 0, %s19
    %s23 = sphi 0, %s22
    %s39 = sphi 0, %s23
    %s43 = sphi 0, %s43
    %s45 = sphi 0, %s43
    %s46 = sphi 0, %s45
    %s60 = sphi 0, %s46
    %s64 = sphi 0, %s64
    %s66 = sphi 0, %s64
    %s67 = sphi 0, %s66
    %s81 = sphi 0, %s67
    %s87 = sphi 0, %s89
    %s90 = sphi 0, %s87
    %s91 = sphi 0, %s90
    %s107 = sphi 0, %s91
  $region4: #{detector_forward.37} parent=0 // loop_header_branch
    %12 = sbr.rel (%p10) target = $region8
  $region5: #{detector_forward.37} parent=0 // loop_body
    %s14 = ssub.s32 %s9, 1
    %s15 = ssub.s32 %s9, 2
    %s16 = sadd.s32 %s9, 1
    %s17 = ssub.s32 %s9, %s16
    %p18 = scmp.eq.s32.totalorder %s17, 0
    %s20 = sadd.s32 %s19, 1
    %s21 = scalar_select %p18, %s19, %s20
    %p24 = pneg %p18
    %p25 = scmp.eq.s32.totalorder %s9, 1
    %p26 = por %p24, %p25
    %p27 = scmp.ne.s32.totalorder %s19, %s22
    %p28 = scmp.eq.s32.totalorder %s9, 0
    %p29 = por %p27, %p28
    %p30 = scmp.ne.s32.totalorder %s19, %s22
    %p31 = scmp.eq.s32.totalorder %s14, 1
    %p32 = por %p30, %p31
    %p33 = scmp.ne.s32.totalorder %s22, %s23
    %p34 = scmp.eq.s32.totalorder %s14, 0
    %p35 = por %p33, %p34
    %p36 = scmp.ne.s32.totalorder %s22, %s23
    %p37 = scmp.eq.s32.totalorder %s15, 1
    %p38 = por %p36, %p37
    %p40 = scmp.ne.s32.totalorder %s23, %s39
    %p41 = scmp.eq.s32.totalorder %s15, 0
    %p42 = por %p40, %p41
    %s44 = sadd.s32 %s43, 1
    %p47 = scmp.eq.s32.totalorder %s9, 1
    %p48 = scmp.ne.s32.totalorder %s43, %s45
    %p49 = scmp.eq.s32.totalorder %s9, 0
    %p50 = por %p48, %p49
    %p51 = scmp.ne.s32.totalorder %s43, %s45
    %p52 = scmp.eq.s32.totalorder %s14, 1
    %p53 = por %p51, %p52
    %p54 = scmp.ne.s32.totalorder %s45, %s46
    %p55 = scmp.eq.s32.totalorder %s14, 0
    %p56 = por %p54, %p55
    %p57 = scmp.ne.s32.totalorder %s45, %s46
    %p58 = scmp.eq.s32.totalorder %s15, 1
    %p59 = por %p57, %p58
    %p61 = scmp.ne.s32.totalorder %s46, %s60
    %p62 = scmp.eq.s32.totalorder %s15, 0
    %p63 = por %p61, %p62
    %s65 = sadd.s32 %s64, 1
    %p68 = scmp.eq.s32.totalorder %s9, 1
    %p69 = scmp.ne.s32.totalorder %s64, %s66
    %p70 = scmp.eq.s32.totalorder %s9, 0
    %p71 = por %p69, %p70
    %p72 = scmp.ne.s32.totalorder %s64, %s66
    %p73 = scmp.eq.s32.totalorder %s14, 1
    %p74 = por %p72, %p73
    %p75 = scmp.ne.s32.totalorder %s66, %s67
    %p76 = scmp.eq.s32.totalorder %s14, 0
    %p77 = por %p75, %p76
    %p78 = scmp.ne.s32.totalorder %s66, %s67
    %p79 = scmp.eq.s32.totalorder %s15, 1
    %p80 = por %p78, %p79
    %p82 = scmp.ne.s32.totalorder %s67, %s81
    %p83 = scmp.eq.s32.totalorder %s15, 0
    %p84 = por %p82, %p83
    %s85 = ssub.s32 %s9, %s16
    %p86 = scmp.eq.s32.totalorder %s85, 0
    %s88 = sadd.s32 %s87, 1
    %s89 = scalar_select %p86, %s87, %s88
    %p92 = pneg %p86
    %p93 = scmp.eq.s32.totalorder %s9, 1
    %p94 = por %p92, %p93
    %p95 = scmp.ne.s32.totalorder %s87, %s90
    %p96 = scmp.eq.s32.totalorder %s9, 0
    %p97 = por %p95, %p96
    %p98 = scmp.ne.s32.totalorder %s87, %s90
    %p99 = scmp.eq.s32.totalorder %s14, 1
    %p100 = por %p98, %p99
    %p101 = scmp.ne.s32.totalorder %s90, %s91
    %p102 = scmp.eq.s32.totalorder %s14, 0
    %p103 = por %p101, %p102
    %p104 = scmp.ne.s32.totalorder %s90, %s91
    %p105 = scmp.eq.s32.totalorder %s15, 1
    %p106 = por %p104, %p105
    %p108 = scmp.ne.s32.totalorder %s91, %s107
    %p109 = scmp.eq.s32.totalorder %s15, 0
    %p110 = por %p108, %p109
    %p111 = scmp.le.s32.totalorder 1, %s9
    %p112 = scmp.lt.s32.totalorder %s9, 3
    %p113 = pnand %p111, %p112
    %p114 = pneg %p113
    // Predicated region
    $region9: #{detector_forward.37} parent=5 // pred_check
      _
    $region10: #{detector_forward.37} parent=5 // pred_check_branch
      %116 = sbr.rel (%p113) target = $region12
    $region11: #{detector_forward.37} parent=5 // pred_region
      %s117 = ssub.s32 %s9, 1
      // Predicated region
      $region13: #{detector_forward.37} parent=11 // pred_check
        %p118 = pneg %p56
      $region14: #{detector_forward.37} parent=11 // pred_check_branch
        %120 = sbr.rel (%p118) target = $region16
      $region15: #{detector_forward.37} parent=11 // pred_region
        _
      $region16: #{detector_forward.37} parent=11 // pred_fallthru
        _
      // Predicated region
      $region17: #{detector_forward.37} parent=11 // pred_check
        %p121 = pneg %p77
      $region18: #{detector_forward.37} parent=11 // pred_check_branch
        %123 = sbr.rel (%p121) target = $region20
      $region19: #{detector_forward.37} parent=11 // pred_region
        _
      $region20: #{detector_forward.37} parent=11 // pred_fallthru
        _
    $region12: #{detector_forward.37} parent=5 // pred_fallthru
      _
    %p124 = scmp.lt.s32.totalorder %s9, 2
    // Predicated region
    $region21: #{detector_forward.37} parent=5 // pred_check
      %p125 = pneg %p124
    $region22: #{detector_forward.37} parent=5 // pred_check_branch
      %127 = sbr.rel (%p125) target = $region24
    $region23: #{detector_forward.37} parent=5 // pred_region
      // Predicated region
      $region25: #{detector_forward.37} parent=23 // pred_check
        %p128 = pneg %p29
      $region26: #{detector_forward.37} parent=23 // pred_check_branch
        %130 = sbr.rel (%p128) target = $region28
      $region27: #{detector_forward.37} parent=23 // pred_region
        %p131 = scmp.lt.s32.totalorder %s9, 1
        %s132 = scalar_select %p131, %s9, 1
        %s133 = smul.addr %s132, 3
        %s134 = smul.addr %s133, 4
        %s135 = scalar_lea.vmem %s0, %s134
      $region28: #{detector_forward.37} parent=23 // pred_fallthru
        _
    $region24: #{detector_forward.37} parent=5 // pred_fallthru
      _
    %p136 = scmp.le.s32.totalorder 1, %s9
    %p137 = scmp.lt.s32.totalorder %s9, 3
    %p138 = pnand %p136, %p137
    %p139 = pneg %p138
    // Predicated region
    $region29: #{detector_forward.37} parent=5 // pred_check
      _
    $region30: #{detector_forward.37} parent=5 // pred_check_branch
      %141 = sbr.rel (%p138) target = $region32
    $region31: #{detector_forward.37} parent=5 // pred_region
      %s142 = ssub.s32 %s9, 1
      %p143 = scmp.lt.s32.totalorder %s14, 1
      %s144 = scalar_select %p143, %s14, 1
      %s145 = smul.addr %s144, 3
      %s146 = smul.addr %s145, 4
      %s147 = scalar_lea.vmem %s0, %s146
      %p148 = pneg %p35
      %p149 = pneg %p32
      %p150 = pneg %p56
      %p151 = pneg %p53
      %p152 = pneg %p77
      %p153 = pneg %p74
      %p154 = pneg %p103
      %p155 = pneg %p100
      %p156 = scmp.lt.s32.totalorder %s14, 1
      %s157 = scalar_select %p156, %s14, 1
      %s158 = smul.addr %s157, 2
      %s159 = smul.addr %s158, 8
      %s160 = scalar_lea.vmem %s3, %s159
      %p161 = scmp.lt.s32.totalorder %s14, 1
      %s162 = scalar_select %p161, %s14, 1
      %s163 = smul.addr %s162, 3
      %s164 = smul.addr %s163, 4
      %s165 = scalar_lea.vmem %s0, %s164
      %p166 = scmp.lt.s32.totalorder %s14, 1
      %s167 = scalar_select %p166, %s14, 1
      %s168 = smul.addr %s167, 2
      %s169 = smul.addr %s168, 8
      %s170 = scalar_lea.vmem %s3, %s169
      %v172 = vld [vmem:[%s165] sm:$0xf]
      %v173 = vld [vmem:[%s165 + $0x4] sm:$0xf]
      %v174 = vld [vmem:[%s1] sm:$0xf]
      %v175 = vld [vmem:[%s1 + $0x4] sm:$0xf]
      %v176 = vld [vmem:[%s1 + $0x8] sm:$0xf]
      %v177 = vld [vmem:[%s1 + $0xc] sm:$0xf]
      %v178 = vld [vmem:[%s165 + $0x8] sm:$0x1]
      %s179 = scalar_lea.vmem %s1, 16
      %v180 = vld [vmem:[%s179] sm:$0xf]
      %v181 = vld [vmem:[%s179 + $0x4] sm:$0xf]
      %v182 = vld [vmem:[%s179 + $0x8] sm:$0xf]
      %v183 = vld [vmem:[%s179 + $0xc] sm:$0xf]
      %v187 = vunpack.c.l.b16 %v172
      %v188 = vunpack.c.l.b16 %v173
      %v189 = vunpack.c.l.b16 %v178
      %v190 = vpack.c.b16 %v188, %v187
      %v191 = vpack.c.b16 %v189, %v189
      %vm192 = vsmask.f32 7424
      %v194 = vshrl.u32 %v190, 16
      %v196 = vshll.u32 %v190, 16
      %v198 = vrot.slane %v196, 1
      %v199 = vor.u32 %v194, %v198
      %v201 = vshll.u32 %v191, 16
      %v203 = vrot.slane %v201, 1
      %v204 = vsel %vm192, %v199, %v203
      %v209 = vunpack.c.l.b16 %v180
      %v210 = vunpack.c.l.b16 %v181
      %v211 = vunpack.c.l.b16 %v182
      %v212 = vunpack.c.l.b16 %v183
      %v213 = vpack.c.b16 %v210, %v209
      %v214 = vpack.c.b16 %v212, %v211
      %vm217 = vcmask 261120
      %v219 = vsel %vm217, %v204, 0
      %221 = vmatprep.subr.bf16.mxu0 0
      %222 = vmatpush1.bf16.msra.mxu0 0
      %223 = vmatprep.subr.bf16.mxu0 0
      %224 = vmatpush1.bf16.msra.mxu0 0
      %225 = vmatprep.subr.bf16.mxu0 0
      %226 = vmatpush1.bf16.msra.mxu0 0
      %227 = vmatprep.subr.bf16.mxu0 0
      %228 = vmatpush1.bf16.msra.mxu0 0
      %229 = vmatprep.subr.bf16.mxu0 0
      %230 = vmatpush1.bf16.msra.mxu0 0
      %231 = vmatprep.subr.bf16.mxu0 0
      %232 = vmatpush1.bf16.msra.mxu0 0
      %233 = vmatprep.subr.bf16.mxu0 0
      %234 = vmatpush1.bf16.msra.mxu0 %v214
      %235 = vmatprep.subr.bf16.mxu0 0
      %236 = vmatpush1.bf16.msra.mxu0 %v213
      %237 = vmatprep.subr.bf16.mxu0 0
      %238 = vmatpush2.bf16.msra.mxu0 0
      %239 = vmatprep.subr.bf16.mxu0 0
      %240 = vmatpush2.bf16.msra.mxu0 0
      %241 = vmatprep.subr.bf16.mxu0 0
      %242 = vmatpush2.bf16.msra.mxu0 0
      %243 = vmatprep.subr.bf16.mxu0 0
      %244 = vmatpush2.bf16.msra.mxu0 0
      %245 = vmatprep.subr.bf16.mxu0 0
      %246 = vmatpush2.bf16.msra.mxu0 0
      %247 = vmatprep.subr.bf16.mxu0 0
      %248 = vmatpush2.bf16.msra.mxu0 0
      %249 = vmatprep.subr.bf16.mxu0 0
      %250 = vmatpush2.bf16.msra.mxu0 0
      %251 = vmatprep.subr.bf16.mxu0 0
      %252 = vmatpush2.bf16.msra.mxu0 0
      %253 = vmatprep.mubr.bf16.mxu0 0
      %254 = vmatmul.mubr.bf16.gmra.mxu0 %v219
      %v255 = vpop.f32.mrf.mxu0
      %v256 = vadd.f32 0.0, %v255
      %v257 = vpop.f32.mrf.mxu0
      %v258 = vpop.f32.mrf.mxu0
      %v259 = vadd.f32 0.0, %v258
      %v260 = vpop.f32.mrf.mxu0
      %261 = vdwg.mxu0
      %v266 = vunpack.c.l.b16 %v174
      %v267 = vunpack.c.l.b16 %v175
      %v268 = vunpack.c.l.b16 %v176
      %v269 = vunpack.c.l.b16 %v177
      %v270 = vpack.c.b16 %v267, %v266
      %v271 = vpack.c.b16 %v269, %v268
      %v274 = vsel %vm217, %v190, 0
      %276 = vmatprep.subr.bf16.mxu0 0
      %277 = vmatpush1.bf16.msra.mxu0 0
      %278 = vmatprep.subr.bf16.mxu0 0
      %279 = vmatpush1.bf16.msra.mxu0 0
      %280 = vmatprep.subr.bf16.mxu0 0
      %281 = vmatpush1.bf16.msra.mxu0 0
      %282 = vmatprep.subr.bf16.mxu0 0
      %283 = vmatpush1.bf16.msra.mxu0 0
      %284 = vmatprep.subr.bf16.mxu0 0
      %285 = vmatpush1.bf16.msra.mxu0 0
      %286 = vmatprep.subr.bf16.mxu0 0
      %287 = vmatpush1.bf16.msra.mxu0 0
      %288 = vmatprep.subr.bf16.mxu0 0
      %289 = vmatpush1.bf16.msra.mxu0 %v271
      %290 = vmatprep.subr.bf16.mxu0 0
      %291 = vmatpush1.bf16.msra.mxu0 %v270
      %292 = vmatprep.subr.bf16.mxu0 0
      %293 = vmatpush2.bf16.msra.mxu0 0
      %294 = vmatprep.subr.bf16.mxu0 0
      %295 = vmatpush2.bf16.msra.mxu0 0
      %296 = vmatprep.subr.bf16.mxu0 0
      %297 = vmatpush2.bf16.msra.mxu0 0
      %298 = vmatprep.subr.bf16.mxu0 0
      %299 = vmatpush2.bf16.msra.mxu0 0
      %300 = vmatprep.subr.bf16.mxu0 0
      %301 = vmatpush2.bf16.msra.mxu0 0
      %302 = vmatprep.subr.bf16.mxu0 0
      %303 = vmatpush2.bf16.msra.mxu0 0
      %304 = vmatprep.subr.bf16.mxu0 0
      %305 = vmatpush2.bf16.msra.mxu0 0
      %306 = vmatprep.subr.bf16.mxu0 0
      %307 = vmatpush2.bf16.msra.mxu0 0
      %308 = vmatprep.mubr.bf16.mxu0 0
      %309 = vmatmul.mubr.bf16.gmra.mxu0 %v274
      %v310 = vpop.f32.mrf.mxu0
      %v311 = vadd.f32 %v256, %v310
      %v312 = vpop.f32.mrf.mxu0
      %v313 = vpop.f32.mrf.mxu0
      %v314 = vadd.f32 %v259, %v313
      %v315 = vpop.f32.mrf.mxu0
      %316 = vdwg.mxu0
      %v317 = vld [vmem:[%s165] sm:$0xe]
      %s318 = scalar_lea.vmem %s1, 32
      %v319 = vld [vmem:[%s318] sm:$0xf]
      %v320 = vld [vmem:[%s318 + $0x4] sm:$0xf]
      %v321 = vld [vmem:[%s318 + $0x8] sm:$0xf]
      %v322 = vld [vmem:[%s318 + $0xc] sm:$0xf]
      %v324 = vunpack.c.l.b16 %v317
      %v325 = vpack.c.b16 %v188, %v324
      %vm326 = vcmask 1046528
      %v327 = vrot.slane %v325, 1
      %v328 = vrot.slane %v191, 1
      %v329 = vsel %vm326, %v327, %v328
      %v334 = vunpack.c.l.b16 %v319
      %v335 = vunpack.c.l.b16 %v320
      %v336 = vunpack.c.l.b16 %v321
      %v337 = vunpack.c.l.b16 %v322
      %v338 = vpack.c.b16 %v335, %v334
      %v339 = vpack.c.b16 %v337, %v336
      %v343 = vsel %vm217, %v329, 0
      %345 = vmatprep.subr.bf16.mxu0 0
      %346 = vmatpush1.bf16.msra.mxu0 0
      %347 = vmatprep.subr.bf16.mxu0 0
      %348 = vmatpush1.bf16.msra.mxu0 0
      %349 = vmatprep.subr.bf16.mxu0 0
      %350 = vmatpush1.bf16.msra.mxu0 0
      %351 = vmatprep.subr.bf16.mxu0 0
      %352 = vmatpush1.bf16.msra.mxu0 0
      %353 = vmatprep.subr.bf16.mxu0 0
      %354 = vmatpush1.bf16.msra.mxu0 0
      %355 = vmatprep.subr.bf16.mxu0 0
      %356 = vmatpush1.bf16.msra.mxu0 0
      %357 = vmatprep.subr.bf16.mxu0 0
      %358 = vmatpush1.bf16.msra.mxu0 %v339
      %359 = vmatprep.subr.bf16.mxu0 0
      %360 = vmatpush1.bf16.msra.mxu0 %v338
      %361 = vmatprep.subr.bf16.mxu0 0
      %362 = vmatpush2.bf16.msra.mxu0 0
      %363 = vmatprep.subr.bf16.mxu0 0
      %364 = vmatpush2.bf16.msra.mxu0 0
      %365 = vmatprep.subr.bf16.mxu0 0
      %366 = vmatpush2.bf16.msra.mxu0 0
      %367 = vmatprep.subr.bf16.mxu0 0
      %368 = vmatpush2.bf16.msra.mxu0 0
      %369 = vmatprep.subr.bf16.mxu0 0
      %370 = vmatpush2.bf16.msra.mxu0 0
      %371 = vmatprep.subr.bf16.mxu0 0
      %372 = vmatpush2.bf16.msra.mxu0 0
      %373 = vmatprep.subr.bf16.mxu0 0
      %374 = vmatpush2.bf16.msra.mxu0 0
      %375 = vmatprep.subr.bf16.mxu0 0
      %376 = vmatpush2.bf16.msra.mxu0 0
      %377 = vmatprep.mubr.bf16.mxu0 0
      %378 = vmatmul.mubr.bf16.gmra.mxu0 %v343
      %v379 = vpop.f32.mrf.mxu0
      %v380 = vadd.f32 0.0, %v379
      %v381 = vpop.f32.mrf.mxu0
      %v382 = vpop.f32.mrf.mxu0
      %v383 = vadd.f32 0.0, %v382
      %v384 = vpop.f32.mrf.mxu0
      %385 = vdwg.mxu0
      %v386 = vadd.f32 %v311, %v380
      %v387 = vadd.f32 %v314, %v383
      %v388 = vld [vmem:[%s2] sm:$0x1]
      %v390 = vlaneseq
      %v391 = vshrl.u32 %v390, 7
      %v392 = vsub.s32 0, %v391
      %v393 = vrot.slane %v388, %v392
      %v395 = vadd.f32 %v386, %v393
      %v396 = vadd.f32 %v387, %v393
      %v397 = vmax.f32 %v395, 0.0
      %v398 = vmax.f32 %v396, 0.0
      %399 = vst [vmem:[%s170] sm:$0xff] %v397
      %400 = vst [vmem:[%s170 + $0x8] sm:$0xff] %v398
      %p401 = scmp.lt.s32.totalorder %s14, 1
      %s402 = scalar_select %p401, %s14, 1
      %s403 = smul.addr %s402, 2
      %s404 = smul.addr %s403, 8
      %s405 = scalar_lea.vmem %s3, %s404
      // Predicated region
      $region33: #{detector_forward.37} parent=31 // pred_check
        %p406 = pneg %p100
      $region34: #{detector_forward.37} parent=31 // pred_check_branch
        %408 = sbr.rel (%p406) target = $region36
      $region35: #{detector_forward.37} parent=31 // pred_region
        _
      $region36: #{detector_forward.37} parent=31 // pred_fallthru
        _
    $region32: #{detector_forward.37} parent=5 // pred_fallthru
      _
    %p409 = scmp.le.s32.totalorder 2, %s9
    // Predicated region
    $region37: #{detector_forward.37} parent=5 // pred_check
      %p410 = pneg %p409
    $region38: #{detector_forward.37} parent=5 // pred_check_branch
      %412 = sbr.rel (%p410) target = $region40
    $region39: #{detector_forward.37} parent=5 // pred_region
      %s413 = ssub.s32 %s9, 2
      // Predicated region
      $region41: #{detector_forward.37} parent=39 // pred_check
        %p414 = pneg %p106
      $region42: #{detector_forward.37} parent=39 // pred_check_branch
        %416 = sbr.rel (%p414) target = $region44
      $region43: #{detector_forward.37} parent=39 // pred_region
        %p417 = scmp.lt.s32.totalorder %s15, 1
        %s418 = scalar_select %p417, %s15, 1
        %s419 = smul.addr %s418, 2
        %s420 = smul.addr %s419, 8
        %s421 = scalar_lea.vmem %s3, %s420
      $region44: #{detector_forward.37} parent=39 // pred_fallthru
        _
    $region40: #{detector_forward.37} parent=5 // pred_fallthru
      _
  $region6: #{detector_forward.37} parent=0 // loop_footer
    %s13 = sadd.s32 1, %s9
  $region7: #{detector_forward.37} parent=0 // loop_footer_branch
    %8 = sbr.rel target = $region3
  $region8: #{detector_forward.37} parent=0 // loop_exit
    _

// kernel: detector_forward.33
$region0: #{detector_forward.33}
  #allocation0 [shape = 'u32[]', space=smem, size = 0x4, offset = 0x4, fixed_abs, tag = 'smem constant byte address 0x4 - core index']
  #allocation1 [shape = 'u32[144,128]{1,0:T(1,128)}', space=vmem, size = 0x12000, scoped, tag = 'internal scratch']
  %s0 = inlined_call_operand.vmem [shape: bf16[2,18,32], index: 0, kind: input, shape index: {}]
  %s1 = inlined_call_operand.vmem [shape: bf16[3,32,128], index: 1, kind: input, shape index: {}]
  %s2 = inlined_call_operand.vmem [shape: f32[1,128], index: 2, kind: input, shape index: {}]
  %s3 = inlined_call_operand.vmem [shape: f32[2,16,128], index: 3, kind: output, shape index: {}]
  %s4 = sld [smem:[#allocation0]]
  $region45: #{detector_forward.33} parent=0
    _
  %s6 = ssub.s32 1, %s4
  %s7 = scalar_select 0, %s6, %s4
  loop: start=0, step=1, limit=4
  $region2: #{detector_forward.33} parent=0 // loop_pre_header
    _
  $region3: #{detector_forward.33} parent=0 // loop_header
    %s9 = sphi 0, %s13
    %p10 = scmp.ge.s32.totalorder %s9, 4
    %s19 = sphi 0, %s21
    %s22 = sphi 0, %s19
    %s23 = sphi 0, %s22
    %s39 = sphi 0, %s23
    %s43 = sphi 0, %s43
    %s45 = sphi 0, %s43
    %s46 = sphi 0, %s45
    %s60 = sphi 0, %s46
    %s64 = sphi 0, %s64
    %s66 = sphi 0, %s64
    %s67 = sphi 0, %s66
    %s81 = sphi 0, %s67
    %s87 = sphi 0, %s89
    %s90 = sphi 0, %s87
    %s91 = sphi 0, %s90
    %s107 = sphi 0, %s91
  $region4: #{detector_forward.33} parent=0 // loop_header_branch
    %12 = sbr.rel (%p10) target = $region8
  $region5: #{detector_forward.33} parent=0 // loop_body
    %s14 = ssub.s32 %s9, 1
    %s15 = ssub.s32 %s9, 2
    %s16 = sadd.s32 %s9, 1
    %s17 = ssub.s32 %s9, %s16
    %p18 = scmp.eq.s32.totalorder %s17, 0
    %s20 = sadd.s32 %s19, 1
    %s21 = scalar_select %p18, %s19, %s20
    %p24 = pneg %p18
    %p25 = scmp.eq.s32.totalorder %s9, 1
    %p26 = por %p24, %p25
    %p27 = scmp.ne.s32.totalorder %s19, %s22
    %p28 = scmp.eq.s32.totalorder %s9, 0
    %p29 = por %p27, %p28
    %p30 = scmp.ne.s32.totalorder %s19, %s22
    %p31 = scmp.eq.s32.totalorder %s14, 1
    %p32 = por %p30, %p31
    %p33 = scmp.ne.s32.totalorder %s22, %s23
    %p34 = scmp.eq.s32.totalorder %s14, 0
    %p35 = por %p33, %p34
    %p36 = scmp.ne.s32.totalorder %s22, %s23
    %p37 = scmp.eq.s32.totalorder %s15, 1
    %p38 = por %p36, %p37
    %p40 = scmp.ne.s32.totalorder %s23, %s39
    %p41 = scmp.eq.s32.totalorder %s15, 0
    %p42 = por %p40, %p41
    %s44 = sadd.s32 %s43, 1
    %p47 = scmp.eq.s32.totalorder %s9, 1
    %p48 = scmp.ne.s32.totalorder %s43, %s45
    %p49 = scmp.eq.s32.totalorder %s9, 0
    %p50 = por %p48, %p49
    %p51 = scmp.ne.s32.totalorder %s43, %s45
    %p52 = scmp.eq.s32.totalorder %s14, 1
    %p53 = por %p51, %p52
    %p54 = scmp.ne.s32.totalorder %s45, %s46
    %p55 = scmp.eq.s32.totalorder %s14, 0
    %p56 = por %p54, %p55
    %p57 = scmp.ne.s32.totalorder %s45, %s46
    %p58 = scmp.eq.s32.totalorder %s15, 1
    %p59 = por %p57, %p58
    %p61 = scmp.ne.s32.totalorder %s46, %s60
    %p62 = scmp.eq.s32.totalorder %s15, 0
    %p63 = por %p61, %p62
    %s65 = sadd.s32 %s64, 1
    %p68 = scmp.eq.s32.totalorder %s9, 1
    %p69 = scmp.ne.s32.totalorder %s64, %s66
    %p70 = scmp.eq.s32.totalorder %s9, 0
    %p71 = por %p69, %p70
    %p72 = scmp.ne.s32.totalorder %s64, %s66
    %p73 = scmp.eq.s32.totalorder %s14, 1
    %p74 = por %p72, %p73
    %p75 = scmp.ne.s32.totalorder %s66, %s67
    %p76 = scmp.eq.s32.totalorder %s14, 0
    %p77 = por %p75, %p76
    %p78 = scmp.ne.s32.totalorder %s66, %s67
    %p79 = scmp.eq.s32.totalorder %s15, 1
    %p80 = por %p78, %p79
    %p82 = scmp.ne.s32.totalorder %s67, %s81
    %p83 = scmp.eq.s32.totalorder %s15, 0
    %p84 = por %p82, %p83
    %s85 = ssub.s32 %s9, %s16
    %p86 = scmp.eq.s32.totalorder %s85, 0
    %s88 = sadd.s32 %s87, 1
    %s89 = scalar_select %p86, %s87, %s88
    %p92 = pneg %p86
    %p93 = scmp.eq.s32.totalorder %s9, 1
    %p94 = por %p92, %p93
    %p95 = scmp.ne.s32.totalorder %s87, %s90
    %p96 = scmp.eq.s32.totalorder %s9, 0
    %p97 = por %p95, %p96
    %p98 = scmp.ne.s32.totalorder %s87, %s90
    %p99 = scmp.eq.s32.totalorder %s14, 1
    %p100 = por %p98, %p99
    %p101 = scmp.ne.s32.totalorder %s90, %s91
    %p102 = scmp.eq.s32.totalorder %s14, 0
    %p103 = por %p101, %p102
    %p104 = scmp.ne.s32.totalorder %s90, %s91
    %p105 = scmp.eq.s32.totalorder %s15, 1
    %p106 = por %p104, %p105
    %p108 = scmp.ne.s32.totalorder %s91, %s107
    %p109 = scmp.eq.s32.totalorder %s15, 0
    %p110 = por %p108, %p109
    %p111 = scmp.le.s32.totalorder 1, %s9
    %p112 = scmp.lt.s32.totalorder %s9, 3
    %p113 = pnand %p111, %p112
    %p114 = pneg %p113
    // Predicated region
    $region9: #{detector_forward.33} parent=5 // pred_check
      _
    $region10: #{detector_forward.33} parent=5 // pred_check_branch
      %116 = sbr.rel (%p113) target = $region12
    $region11: #{detector_forward.33} parent=5 // pred_region
      %s117 = ssub.s32 %s9, 1
      // Predicated region
      $region13: #{detector_forward.33} parent=11 // pred_check
        %p118 = pneg %p56
      $region14: #{detector_forward.33} parent=11 // pred_check_branch
        %120 = sbr.rel (%p118) target = $region16
      $region15: #{detector_forward.33} parent=11 // pred_region
        _
      $region16: #{detector_forward.33} parent=11 // pred_fallthru
        _
      // Predicated region
      $region17: #{detector_forward.33} parent=11 // pred_check
        %p121 = pneg %p77
      $region18: #{detector_forward.33} parent=11 // pred_check_branch
        %123 = sbr.rel (%p121) target = $region20
      $region19: #{detector_forward.33} parent=11 // pred_region
        _
      $region20: #{detector_forward.33} parent=11 // pred_fallthru
        _
    $region12: #{detector_forward.33} parent=5 // pred_fallthru
      _
    %p124 = scmp.lt.s32.totalorder %s9, 2
    // Predicated region
    $region21: #{detector_forward.33} parent=5 // pred_check
      %p125 = pneg %p124
    $region22: #{detector_forward.33} parent=5 // pred_check_branch
      %127 = sbr.rel (%p125) target = $region24
    $region23: #{detector_forward.33} parent=5 // pred_region
      // Predicated region
      $region25: #{detector_forward.33} parent=23 // pred_check
        %p128 = pneg %p29
      $region26: #{detector_forward.33} parent=23 // pred_check_branch
        %130 = sbr.rel (%p128) target = $region28
      $region27: #{detector_forward.33} parent=23 // pred_region
        %p131 = scmp.lt.s32.totalorder %s9, 1
        %s132 = scalar_select %p131, %s9, 1
        %s133 = smul.addr %s132, 3
        %s134 = smul.addr %s133, 4
        %s135 = scalar_lea.vmem %s0, %s134
      $region28: #{detector_forward.33} parent=23 // pred_fallthru
        _
    $region24: #{detector_forward.33} parent=5 // pred_fallthru
      _
    %p136 = scmp.le.s32.totalorder 1, %s9
    %p137 = scmp.lt.s32.totalorder %s9, 3
    %p138 = pnand %p136, %p137
    %p139 = pneg %p138
    // Predicated region
    $region29: #{detector_forward.33} parent=5 // pred_check
      _
    $region30: #{detector_forward.33} parent=5 // pred_check_branch
      %141 = sbr.rel (%p138) target = $region32
    $region31: #{detector_forward.33} parent=5 // pred_region
      %s142 = ssub.s32 %s9, 1
      %p143 = scmp.lt.s32.totalorder %s14, 1
      %s144 = scalar_select %p143, %s14, 1
      %s145 = smul.addr %s144, 3
      %s146 = smul.addr %s145, 4
      %s147 = scalar_lea.vmem %s0, %s146
      %p148 = pneg %p35
      %p149 = pneg %p32
      %p150 = pneg %p56
      %p151 = pneg %p53
      %p152 = pneg %p77
      %p153 = pneg %p74
      %p154 = pneg %p103
      %p155 = pneg %p100
      %p156 = scmp.lt.s32.totalorder %s14, 1
      %s157 = scalar_select %p156, %s14, 1
      %s158 = smul.addr %s157, 2
      %s159 = smul.addr %s158, 8
      %s160 = scalar_lea.vmem %s3, %s159
      %p161 = scmp.lt.s32.totalorder %s14, 1
      %s162 = scalar_select %p161, %s14, 1
      %s163 = smul.addr %s162, 3
      %s164 = smul.addr %s163, 4
      %s165 = scalar_lea.vmem %s0, %s164
      %p166 = scmp.lt.s32.totalorder %s14, 1
      %s167 = scalar_select %p166, %s14, 1
      %s168 = smul.addr %s167, 2
      %s169 = smul.addr %s168, 8
      %s170 = scalar_lea.vmem %s3, %s169
      %v172 = vld [vmem:[%s165] sm:$0xf]
      %v173 = vld [vmem:[%s165 + $0x4] sm:$0xf]
      %v174 = vld [vmem:[%s1] sm:$0xf]
      %v175 = vld [vmem:[%s1 + $0x4] sm:$0xf]
      %v176 = vld [vmem:[%s1 + $0x8] sm:$0xf]
      %v177 = vld [vmem:[%s1 + $0xc] sm:$0xf]
      %v178 = vld [vmem:[%s165 + $0x8] sm:$0x1]
      %s179 = scalar_lea.vmem %s1, 16
      %v180 = vld [vmem:[%s179] sm:$0xf]
      %v181 = vld [vmem:[%s179 + $0x4] sm:$0xf]
      %v182 = vld [vmem:[%s179 + $0x8] sm:$0xf]
      %v183 = vld [vmem:[%s179 + $0xc] sm:$0xf]
      %v187 = vunpack.c.l.b16 %v172
      %v188 = vunpack.c.l.b16 %v173
      %v189 = vunpack.c.l.b16 %v178
      %v190 = vpack.c.b16 %v188, %v187
      %v191 = vpack.c.b16 %v189, %v189
      %vm192 = vsmask.f32 7424
      %v194 = vshrl.u32 %v190, 16
      %v196 = vshll.u32 %v190, 16
      %v198 = vrot.slane %v196, 1
      %v199 = vor.u32 %v194, %v198
      %v201 = vshll.u32 %v191, 16
      %v203 = vrot.slane %v201, 1
      %v204 = vsel %vm192, %v199, %v203
      %v209 = vunpack.c.l.b16 %v180
      %v210 = vunpack.c.l.b16 %v181
      %v211 = vunpack.c.l.b16 %v182
      %v212 = vunpack.c.l.b16 %v183
      %v213 = vpack.c.b16 %v210, %v209
      %v214 = vpack.c.b16 %v212, %v211
      %vm217 = vcmask 261120
      %v219 = vsel %vm217, %v204, 0
      %221 = vmatprep.subr.bf16.mxu0 0
      %222 = vmatpush1.bf16.msra.mxu0 0
      %223 = vmatprep.subr.bf16.mxu0 0
      %224 = vmatpush1.bf16.msra.mxu0 0
      %225 = vmatprep.subr.bf16.mxu0 0
      %226 = vmatpush1.bf16.msra.mxu0 0
      %227 = vmatprep.subr.bf16.mxu0 0
      %228 = vmatpush1.bf16.msra.mxu0 0
      %229 = vmatprep.subr.bf16.mxu0 0
      %230 = vmatpush1.bf16.msra.mxu0 0
      %231 = vmatprep.subr.bf16.mxu0 0
      %232 = vmatpush1.bf16.msra.mxu0 0
      %233 = vmatprep.subr.bf16.mxu0 0
      %234 = vmatpush1.bf16.msra.mxu0 %v214
      %235 = vmatprep.subr.bf16.mxu0 0
      %236 = vmatpush1.bf16.msra.mxu0 %v213
      %237 = vmatprep.subr.bf16.mxu0 0
      %238 = vmatpush2.bf16.msra.mxu0 0
      %239 = vmatprep.subr.bf16.mxu0 0
      %240 = vmatpush2.bf16.msra.mxu0 0
      %241 = vmatprep.subr.bf16.mxu0 0
      %242 = vmatpush2.bf16.msra.mxu0 0
      %243 = vmatprep.subr.bf16.mxu0 0
      %244 = vmatpush2.bf16.msra.mxu0 0
      %245 = vmatprep.subr.bf16.mxu0 0
      %246 = vmatpush2.bf16.msra.mxu0 0
      %247 = vmatprep.subr.bf16.mxu0 0
      %248 = vmatpush2.bf16.msra.mxu0 0
      %249 = vmatprep.subr.bf16.mxu0 0
      %250 = vmatpush2.bf16.msra.mxu0 0
      %251 = vmatprep.subr.bf16.mxu0 0
      %252 = vmatpush2.bf16.msra.mxu0 0
      %253 = vmatprep.mubr.bf16.mxu0 0
      %254 = vmatmul.mubr.bf16.gmra.mxu0 %v219
      %v255 = vpop.f32.mrf.mxu0
      %v256 = vadd.f32 0.0, %v255
      %v257 = vpop.f32.mrf.mxu0
      %v258 = vpop.f32.mrf.mxu0
      %v259 = vadd.f32 0.0, %v258
      %v260 = vpop.f32.mrf.mxu0
      %261 = vdwg.mxu0
      %v266 = vunpack.c.l.b16 %v174
      %v267 = vunpack.c.l.b16 %v175
      %v268 = vunpack.c.l.b16 %v176
      %v269 = vunpack.c.l.b16 %v177
      %v270 = vpack.c.b16 %v267, %v266
      %v271 = vpack.c.b16 %v269, %v268
      %v274 = vsel %vm217, %v190, 0
      %276 = vmatprep.subr.bf16.mxu0 0
      %277 = vmatpush1.bf16.msra.mxu0 0
      %278 = vmatprep.subr.bf16.mxu0 0
      %279 = vmatpush1.bf16.msra.mxu0 0
      %280 = vmatprep.subr.bf16.mxu0 0
      %281 = vmatpush1.bf16.msra.mxu0 0
      %282 = vmatprep.subr.bf16.mxu0 0
      %283 = vmatpush1.bf16.msra.mxu0 0
      %284 = vmatprep.subr.bf16.mxu0 0
      %285 = vmatpush1.bf16.msra.mxu0 0
      %286 = vmatprep.subr.bf16.mxu0 0
      %287 = vmatpush1.bf16.msra.mxu0 0
      %288 = vmatprep.subr.bf16.mxu0 0
      %289 = vmatpush1.bf16.msra.mxu0 %v271
      %290 = vmatprep.subr.bf16.mxu0 0
      %291 = vmatpush1.bf16.msra.mxu0 %v270
      %292 = vmatprep.subr.bf16.mxu0 0
      %293 = vmatpush2.bf16.msra.mxu0 0
      %294 = vmatprep.subr.bf16.mxu0 0
      %295 = vmatpush2.bf16.msra.mxu0 0
      %296 = vmatprep.subr.bf16.mxu0 0
      %297 = vmatpush2.bf16.msra.mxu0 0
      %298 = vmatprep.subr.bf16.mxu0 0
      %299 = vmatpush2.bf16.msra.mxu0 0
      %300 = vmatprep.subr.bf16.mxu0 0
      %301 = vmatpush2.bf16.msra.mxu0 0
      %302 = vmatprep.subr.bf16.mxu0 0
      %303 = vmatpush2.bf16.msra.mxu0 0
      %304 = vmatprep.subr.bf16.mxu0 0
      %305 = vmatpush2.bf16.msra.mxu0 0
      %306 = vmatprep.subr.bf16.mxu0 0
      %307 = vmatpush2.bf16.msra.mxu0 0
      %308 = vmatprep.mubr.bf16.mxu0 0
      %309 = vmatmul.mubr.bf16.gmra.mxu0 %v274
      %v310 = vpop.f32.mrf.mxu0
      %v311 = vadd.f32 %v256, %v310
      %v312 = vpop.f32.mrf.mxu0
      %v313 = vpop.f32.mrf.mxu0
      %v314 = vadd.f32 %v259, %v313
      %v315 = vpop.f32.mrf.mxu0
      %316 = vdwg.mxu0
      %v317 = vld [vmem:[%s165] sm:$0xe]
      %s318 = scalar_lea.vmem %s1, 32
      %v319 = vld [vmem:[%s318] sm:$0xf]
      %v320 = vld [vmem:[%s318 + $0x4] sm:$0xf]
      %v321 = vld [vmem:[%s318 + $0x8] sm:$0xf]
      %v322 = vld [vmem:[%s318 + $0xc] sm:$0xf]
      %v324 = vunpack.c.l.b16 %v317
      %v325 = vpack.c.b16 %v188, %v324
      %vm326 = vcmask 1046528
      %v327 = vrot.slane %v325, 1
      %v328 = vrot.slane %v191, 1
      %v329 = vsel %vm326, %v327, %v328
      %v334 = vunpack.c.l.b16 %v319
      %v335 = vunpack.c.l.b16 %v320
      %v336 = vunpack.c.l.b16 %v321
      %v337 = vunpack.c.l.b16 %v322
      %v338 = vpack.c.b16 %v335, %v334
      %v339 = vpack.c.b16 %v337, %v336
      %v343 = vsel %vm217, %v329, 0
      %345 = vmatprep.subr.bf16.mxu0 0
      %346 = vmatpush1.bf16.msra.mxu0 0
      %347 = vmatprep.subr.bf16.mxu0 0
      %348 = vmatpush1.bf16.msra.mxu0 0
      %349 = vmatprep.subr.bf16.mxu0 0
      %350 = vmatpush1.bf16.msra.mxu0 0
      %351 = vmatprep.subr.bf16.mxu0 0
      %352 = vmatpush1.bf16.msra.mxu0 0
      %353 = vmatprep.subr.bf16.mxu0 0
      %354 = vmatpush1.bf16.msra.mxu0 0
      %355 = vmatprep.subr.bf16.mxu0 0
      %356 = vmatpush1.bf16.msra.mxu0 0
      %357 = vmatprep.subr.bf16.mxu0 0
      %358 = vmatpush1.bf16.msra.mxu0 %v339
      %359 = vmatprep.subr.bf16.mxu0 0
      %360 = vmatpush1.bf16.msra.mxu0 %v338
      %361 = vmatprep.subr.bf16.mxu0 0
      %362 = vmatpush2.bf16.msra.mxu0 0
      %363 = vmatprep.subr.bf16.mxu0 0
      %364 = vmatpush2.bf16.msra.mxu0 0
      %365 = vmatprep.subr.bf16.mxu0 0
      %366 = vmatpush2.bf16.msra.mxu0 0
      %367 = vmatprep.subr.bf16.mxu0 0
      %368 = vmatpush2.bf16.msra.mxu0 0
      %369 = vmatprep.subr.bf16.mxu0 0
      %370 = vmatpush2.bf16.msra.mxu0 0
      %371 = vmatprep.subr.bf16.mxu0 0
      %372 = vmatpush2.bf16.msra.mxu0 0
      %373 = vmatprep.subr.bf16.mxu0 0
      %374 = vmatpush2.bf16.msra.mxu0 0
      %375 = vmatprep.subr.bf16.mxu0 0
      %376 = vmatpush2.bf16.msra.mxu0 0
      %377 = vmatprep.mubr.bf16.mxu0 0
      %378 = vmatmul.mubr.bf16.gmra.mxu0 %v343
      %v379 = vpop.f32.mrf.mxu0
      %v380 = vadd.f32 0.0, %v379
      %v381 = vpop.f32.mrf.mxu0
      %v382 = vpop.f32.mrf.mxu0
      %v383 = vadd.f32 0.0, %v382
      %v384 = vpop.f32.mrf.mxu0
      %385 = vdwg.mxu0
      %v386 = vadd.f32 %v311, %v380
      %v387 = vadd.f32 %v314, %v383
      %v388 = vld [vmem:[%s2] sm:$0x1]
      %v390 = vlaneseq
      %v391 = vshrl.u32 %v390, 7
      %v392 = vsub.s32 0, %v391
      %v393 = vrot.slane %v388, %v392
      %v395 = vadd.f32 %v386, %v393
      %v396 = vadd.f32 %v387, %v393
      %397 = vst [vmem:[%s170] sm:$0xff] %v395
      %398 = vst [vmem:[%s170 + $0x8] sm:$0xff] %v396
      %p399 = scmp.lt.s32.totalorder %s14, 1
      %s400 = scalar_select %p399, %s14, 1
      %s401 = smul.addr %s400, 2
      %s402 = smul.addr %s401, 8
      %s403 = scalar_lea.vmem %s3, %s402
      // Predicated region
      $region33: #{detector_forward.33} parent=31 // pred_check
        %p404 = pneg %p100
      $region34: #{detector_forward.33} parent=31 // pred_check_branch
        %406 = sbr.rel (%p404) target = $region36
      $region35: #{detector_forward.33} parent=31 // pred_region
        _
      $region36: #{detector_forward.33} parent=31 // pred_fallthru
        _
    $region32: #{detector_forward.33} parent=5 // pred_fallthru
      _
    %p407 = scmp.le.s32.totalorder 2, %s9
    // Predicated region
    $region37: #{detector_forward.33} parent=5 // pred_check
      %p408 = pneg %p407
    $region38: #{detector_forward.33} parent=5 // pred_check_branch
      %410 = sbr.rel (%p408) target = $region40
    $region39: #{detector_forward.33} parent=5 // pred_region
      %s411 = ssub.s32 %s9, 2
      // Predicated region
      $region41: #{detector_forward.33} parent=39 // pred_check
        %p412 = pneg %p106
      $region42: #{detector_forward.33} parent=39 // pred_check_branch
        %414 = sbr.rel (%p412) target = $region44
      $region43: #{detector_forward.33} parent=39 // pred_region
        %p415 = scmp.lt.s32.totalorder %s15, 1
        %s416 = scalar_select %p415, %s15, 1
        %s417 = smul.addr %s416, 2
        %s418 = smul.addr %s417, 8
        %s419 = scalar_lea.vmem %s3, %s418
      $region44: #{detector_forward.33} parent=39 // pred_fallthru
        _
    $region40: #{detector_forward.33} parent=5 // pred_fallthru
      _
  $region6: #{detector_forward.33} parent=0 // loop_footer
    %s13 = sadd.s32 1, %s9
  $region7: #{detector_forward.33} parent=0 // loop_footer_branch
    %8 = sbr.rel target = $region3
  $region8: #{detector_forward.33} parent=0 // loop_exit
    _

</llo_original>
